<compile_context>
chip_gen: v6e
topology: v6e:2x2x1
jax: 0.10.0
libtpu: 0.0.40
codegen_flags: <defaults>
</compile_context>

<pallas_src>
import functools

import jax
import jax.numpy as jnp
from jax.experimental import pallas as pl
from jax.experimental.pallas import tpu as pltpu

LN_EPS = 1e-5  # nn.LayerNorm default eps


def _layernorm(z, gamma, beta):
    mean = jnp.mean(z, axis=-1, keepdims=True)
    var = jnp.mean((z - mean) ** 2, axis=-1, keepdims=True)
    return (z - mean) * jax.lax.rsqrt(var + LN_EPS) * gamma + beta


# ---------------------------------------------------------------------------
# Kernel 1: initial transform + hoisted input projection (row-parallel)
#   y    = LN((x * m) @ W0 + b0) * m
#   proj = y @ W1b + b1
# ---------------------------------------------------------------------------
def init_transform_kernel(x_ref, m_ref, w0_ref, b0_ref, g_ref, be_ref,
                          w1b_ref, b1_ref, y_ref, proj_ref):
    m = m_ref[...]
    xm = x_ref[...] * m
    z = jnp.dot(xm, w0_ref[...], preferred_element_type=jnp.float32) + b0_ref[...]
    y = _layernorm(z, g_ref[...], be_ref[...]) * m
    y_ref[...] = y
    proj_ref[...] = (jnp.dot(y, w1b_ref[...], preferred_element_type=jnp.float32)
                     + b1_ref[...])


# ---------------------------------------------------------------------------
# Kernel 2: composer recursion, time-chunked with in-kernel unrolled loop.
#   State (ht, global_state) lives in VMEM scratch across time chunks.
# ---------------------------------------------------------------------------
def recursion_kernel(y_ref, proj_ref, m_ref, start_ref,
                     w1a_ref, w2s_ref, b2s_ref, g_ref, be_ref,
                     seq_out_ref, gs_out_ref,
                     ht_sc, gs_sc, *, T):
    c = pl.program_id(1)  # time-chunk index ("arbitrary" / sequential axis)

    @pl.when(c == 0)
    def _():
        st = jnp.broadcast_to(start_ref[...], ht_sc.shape)
        ht_sc[...] = st
        gs_sc[...] = st

    ht = ht_sc[...]          # (TN, D)
    gs = gs_sc[...]          # (TN, D)

    w1a = w1a_ref[...]       # (D, C)
    w_f1, w_f2, w_ig, w_pr = w2s_ref[0], w2s_ref[1], w2s_ref[2], w2s_ref[3]
    b_f1, b_f2, b_ig, b_pr = b2s_ref[0], b2s_ref[1], b2s_ref[2], b2s_ref[3]
    gamma = g_ref[...]
    beta = be_ref[...]

    # Static Python loop: T is a small compile-time constant, fully unrolled.
    for tt in range(T):
        x_t = y_ref[:, tt, :]       # (TN, D)  transformed (masked) input
        p_t = proj_ref[:, tt, :]    # (TN, C)  precomputed x_t @ W1b + b1
        m_t = m_ref[:, tt, :]       # (TN, 1)

        # wcell1 on concat([ht, x_t]) == ht @ W1a + (x_t @ W1b + b1)
        h = jnp.maximum(
            jnp.dot(ht, w1a, preferred_element_type=jnp.float32) + p_t, 0.0)
        # TODO(synk): hidden_dropout is a no-op at inference (training=False).

        # wcell2 split into 4 gate blocks -> each dot lands on a clean (TN, D)
        # tile, no lane-dim slicing of a (TN, 4D) contents tensor.
        f1 = jax.nn.sigmoid(
            jnp.dot(h, w_f1, preferred_element_type=jnp.float32) + b_f1)
        f2 = jax.nn.sigmoid(
            jnp.dot(h, w_f2, preferred_element_type=jnp.float32) + b_f2)
        ig = jax.nn.sigmoid(
            jnp.dot(h, w_ig, preferred_element_type=jnp.float32) + b_ig)
        parent = jnp.dot(h, w_pr, preferred_element_type=jnp.float32) + b_pr

        z = f1 * ht + f2 * x_t + ig * parent
        ht = _layernorm(z, gamma, beta)
        gs = m_t * ht + (1.0 - m_t) * gs

        # Staged in the VMEM output block; one slab DMA per chunk.
        seq_out_ref[:, tt, :] = ht * m_t    # final output masking folded in

    ht_sc[...] = ht
    gs_sc[...] = gs

    @pl.when(c == pl.num_programs(1) - 1)
    def _():
        gs_out_ref[...] = gs


# ---------------------------------------------------------------------------
# Wrapper
# ---------------------------------------------------------------------------
def lr_crvnn_forward(sequence, input_mask, params):
    """sequence: (N, S, D) f32, input_mask: (N, S) f32."""
    N, S, D = sequence.shape
    C = params["w1"].shape[1]

    mask = input_mask.astype(jnp.float32)[..., None]          # (N, S, 1)

    # ---- Kernel 1: init transform + hoisted projection (row-parallel) ----
    R = N * S
    x_flat = sequence.reshape(R, D)
    m_flat = mask.reshape(R, 1)

    if R <= 1024:
        TM, R_pad = R, R
    else:
        TM = 512
        R_pad = pl.cdiv(R, TM) * TM
    if R_pad != R:
        x_flat = jnp.pad(x_flat, ((0, R_pad - R), (0, 0)))
        m_flat = jnp.pad(m_flat, ((0, R_pad - R), (0, 0)))

    w1a = params["w1"][:D, :]     # (D, C) : ht half of wcell1
    w1b = params["w1"][D:, :]     # (D, C) : x_t half of wcell1 (hoisted)

    y_flat, proj_flat = pl.pallas_call(
        init_transform_kernel,
        out_shape=(jax.ShapeDtypeStruct((R_pad, D), jnp.float32),
                   jax.ShapeDtypeStruct((R_pad, C), jnp.float32)),
        grid_spec=pltpu.PrefetchScalarGridSpec(
            num_scalar_prefetch=0,
            grid=(R_pad // TM,),
            in_specs=[
                pl.BlockSpec((TM, D), lambda i: (i, 0)),   # x rows
                pl.BlockSpec((TM, 1), lambda i: (i, 0)),   # mask rows
                pl.BlockSpec((D, D), lambda i: (0, 0)),    # W0
                pl.BlockSpec((1, D), lambda i: (0, 0)),    # b0
                pl.BlockSpec((1, D), lambda i: (0, 0)),    # LN gamma
                pl.BlockSpec((1, D), lambda i: (0, 0)),    # LN beta
                pl.BlockSpec((D, C), lambda i: (0, 0)),    # W1b
                pl.BlockSpec((1, C), lambda i: (0, 0)),    # b1
            ],
            out_specs=[
                pl.BlockSpec((TM, D), lambda i: (i, 0)),   # y
                pl.BlockSpec((TM, C), lambda i: (i, 0)),   # proj
            ],
        ),
        compiler_params=pltpu.CompilerParams(
            dimension_semantics=("parallel",)),
    )(x_flat, m_flat, params["w0"], params["b0"][None, :],
      params["gamma"][None, :], params["beta"][None, :],
      w1b, params["b1"][None, :])

    y = y_flat[:R].reshape(N, S, D)
    proj = proj_flat[:R].reshape(N, S, C)

    # ---- Kernel 2: sequential recursion (time-chunked, batch-parallel) ----
    T = 8                                             # time steps per chunk
    S_pad = ((S + T - 1) // T) * T
    if S_pad != S:
        pad = ((0, 0), (0, S_pad - S), (0, 0))
        y = jnp.pad(y, pad)
        proj = jnp.pad(proj, pad)
        mask_p = jnp.pad(mask, pad)                   # padded steps: mask = 0
    else:
        mask_p = mask

    # batch tile: full batch unless N is big enough to shard (v7x megacore)
    TN = N
    if N >= 16 and N % 8 == 0:
        for cand in (32, 16, 8):
            if N % cand == 0:
                TN = cand
                break
    NB = N // TN
    CHUNKS = S_pad // T

    # Split wcell2 into 4 gate blocks: contents.view(N,4,D)[:,k,:] uses
    # W2[:, k*D:(k+1)*D], b2[k*D:(k+1)*D].
    w2s = params["w2"].reshape(C, 4, D).transpose(1, 0, 2)    # (4, C, D)
    b2s = params["b2"].reshape(4, 1, D)                       # (4, 1, D)

    seq_out, gs_out = pl.pallas_call(
        functools.partial(recursion_kernel, T=T),
        out_shape=(jax.ShapeDtypeStruct((N, S_pad, D), jnp.float32),
                   jax.ShapeDtypeStruct((N, D), jnp.float32)),
        grid_spec=pltpu.PrefetchScalarGridSpec(
            num_scalar_prefetch=0,
            grid=(NB, CHUNKS),
            in_specs=[
                pl.BlockSpec((TN, T, D), lambda b, c: (b, c, 0)),   # y
                pl.BlockSpec((TN, T, C), lambda b, c: (b, c, 0)),   # proj
                pl.BlockSpec((TN, T, 1), lambda b, c: (b, c, 0)),   # mask
                pl.BlockSpec((1, D), lambda b, c: (0, 0)),          # START
                pl.BlockSpec((D, C), lambda b, c: (0, 0)),          # W1a
                pl.BlockSpec((4, C, D), lambda b, c: (0, 0, 0)),    # W2 gates
                pl.BlockSpec((4, 1, D), lambda b, c: (0, 0, 0)),    # b2 gates
                pl.BlockSpec((1, D), lambda b, c: (0, 0)),          # LN gamma
                pl.BlockSpec((1, D), lambda b, c: (0, 0)),          # LN beta
            ],
            out_specs=[
                pl.BlockSpec((TN, T, D), lambda b, c: (b, c, 0)),   # sequence
                pl.BlockSpec((TN, D), lambda b, c: (b, 0)),         # global_state
            ],
            scratch_shapes=[
                pltpu.VMEM((TN, D), jnp.float32),                   # ht
                pltpu.VMEM((TN, D), jnp.float32),                   # global_state
            ],
        ),
        compiler_params=pltpu.CompilerParams(
            dimension_semantics=("parallel", "arbitrary")),
    )(y, proj, mask_p, params["start"][None, :], w1a, w2s, b2s,
      params["gamma"][None, :], params["beta"][None, :])

    sequence_out = seq_out[:, :S, :]
    return {"sequence": sequence_out, "penalty": None, "global_state": gs_out}


# ---------------------------------------------------------------------------
# Pure-JAX reference (mirrors the PyTorch forward) for verification
# ---------------------------------------------------------------------------
def reference_forward(sequence, input_mask, params):
    N, S, D = sequence.shape
    mask = input_mask[..., None]
    x = sequence * mask
    y = x @ params["w0"] + params["b0"]
    y = _layernorm(y, params["gamma"], params["beta"])
    y = y * mask

    ht = jnp.broadcast_to(params["start"][None, :], (N, D))
    gs = ht
    outs = []
    for t in range(S):
        xt = y[:, t, :]
        mt = mask[:, t, :]
        concat = jnp.concatenate([ht, xt], axis=-1)
        h = jnp.maximum(concat @ params["w1"] + params["b1"], 0.0)
        contents = h @ params["w2"] + params["b2"]
        contents = contents.reshape(N, 4, D)
        gates = jax.nn.sigmoid(contents[:, 0:3, :])
        parent = contents[:, 3, :]
        z = gates[:, 0, :] * ht + gates[:, 1, :] * xt + gates[:, 2, :] * parent
        ht = _layernorm(z, params["gamma"], params["beta"])
        gs = mt * ht + (1.0 - mt) * gs
        outs.append(ht)
    seq_out = jnp.stack(outs, axis=1) * mask
    return {"sequence": seq_out, "penalty": None, "global_state": gs}


# ---------------------------------------------------------------------------
def make_params(key, D, C):
    ks = jax.random.split(key, 8)
    scale = 0.1
    return {
        "start": jnp.zeros((D,), jnp.float32),                           # START
        "w0": scale * jax.random.normal(ks[0], (D, D), jnp.float32),      # initial_transform_layer
        "b0": scale * jax.random.normal(ks[1], (D,), jnp.float32),
        "w1": scale * jax.random.normal(ks[2], (2 * D, C), jnp.float32),  # wcell1
        "b1": scale * jax.random.normal(ks[3], (C,), jnp.float32),
        "w2": scale * jax.random.normal(ks[4], (C, 4 * D), jnp.float32),  # wcell2
        "b2": scale * jax.random.normal(ks[5], (4 * D,), jnp.float32),
        "gamma": jnp.ones((D,), jnp.float32),                             # LayerNorm
        "beta": jnp.zeros((D,), jnp.float32),
    }


if __name__ == "__main__":
    N, S, D, C = 2, 8, 32, 48  # batch, seq, hidden_size, cell_hidden_size

    key = jax.random.PRNGKey(0)
    k_seq, k_par = jax.random.split(key)
    sequence = jax.random.normal(k_seq, (N, S, D), jnp.float32)
    # mask: first batch fully valid, second batch has trailing padding
    input_mask = jnp.ones((N, S), jnp.float32).at[1, S - 3:].set(0.0)

    params = make_params(k_par, D, C)

    out = jax.jit(lr_crvnn_forward)(sequence, input_mask, params)
    jax.block_until_ready(out["sequence"])
    jax.block_until_ready(out["global_state"])

    ref = reference_forward(sequence, input_mask, params)
    assert jnp.allclose(out["sequence"], ref["sequence"], atol=3e-3, rtol=1e-3), \
        "sequence mismatch"
    assert jnp.allclose(out["global_state"], ref["global_state"], atol=3e-3, rtol=1e-3), \
        "global_state mismatch"

    print("KERNEL_OK")
</pallas_src>

<mosaic_0001>
module attributes {stable_mosaic.version = 11 : i64} {
  func.func @init_transform_kernel(%arg0: i32, %arg1: memref<16x32xf32, #tpu.memory_space<vmem>>, %arg2: memref<16x1xf32, #tpu.memory_space<vmem>>, %arg3: memref<32x32xf32, #tpu.memory_space<vmem>>, %arg4: memref<1x32xf32, #tpu.memory_space<vmem>>, %arg5: memref<1x32xf32, #tpu.memory_space<vmem>>, %arg6: memref<1x32xf32, #tpu.memory_space<vmem>>, %arg7: memref<32x48xf32, #tpu.memory_space<vmem>>, %arg8: memref<1x48xf32, #tpu.memory_space<vmem>>, %arg9: memref<16x32xf32, #tpu.memory_space<vmem>>, %arg10: memref<16x48xf32, #tpu.memory_space<vmem>>) attributes {dimension_semantics = [#tpu.dimension_semantics<parallel>], iteration_bounds = array<i64: 1>, scalar_prefetch = 0 : i64, scratch_operands = 0 : i64, tpu.core_type = #tpu.core_type<tc>, window_params = [{transform_indices = @transform_0, window_bounds = array<i64: 16, 32>}, {transform_indices = @transform_1, window_bounds = array<i64: 16, 1>}, {pipeline_mode = #tpu.pipeline_mode<synchronous>, transform_indices = @transform_2, window_bounds = array<i64: 32, 32>}, {pipeline_mode = #tpu.pipeline_mode<synchronous>, transform_indices = @transform_3, window_bounds = array<i64: 1, 32>}, {pipeline_mode = #tpu.pipeline_mode<synchronous>, transform_indices = @transform_4, window_bounds = array<i64: 1, 32>}, {pipeline_mode = #tpu.pipeline_mode<synchronous>, transform_indices = @transform_5, window_bounds = array<i64: 1, 32>}, {pipeline_mode = #tpu.pipeline_mode<synchronous>, transform_indices = @transform_6, window_bounds = array<i64: 32, 48>}, {pipeline_mode = #tpu.pipeline_mode<synchronous>, transform_indices = @transform_7, window_bounds = array<i64: 1, 48>}, {transform_indices = @transform_8, window_bounds = array<i64: 16, 32>}, {transform_indices = @transform_9, window_bounds = array<i64: 16, 48>}]} {
    %c0 = arith.constant 0 : index
    %c0_0 = arith.constant 0 : index
    %0 = vector.load %arg2[%c0, %c0_0] : memref<16x1xf32, #tpu.memory_space<vmem>>, vector<16x1xf32>
    %c0_1 = arith.constant 0 : index
    %c0_2 = arith.constant 0 : index
    %1 = vector.load %arg1[%c0_1, %c0_2] : memref<16x32xf32, #tpu.memory_space<vmem>>, vector<16x32xf32>
    %2 = vector.broadcast %0 : vector<16x1xf32> to vector<16x32xf32>
    %3 = arith.mulf %1, %2 : vector<16x32xf32>
    %c0_3 = arith.constant 0 : index
    %c0_4 = arith.constant 0 : index
    %4 = vector.load %arg3[%c0_3, %c0_4] : memref<32x32xf32, #tpu.memory_space<vmem>>, vector<32x32xf32>
    %cst = arith.constant dense<0.000000e+00> : vector<16x32xf32>
    %5 = tpu.matmul %3, %4, %cst {dimension_numbers = #tpu.dot_dimension_numbers<[1], [0], [0], [1], [0, 0, 1, 1], [], []>} : vector<16x32xf32>, vector<32x32xf32>, vector<16x32xf32> -> vector<16x32xf32>
    %c0_5 = arith.constant 0 : index
    %c0_6 = arith.constant 0 : index
    %6 = vector.load %arg4[%c0_5, %c0_6] : memref<1x32xf32, #tpu.memory_space<vmem>>, vector<1x32xf32>
    %7 = vector.broadcast %6 : vector<1x32xf32> to vector<16x32xf32>
    %8 = arith.addf %5, %7 : vector<16x32xf32>
    %c0_7 = arith.constant 0 : index
    %c0_8 = arith.constant 0 : index
    %9 = vector.load %arg5[%c0_7, %c0_8] : memref<1x32xf32, #tpu.memory_space<vmem>>, vector<1x32xf32>
    %c0_9 = arith.constant 0 : index
    %c0_10 = arith.constant 0 : index
    %10 = vector.load %arg6[%c0_9, %c0_10] : memref<1x32xf32, #tpu.memory_space<vmem>>, vector<1x32xf32>
    %cst_11 = arith.constant dense<0.000000e+00> : vector<16xf32>
    %11 = vector.multi_reduction <add>, %8, %cst_11 [1] : vector<16x32xf32> to vector<16xf32>
    %12 = vector.shape_cast %11 : vector<16xf32> to vector<16x1xf32>
    %cst_12 = arith.constant 3.200000e+01 : f32
    %13 = vector.broadcast %cst_12 : f32 to vector<16x1xf32>
    %14 = arith.divf %12, %13 : vector<16x1xf32>
    %15 = vector.broadcast %14 : vector<16x1xf32> to vector<16x32xf32>
    %16 = arith.subf %8, %15 : vector<16x32xf32>
    %17 = arith.mulf %16, %16 : vector<16x32xf32>
    %cst_13 = arith.constant dense<0.000000e+00> : vector<16xf32>
    %18 = vector.multi_reduction <add>, %17, %cst_13 [1] : vector<16x32xf32> to vector<16xf32>
    %19 = vector.shape_cast %18 : vector<16xf32> to vector<16x1xf32>
    %cst_14 = arith.constant 3.200000e+01 : f32
    %20 = vector.broadcast %cst_14 : f32 to vector<16x1xf32>
    %21 = arith.divf %19, %20 : vector<16x1xf32>
    %22 = vector.broadcast %14 : vector<16x1xf32> to vector<16x32xf32>
    %23 = arith.subf %8, %22 : vector<16x32xf32>
    %cst_15 = arith.constant 9.99999974E-6 : f32
    %24 = vector.broadcast %cst_15 : f32 to vector<16x1xf32>
    %25 = arith.addf %21, %24 : vector<16x1xf32>
    %26 = math.rsqrt %25 : vector<16x1xf32>
    %27 = vector.broadcast %26 : vector<16x1xf32> to vector<16x32xf32>
    %28 = arith.mulf %23, %27 : vector<16x32xf32>
    %29 = vector.broadcast %9 : vector<1x32xf32> to vector<16x32xf32>
    %30 = arith.mulf %28, %29 : vector<16x32xf32>
    %31 = vector.broadcast %10 : vector<1x32xf32> to vector<16x32xf32>
    %32 = arith.addf %30, %31 : vector<16x32xf32>
    %33 = vector.broadcast %0 : vector<16x1xf32> to vector<16x32xf32>
    %34 = arith.mulf %32, %33 : vector<16x32xf32>
    %c0_16 = arith.constant 0 : index
    %c0_17 = arith.constant 0 : index
    %35 = vector.load %arg9[%c0_16, %c0_17] : memref<16x32xf32, #tpu.memory_space<vmem>>, vector<16x32xf32>
    tpu.vector_store %arg9[%c0_16, %c0_17], %34 {strides = array<i32>} : memref<16x32xf32, #tpu.memory_space<vmem>>, vector<16x32xf32>,
    %c0_18 = arith.constant 0 : index
    %c0_19 = arith.constant 0 : index
    %36 = vector.load %arg7[%c0_18, %c0_19] : memref<32x48xf32, #tpu.memory_space<vmem>>, vector<32x48xf32>
    %cst_20 = arith.constant dense<0.000000e+00> : vector<16x48xf32>
    %37 = tpu.matmul %34, %36, %cst_20 {dimension_numbers = #tpu.dot_dimension_numbers<[1], [0], [0], [1], [0, 0, 1, 1], [], []>} : vector<16x32xf32>, vector<32x48xf32>, vector<16x48xf32> -> vector<16x48xf32>
    %c0_21 = arith.constant 0 : index
    %c0_22 = arith.constant 0 : index
    %38 = vector.load %arg8[%c0_21, %c0_22] : memref<1x48xf32, #tpu.memory_space<vmem>>, vector<1x48xf32>
    %39 = vector.broadcast %38 : vector<1x48xf32> to vector<16x48xf32>
    %40 = arith.addf %37, %39 : vector<16x48xf32>
    %c0_23 = arith.constant 0 : index
    %c0_24 = arith.constant 0 : index
    %41 = vector.load %arg10[%c0_23, %c0_24] : memref<16x48xf32, #tpu.memory_space<vmem>>, vector<16x48xf32>
    tpu.vector_store %arg10[%c0_23, %c0_24], %40 {strides = array<i32>} : memref<16x48xf32, #tpu.memory_space<vmem>>, vector<16x48xf32>,
    return
  }
  func.func @transform_0(%arg0: i32) -> (i32, i32) {
    %c0_i32 = arith.constant 0 : i32
    %c0_i32_0 = arith.constant 0 : i32
    return %arg0, %c0_i32 : i32, i32
  }
  func.func @transform_1(%arg0: i32) -> (i32, i32) {
    %c0_i32 = arith.constant 0 : i32
    %c0_i32_0 = arith.constant 0 : i32
    return %arg0, %c0_i32 : i32, i32
  }
  func.func @transform_2(%arg0: i32) -> (i32, i32) {
    %c0_i32 = arith.constant 0 : i32
    %c0_i32_0 = arith.constant 0 : i32
    %c0_i32_1 = arith.constant 0 : i32
    return %c0_i32, %c0_i32_0 : i32, i32
  }
  func.func @transform_3(%arg0: i32) -> (i32, i32) {
    %c0_i32 = arith.constant 0 : i32
    %c0_i32_0 = arith.constant 0 : i32
    %c0_i32_1 = arith.constant 0 : i32
    return %c0_i32, %c0_i32_0 : i32, i32
  }
  func.func @transform_4(%arg0: i32) -> (i32, i32) {
    %c0_i32 = arith.constant 0 : i32
    %c0_i32_0 = arith.constant 0 : i32
    %c0_i32_1 = arith.constant 0 : i32
    return %c0_i32, %c0_i32_0 : i32, i32
  }
  func.func @transform_5(%arg0: i32) -> (i32, i32) {
    %c0_i32 = arith.constant 0 : i32
    %c0_i32_0 = arith.constant 0 : i32
    %c0_i32_1 = arith.constant 0 : i32
    return %c0_i32, %c0_i32_0 : i32, i32
  }
  func.func @transform_6(%arg0: i32) -> (i32, i32) {
    %c0_i32 = arith.constant 0 : i32
    %c0_i32_0 = arith.constant 0 : i32
    %c0_i32_1 = arith.constant 0 : i32
    return %c0_i32, %c0_i32_0 : i32, i32
  }
  func.func @transform_7(%arg0: i32) -> (i32, i32) {
    %c0_i32 = arith.constant 0 : i32
    %c0_i32_0 = arith.constant 0 : i32
    %c0_i32_1 = arith.constant 0 : i32
    return %c0_i32, %c0_i32_0 : i32, i32
  }
  func.func @transform_8(%arg0: i32) -> (i32, i32) {
    %c0_i32 = arith.constant 0 : i32
    %c0_i32_0 = arith.constant 0 : i32
    return %arg0, %c0_i32 : i32, i32
  }
  func.func @transform_9(%arg0: i32) -> (i32, i32) {
    %c0_i32 = arith.constant 0 : i32
    %c0_i32_0 = arith.constant 0 : i32
    return %arg0, %c0_i32 : i32, i32
  }
}

module attributes {stable_mosaic.version = 11 : i64} {
  func.func @recursion_kernel(%arg0: i32, %arg1: i32, %arg2: memref<2x8x32xf32, #tpu.memory_space<vmem>>, %arg3: memref<2x8x48xf32, #tpu.memory_space<vmem>>, %arg4: memref<2x8x1xf32, #tpu.memory_space<vmem>>, %arg5: memref<1x32xf32, #tpu.memory_space<vmem>>, %arg6: memref<32x48xf32, #tpu.memory_space<vmem>>, %arg7: memref<4x48x32xf32, #tpu.memory_space<vmem>>, %arg8: memref<4x1x32xf32, #tpu.memory_space<vmem>>, %arg9: memref<1x32xf32, #tpu.memory_space<vmem>>, %arg10: memref<1x32xf32, #tpu.memory_space<vmem>>, %arg11: memref<2x8x32xf32, #tpu.memory_space<vmem>>, %arg12: memref<2x32xf32, #tpu.memory_space<vmem>>, %arg13: memref<2x32xf32, #tpu.memory_space<vmem>>, %arg14: memref<2x32xf32, #tpu.memory_space<vmem>>) attributes {dimension_semantics = [#tpu.dimension_semantics<parallel>, #tpu.dimension_semantics<arbitrary>], iteration_bounds = array<i64: 1, 1>, scalar_prefetch = 0 : i64, scratch_operands = 2 : i64, tpu.core_type = #tpu.core_type<tc>, window_params = [{transform_indices = @transform_0, window_bounds = array<i64: 2, 8, 32>}, {transform_indices = @transform_1, window_bounds = array<i64: 2, 8, 48>}, {transform_indices = @transform_2, window_bounds = array<i64: 2, 8, 1>}, {pipeline_mode = #tpu.pipeline_mode<synchronous>, transform_indices = @transform_3, window_bounds = array<i64: 1, 32>}, {pipeline_mode = #tpu.pipeline_mode<synchronous>, transform_indices = @transform_4, window_bounds = array<i64: 32, 48>}, {pipeline_mode = #tpu.pipeline_mode<synchronous>, transform_indices = @transform_5, window_bounds = array<i64: 4, 48, 32>}, {pipeline_mode = #tpu.pipeline_mode<synchronous>, transform_indices = @transform_6, window_bounds = array<i64: 4, 1, 32>}, {pipeline_mode = #tpu.pipeline_mode<synchronous>, transform_indices = @transform_7, window_bounds = array<i64: 1, 32>}, {pipeline_mode = #tpu.pipeline_mode<synchronous>, transform_indices = @transform_8, window_bounds = array<i64: 1, 32>}, {transform_indices = @transform_9, window_bounds = array<i64: 2, 8, 32>}, {transform_indices = @transform_10, window_bounds = array<i64: 2, 32>}]} {
    %c0_i32 = arith.constant 0 : i32
    %0 = arith.cmpi eq, %arg1, %c0_i32 : i32
    %1 = arith.extui %0 : i1 to i32
    %c0_i32_0 = arith.constant 0 : i32
    %2 = arith.cmpi ne, %1, %c0_i32_0 : i32
    scf.if %2 {
      %c0_248 = arith.constant 0 : index
      %c0_249 = arith.constant 0 : index
      %637 = vector.load %arg5[%c0_248, %c0_249] : memref<1x32xf32, #tpu.memory_space<vmem>>, vector<1x32xf32>
      %638 = vector.shape_cast %637 : vector<1x32xf32> to vector<1x32xf32>
      %639 = vector.broadcast %638 : vector<1x32xf32> to vector<2x32xf32>
      %c0_250 = arith.constant 0 : index
      %c0_251 = arith.constant 0 : index
      %640 = vector.load %arg13[%c0_250, %c0_251] : memref<2x32xf32, #tpu.memory_space<vmem>>, vector<2x32xf32>
      tpu.vector_store %arg13[%c0_250, %c0_251], %639 {strides = array<i32>} : memref<2x32xf32, #tpu.memory_space<vmem>>, vector<2x32xf32>,
      %c0_252 = arith.constant 0 : index
      %c0_253 = arith.constant 0 : index
      %641 = vector.load %arg14[%c0_252, %c0_253] : memref<2x32xf32, #tpu.memory_space<vmem>>, vector<2x32xf32>
      tpu.vector_store %arg14[%c0_252, %c0_253], %639 {strides = array<i32>} : memref<2x32xf32, #tpu.memory_space<vmem>>, vector<2x32xf32>,
    } else {
    }
    %c0 = arith.constant 0 : index
    %c0_1 = arith.constant 0 : index
    %3 = vector.load %arg13[%c0, %c0_1] : memref<2x32xf32, #tpu.memory_space<vmem>>, vector<2x32xf32>
    %c0_2 = arith.constant 0 : index
    %c0_3 = arith.constant 0 : index
    %4 = vector.load %arg14[%c0_2, %c0_3] : memref<2x32xf32, #tpu.memory_space<vmem>>, vector<2x32xf32>
    %c0_4 = arith.constant 0 : index
    %c0_5 = arith.constant 0 : index
    %5 = vector.load %arg6[%c0_4, %c0_5] : memref<32x48xf32, #tpu.memory_space<vmem>>, vector<32x48xf32>
    %c0_6 = arith.constant 0 : index
    %c0_7 = arith.constant 0 : index
    %c0_8 = arith.constant 0 : index
    %6 = vector.load %arg7[%c0_6, %c0_7, %c0_8] : memref<4x48x32xf32, #tpu.memory_space<vmem>>, vector<1x48x32xf32>
    %7 = vector.shape_cast %6 : vector<1x48x32xf32> to vector<48x32xf32>
    %c1 = arith.constant 1 : index
    %c0_9 = arith.constant 0 : index
    %c0_10 = arith.constant 0 : index
    %8 = vector.load %arg7[%c1, %c0_9, %c0_10] : memref<4x48x32xf32, #tpu.memory_space<vmem>>, vector<1x48x32xf32>
    %9 = vector.shape_cast %8 : vector<1x48x32xf32> to vector<48x32xf32>
    %c2 = arith.constant 2 : index
    %c0_11 = arith.constant 0 : index
    %c0_12 = arith.constant 0 : index
    %10 = vector.load %arg7[%c2, %c0_11, %c0_12] : memref<4x48x32xf32, #tpu.memory_space<vmem>>, vector<1x48x32xf32>
    %11 = vector.shape_cast %10 : vector<1x48x32xf32> to vector<48x32xf32>
    %c3 = arith.constant 3 : index
    %c0_13 = arith.constant 0 : index
    %c0_14 = arith.constant 0 : index
    %12 = vector.load %arg7[%c3, %c0_13, %c0_14] : memref<4x48x32xf32, #tpu.memory_space<vmem>>, vector<1x48x32xf32>
    %13 = vector.shape_cast %12 : vector<1x48x32xf32> to vector<48x32xf32>
    %c0_15 = arith.constant 0 : index
    %c0_16 = arith.constant 0 : index
    %c0_17 = arith.constant 0 : index
    %14 = vector.load %arg8[%c0_15, %c0_16, %c0_17] : memref<4x1x32xf32, #tpu.memory_space<vmem>>, vector<1x1x32xf32>
    %15 = vector.shape_cast %14 : vector<1x1x32xf32> to vector<1x32xf32>
    %c1_18 = arith.constant 1 : index
    %c0_19 = arith.constant 0 : index
    %c0_20 = arith.constant 0 : index
    %16 = vector.load %arg8[%c1_18, %c0_19, %c0_20] : memref<4x1x32xf32, #tpu.memory_space<vmem>>, vector<1x1x32xf32>
    %17 = vector.shape_cast %16 : vector<1x1x32xf32> to vector<1x32xf32>
    %c2_21 = arith.constant 2 : index
    %c0_22 = arith.constant 0 : index
    %c0_23 = arith.constant 0 : index
    %18 = vector.load %arg8[%c2_21, %c0_22, %c0_23] : memref<4x1x32xf32, #tpu.memory_space<vmem>>, vector<1x1x32xf32>
    %19 = vector.shape_cast %18 : vector<1x1x32xf32> to vector<1x32xf32>
    %c3_24 = arith.constant 3 : index
    %c0_25 = arith.constant 0 : index
    %c0_26 = arith.constant 0 : index
    %20 = vector.load %arg8[%c3_24, %c0_25, %c0_26] : memref<4x1x32xf32, #tpu.memory_space<vmem>>, vector<1x1x32xf32>
    %21 = vector.shape_cast %20 : vector<1x1x32xf32> to vector<1x32xf32>
    %c0_27 = arith.constant 0 : index
    %c0_28 = arith.constant 0 : index
    %22 = vector.load %arg9[%c0_27, %c0_28] : memref<1x32xf32, #tpu.memory_space<vmem>>, vector<1x32xf32>
    %c0_29 = arith.constant 0 : index
    %c0_30 = arith.constant 0 : index
    %23 = vector.load %arg10[%c0_29, %c0_30] : memref<1x32xf32, #tpu.memory_space<vmem>>, vector<1x32xf32>
    %c0_31 = arith.constant 0 : index
    %c0_32 = arith.constant 0 : index
    %c0_33 = arith.constant 0 : index
    %24 = vector.load %arg2[%c0_31, %c0_32, %c0_33] : memref<2x8x32xf32, #tpu.memory_space<vmem>>, vector<2x1x32xf32>
    %25 = vector.shape_cast %24 : vector<2x1x32xf32> to vector<2x32xf32>
    %c0_34 = arith.constant 0 : index
    %c0_35 = arith.constant 0 : index
    %c0_36 = arith.constant 0 : index
    %26 = vector.load %arg3[%c0_34, %c0_35, %c0_36] : memref<2x8x48xf32, #tpu.memory_space<vmem>>, vector<2x1x48xf32>
    %27 = vector.shape_cast %26 : vector<2x1x48xf32> to vector<2x48xf32>
    %c0_37 = arith.constant 0 : index
    %c0_38 = arith.constant 0 : index
    %c0_39 = arith.constant 0 : index
    %28 = vector.load %arg4[%c0_37, %c0_38, %c0_39] : memref<2x8x1xf32, #tpu.memory_space<vmem>>, vector<2x1x1xf32>
    %29 = vector.shape_cast %28 : vector<2x1x1xf32> to vector<2x1xf32>
    %cst = arith.constant dense<0.000000e+00> : vector<2x48xf32>
    %30 = tpu.matmul %3, %5, %cst {dimension_numbers = #tpu.dot_dimension_numbers<[1], [0], [0], [1], [0, 0, 1, 1], [], []>} : vector<2x32xf32>, vector<32x48xf32>, vector<2x48xf32> -> vector<2x48xf32>
    %31 = arith.addf %30, %27 : vector<2x48xf32>
    %cst_40 = arith.constant 0.000000e+00 : f32
    %32 = vector.broadcast %cst_40 : f32 to vector<2x48xf32>
    %33 = arith.maximumf %31, %32 : vector<2x48xf32>
    %cst_41 = arith.constant dense<0.000000e+00> : vector<2x32xf32>
    %34 = tpu.matmul %33, %7, %cst_41 {dimension_numbers = #tpu.dot_dimension_numbers<[1], [0], [0], [1], [0, 0, 1, 1], [], []>} : vector<2x48xf32>, vector<48x32xf32>, vector<2x32xf32> -> vector<2x32xf32>
    %35 = vector.broadcast %15 : vector<1x32xf32> to vector<2x32xf32>
    %36 = arith.addf %34, %35 : vector<2x32xf32>
    %37 = arith.negf %36 : vector<2x32xf32>
    %38 = math.exp %37 : vector<2x32xf32>
    %cst_42 = arith.constant 1.000000e+00 : f32
    %39 = vector.broadcast %cst_42 : f32 to vector<2x32xf32>
    %40 = arith.addf %39, %38 : vector<2x32xf32>
    %41 = arith.divf %39, %40 : vector<2x32xf32>
    %cst_43 = arith.constant dense<0.000000e+00> : vector<2x32xf32>
    %42 = tpu.matmul %33, %9, %cst_43 {dimension_numbers = #tpu.dot_dimension_numbers<[1], [0], [0], [1], [0, 0, 1, 1], [], []>} : vector<2x48xf32>, vector<48x32xf32>, vector<2x32xf32> -> vector<2x32xf32>
    %43 = vector.broadcast %17 : vector<1x32xf32> to vector<2x32xf32>
    %44 = arith.addf %42, %43 : vector<2x32xf32>
    %45 = arith.negf %44 : vector<2x32xf32>
    %46 = math.exp %45 : vector<2x32xf32>
    %cst_44 = arith.constant 1.000000e+00 : f32
    %47 = vector.broadcast %cst_44 : f32 to vector<2x32xf32>
    %48 = arith.addf %47, %46 : vector<2x32xf32>
    %49 = arith.divf %47, %48 : vector<2x32xf32>
    %cst_45 = arith.constant dense<0.000000e+00> : vector<2x32xf32>
    %50 = tpu.matmul %33, %11, %cst_45 {dimension_numbers = #tpu.dot_dimension_numbers<[1], [0], [0], [1], [0, 0, 1, 1], [], []>} : vector<2x48xf32>, vector<48x32xf32>, vector<2x32xf32> -> vector<2x32xf32>
    %51 = vector.broadcast %19 : vector<1x32xf32> to vector<2x32xf32>
    %52 = arith.addf %50, %51 : vector<2x32xf32>
    %53 = arith.negf %52 : vector<2x32xf32>
    %54 = math.exp %53 : vector<2x32xf32>
    %cst_46 = arith.constant 1.000000e+00 : f32
    %55 = vector.broadcast %cst_46 : f32 to vector<2x32xf32>
    %56 = arith.addf %55, %54 : vector<2x32xf32>
    %57 = arith.divf %55, %56 : vector<2x32xf32>
    %cst_47 = arith.constant dense<0.000000e+00> : vector<2x32xf32>
    %58 = tpu.matmul %33, %13, %cst_47 {dimension_numbers = #tpu.dot_dimension_numbers<[1], [0], [0], [1], [0, 0, 1, 1], [], []>} : vector<2x48xf32>, vector<48x32xf32>, vector<2x32xf32> -> vector<2x32xf32>
    %59 = vector.broadcast %21 : vector<1x32xf32> to vector<2x32xf32>
    %60 = arith.addf %58, %59 : vector<2x32xf32>
    %61 = arith.mulf %41, %3 : vector<2x32xf32>
    %62 = arith.mulf %49, %25 : vector<2x32xf32>
    %63 = arith.addf %61, %62 : vector<2x32xf32>
    %64 = arith.mulf %57, %60 : vector<2x32xf32>
    %65 = arith.addf %63, %64 : vector<2x32xf32>
    %cst_48 = arith.constant dense<0.000000e+00> : vector<2xf32>
    %66 = vector.multi_reduction <add>, %65, %cst_48 [1] : vector<2x32xf32> to vector<2xf32>
    %67 = vector.shape_cast %66 : vector<2xf32> to vector<2x1xf32>
    %cst_49 = arith.constant 3.200000e+01 : f32
    %68 = vector.broadcast %cst_49 : f32 to vector<2x1xf32>
    %69 = arith.divf %67, %68 : vector<2x1xf32>
    %70 = vector.broadcast %69 : vector<2x1xf32> to vector<2x32xf32>
    %71 = arith.subf %65, %70 : vector<2x32xf32>
    %72 = arith.mulf %71, %71 : vector<2x32xf32>
    %cst_50 = arith.constant dense<0.000000e+00> : vector<2xf32>
    %73 = vector.multi_reduction <add>, %72, %cst_50 [1] : vector<2x32xf32> to vector<2xf32>
    %74 = vector.shape_cast %73 : vector<2xf32> to vector<2x1xf32>
    %cst_51 = arith.constant 3.200000e+01 : f32
    %75 = vector.broadcast %cst_51 : f32 to vector<2x1xf32>
    %76 = arith.divf %74, %75 : vector<2x1xf32>
    %77 = vector.broadcast %69 : vector<2x1xf32> to vector<2x32xf32>
    %78 = arith.subf %65, %77 : vector<2x32xf32>
    %cst_52 = arith.constant 9.99999974E-6 : f32
    %79 = vector.broadcast %cst_52 : f32 to vector<2x1xf32>
    %80 = arith.addf %76, %79 : vector<2x1xf32>
    %81 = math.rsqrt %80 : vector<2x1xf32>
    %82 = vector.broadcast %81 : vector<2x1xf32> to vector<2x32xf32>
    %83 = arith.mulf %78, %82 : vector<2x32xf32>
    %84 = vector.broadcast %22 : vector<1x32xf32> to vector<2x32xf32>
    %85 = arith.mulf %83, %84 : vector<2x32xf32>
    %86 = vector.broadcast %23 : vector<1x32xf32> to vector<2x32xf32>
    %87 = arith.addf %85, %86 : vector<2x32xf32>
    %88 = vector.broadcast %29 : vector<2x1xf32> to vector<2x32xf32>
    %89 = arith.mulf %88, %87 : vector<2x32xf32>
    %cst_53 = arith.constant 1.000000e+00 : f32
    %90 = vector.broadcast %cst_53 : f32 to vector<2x1xf32>
    %91 = arith.subf %90, %29 : vector<2x1xf32>
    %92 = vector.broadcast %91 : vector<2x1xf32> to vector<2x32xf32>
    %93 = arith.mulf %92, %4 : vector<2x32xf32>
    %94 = arith.addf %89, %93 : vector<2x32xf32>
    %95 = vector.broadcast %29 : vector<2x1xf32> to vector<2x32xf32>
    %96 = arith.mulf %87, %95 : vector<2x32xf32>
    %c0_54 = arith.constant 0 : index
    %c0_55 = arith.constant 0 : index
    %c0_56 = arith.constant 0 : index
    %97 = vector.load %arg11[%c0_54, %c0_55, %c0_56] : memref<2x8x32xf32, #tpu.memory_space<vmem>>, vector<2x1x32xf32>
    %98 = vector.shape_cast %97 : vector<2x1x32xf32> to vector<2x32xf32>
    %99 = vector.shape_cast %96 : vector<2x32xf32> to vector<2x1x32xf32>
    tpu.vector_store %arg11[%c0_54, %c0_55, %c0_56], %99 {strides = array<i32>} : memref<2x8x32xf32, #tpu.memory_space<vmem>>, vector<2x1x32xf32>,
    %c0_57 = arith.constant 0 : index
    %c1_58 = arith.constant 1 : index
    %c0_59 = arith.constant 0 : index
    %100 = vector.load %arg2[%c0_57, %c1_58, %c0_59] : memref<2x8x32xf32, #tpu.memory_space<vmem>>, vector<2x1x32xf32>
    %101 = vector.shape_cast %100 : vector<2x1x32xf32> to vector<2x32xf32>
    %c0_60 = arith.constant 0 : index
    %c1_61 = arith.constant 1 : index
    %c0_62 = arith.constant 0 : index
    %102 = vector.load %arg3[%c0_60, %c1_61, %c0_62] : memref<2x8x48xf32, #tpu.memory_space<vmem>>, vector<2x1x48xf32>
    %103 = vector.shape_cast %102 : vector<2x1x48xf32> to vector<2x48xf32>
    %c0_63 = arith.constant 0 : index
    %c1_64 = arith.constant 1 : index
    %c0_65 = arith.constant 0 : index
    %104 = vector.load %arg4[%c0_63, %c1_64, %c0_65] : memref<2x8x1xf32, #tpu.memory_space<vmem>>, vector<2x1x1xf32>
    %105 = vector.shape_cast %104 : vector<2x1x1xf32> to vector<2x1xf32>
    %cst_66 = arith.constant dense<0.000000e+00> : vector<2x48xf32>
    %106 = tpu.matmul %87, %5, %cst_66 {dimension_numbers = #tpu.dot_dimension_numbers<[1], [0], [0], [1], [0, 0, 1, 1], [], []>} : vector<2x32xf32>, vector<32x48xf32>, vector<2x48xf32> -> vector<2x48xf32>
    %107 = arith.addf %106, %103 : vector<2x48xf32>
    %cst_67 = arith.constant 0.000000e+00 : f32
    %108 = vector.broadcast %cst_67 : f32 to vector<2x48xf32>
    %109 = arith.maximumf %107, %108 : vector<2x48xf32>
    %cst_68 = arith.constant dense<0.000000e+00> : vector<2x32xf32>
    %110 = tpu.matmul %109, %7, %cst_68 {dimension_numbers = #tpu.dot_dimension_numbers<[1], [0], [0], [1], [0, 0, 1, 1], [], []>} : vector<2x48xf32>, vector<48x32xf32>, vector<2x32xf32> -> vector<2x32xf32>
    %111 = vector.broadcast %15 : vector<1x32xf32> to vector<2x32xf32>
    %112 = arith.addf %110, %111 : vector<2x32xf32>
    %113 = arith.negf %112 : vector<2x32xf32>
    %114 = math.exp %113 : vector<2x32xf32>
    %cst_69 = arith.constant 1.000000e+00 : f32
    %115 = vector.broadcast %cst_69 : f32 to vector<2x32xf32>
    %116 = arith.addf %115, %114 : vector<2x32xf32>
    %117 = arith.divf %115, %116 : vector<2x32xf32>
    %cst_70 = arith.constant dense<0.000000e+00> : vector<2x32xf32>
    %118 = tpu.matmul %109, %9, %cst_70 {dimension_numbers = #tpu.dot_dimension_numbers<[1], [0], [0], [1], [0, 0, 1, 1], [], []>} : vector<2x48xf32>, vector<48x32xf32>, vector<2x32xf32> -> vector<2x32xf32>
    %119 = vector.broadcast %17 : vector<1x32xf32> to vector<2x32xf32>
    %120 = arith.addf %118, %119 : vector<2x32xf32>
    %121 = arith.negf %120 : vector<2x32xf32>
    %122 = math.exp %121 : vector<2x32xf32>
    %cst_71 = arith.constant 1.000000e+00 : f32
    %123 = vector.broadcast %cst_71 : f32 to vector<2x32xf32>
    %124 = arith.addf %123, %122 : vector<2x32xf32>
    %125 = arith.divf %123, %124 : vector<2x32xf32>
    %cst_72 = arith.constant dense<0.000000e+00> : vector<2x32xf32>
    %126 = tpu.matmul %109, %11, %cst_72 {dimension_numbers = #tpu.dot_dimension_numbers<[1], [0], [0], [1], [0, 0, 1, 1], [], []>} : vector<2x48xf32>, vector<48x32xf32>, vector<2x32xf32> -> vector<2x32xf32>
    %127 = vector.broadcast %19 : vector<1x32xf32> to vector<2x32xf32>
    %128 = arith.addf %126, %127 : vector<2x32xf32>
    %129 = arith.negf %128 : vector<2x32xf32>
    %130 = math.exp %129 : vector<2x32xf32>
    %cst_73 = arith.constant 1.000000e+00 : f32
    %131 = vector.broadcast %cst_73 : f32 to vector<2x32xf32>
    %132 = arith.addf %131, %130 : vector<2x32xf32>
    %133 = arith.divf %131, %132 : vector<2x32xf32>
    %cst_74 = arith.constant dense<0.000000e+00> : vector<2x32xf32>
    %134 = tpu.matmul %109, %13, %cst_74 {dimension_numbers = #tpu.dot_dimension_numbers<[1], [0], [0], [1], [0, 0, 1, 1], [], []>} : vector<2x48xf32>, vector<48x32xf32>, vector<2x32xf32> -> vector<2x32xf32>
    %135 = vector.broadcast %21 : vector<1x32xf32> to vector<2x32xf32>
    %136 = arith.addf %134, %135 : vector<2x32xf32>
    %137 = arith.mulf %117, %87 : vector<2x32xf32>
    %138 = arith.mulf %125, %101 : vector<2x32xf32>
    %139 = arith.addf %137, %138 : vector<2x32xf32>
    %140 = arith.mulf %133, %136 : vector<2x32xf32>
    %141 = arith.addf %139, %140 : vector<2x32xf32>
    %cst_75 = arith.constant dense<0.000000e+00> : vector<2xf32>
    %142 = vector.multi_reduction <add>, %141, %cst_75 [1] : vector<2x32xf32> to vector<2xf32>
    %143 = vector.shape_cast %142 : vector<2xf32> to vector<2x1xf32>
    %cst_76 = arith.constant 3.200000e+01 : f32
    %144 = vector.broadcast %cst_76 : f32 to vector<2x1xf32>
    %145 = arith.divf %143, %144 : vector<2x1xf32>
    %146 = vector.broadcast %145 : vector<2x1xf32> to vector<2x32xf32>
    %147 = arith.subf %141, %146 : vector<2x32xf32>
    %148 = arith.mulf %147, %147 : vector<2x32xf32>
    %cst_77 = arith.constant dense<0.000000e+00> : vector<2xf32>
    %149 = vector.multi_reduction <add>, %148, %cst_77 [1] : vector<2x32xf32> to vector<2xf32>
    %150 = vector.shape_cast %149 : vector<2xf32> to vector<2x1xf32>
    %cst_78 = arith.constant 3.200000e+01 : f32
    %151 = vector.broadcast %cst_78 : f32 to vector<2x1xf32>
    %152 = arith.divf %150, %151 : vector<2x1xf32>
    %153 = vector.broadcast %145 : vector<2x1xf32> to vector<2x32xf32>
    %154 = arith.subf %141, %153 : vector<2x32xf32>
    %cst_79 = arith.constant 9.99999974E-6 : f32
    %155 = vector.broadcast %cst_79 : f32 to vector<2x1xf32>
    %156 = arith.addf %152, %155 : vector<2x1xf32>
    %157 = math.rsqrt %156 : vector<2x1xf32>
    %158 = vector.broadcast %157 : vector<2x1xf32> to vector<2x32xf32>
    %159 = arith.mulf %154, %158 : vector<2x32xf32>
    %160 = vector.broadcast %22 : vector<1x32xf32> to vector<2x32xf32>
    %161 = arith.mulf %159, %160 : vector<2x32xf32>
    %162 = vector.broadcast %23 : vector<1x32xf32> to vector<2x32xf32>
    %163 = arith.addf %161, %162 : vector<2x32xf32>
    %164 = vector.broadcast %105 : vector<2x1xf32> to vector<2x32xf32>
    %165 = arith.mulf %164, %163 : vector<2x32xf32>
    %cst_80 = arith.constant 1.000000e+00 : f32
    %166 = vector.broadcast %cst_80 : f32 to vector<2x1xf32>
    %167 = arith.subf %166, %105 : vector<2x1xf32>
    %168 = vector.broadcast %167 : vector<2x1xf32> to vector<2x32xf32>
    %169 = arith.mulf %168, %94 : vector<2x32xf32>
    %170 = arith.addf %165, %169 : vector<2x32xf32>
    %171 = vector.broadcast %105 : vector<2x1xf32> to vector<2x32xf32>
    %172 = arith.mulf %163, %171 : vector<2x32xf32>
    %c0_81 = arith.constant 0 : index
    %c1_82 = arith.constant 1 : index
    %c0_83 = arith.constant 0 : index
    %173 = vector.load %arg11[%c0_81, %c1_82, %c0_83] : memref<2x8x32xf32, #tpu.memory_space<vmem>>, vector<2x1x32xf32>
    %174 = vector.shape_cast %173 : vector<2x1x32xf32> to vector<2x32xf32>
    %175 = vector.shape_cast %172 : vector<2x32xf32> to vector<2x1x32xf32>
    tpu.vector_store %arg11[%c0_81, %c1_82, %c0_83], %175 {strides = array<i32>} : memref<2x8x32xf32, #tpu.memory_space<vmem>>, vector<2x1x32xf32>,
    %c0_84 = arith.constant 0 : index
    %c2_85 = arith.constant 2 : index
    %c0_86 = arith.constant 0 : index
    %176 = vector.load %arg2[%c0_84, %c2_85, %c0_86] : memref<2x8x32xf32, #tpu.memory_space<vmem>>, vector<2x1x32xf32>
    %177 = vector.shape_cast %176 : vector<2x1x32xf32> to vector<2x32xf32>
    %c0_87 = arith.constant 0 : index
    %c2_88 = arith.constant 2 : index
    %c0_89 = arith.constant 0 : index
    %178 = vector.load %arg3[%c0_87, %c2_88, %c0_89] : memref<2x8x48xf32, #tpu.memory_space<vmem>>, vector<2x1x48xf32>
    %179 = vector.shape_cast %178 : vector<2x1x48xf32> to vector<2x48xf32>
    %c0_90 = arith.constant 0 : index
    %c2_91 = arith.constant 2 : index
    %c0_92 = arith.constant 0 : index
    %180 = vector.load %arg4[%c0_90, %c2_91, %c0_92] : memref<2x8x1xf32, #tpu.memory_space<vmem>>, vector<2x1x1xf32>
    %181 = vector.shape_cast %180 : vector<2x1x1xf32> to vector<2x1xf32>
    %cst_93 = arith.constant dense<0.000000e+00> : vector<2x48xf32>
    %182 = tpu.matmul %163, %5, %cst_93 {dimension_numbers = #tpu.dot_dimension_numbers<[1], [0], [0], [1], [0, 0, 1, 1], [], []>} : vector<2x32xf32>, vector<32x48xf32>, vector<2x48xf32> -> vector<2x48xf32>
    %183 = arith.addf %182, %179 : vector<2x48xf32>
    %cst_94 = arith.constant 0.000000e+00 : f32
    %184 = vector.broadcast %cst_94 : f32 to vector<2x48xf32>
    %185 = arith.maximumf %183, %184 : vector<2x48xf32>
    %cst_95 = arith.constant dense<0.000000e+00> : vector<2x32xf32>
    %186 = tpu.matmul %185, %7, %cst_95 {dimension_numbers = #tpu.dot_dimension_numbers<[1], [0], [0], [1], [0, 0, 1, 1], [], []>} : vector<2x48xf32>, vector<48x32xf32>, vector<2x32xf32> -> vector<2x32xf32>
    %187 = vector.broadcast %15 : vector<1x32xf32> to vector<2x32xf32>
    %188 = arith.addf %186, %187 : vector<2x32xf32>
    %189 = arith.negf %188 : vector<2x32xf32>
    %190 = math.exp %189 : vector<2x32xf32>
    %cst_96 = arith.constant 1.000000e+00 : f32
    %191 = vector.broadcast %cst_96 : f32 to vector<2x32xf32>
    %192 = arith.addf %191, %190 : vector<2x32xf32>
    %193 = arith.divf %191, %192 : vector<2x32xf32>
    %cst_97 = arith.constant dense<0.000000e+00> : vector<2x32xf32>
    %194 = tpu.matmul %185, %9, %cst_97 {dimension_numbers = #tpu.dot_dimension_numbers<[1], [0], [0], [1], [0, 0, 1, 1], [], []>} : vector<2x48xf32>, vector<48x32xf32>, vector<2x32xf32> -> vector<2x32xf32>
    %195 = vector.broadcast %17 : vector<1x32xf32> to vector<2x32xf32>
    %196 = arith.addf %194, %195 : vector<2x32xf32>
    %197 = arith.negf %196 : vector<2x32xf32>
    %198 = math.exp %197 : vector<2x32xf32>
    %cst_98 = arith.constant 1.000000e+00 : f32
    %199 = vector.broadcast %cst_98 : f32 to vector<2x32xf32>
    %200 = arith.addf %199, %198 : vector<2x32xf32>
    %201 = arith.divf %199, %200 : vector<2x32xf32>
    %cst_99 = arith.constant dense<0.000000e+00> : vector<2x32xf32>
    %202 = tpu.matmul %185, %11, %cst_99 {dimension_numbers = #tpu.dot_dimension_numbers<[1], [0], [0], [1], [0, 0, 1, 1], [], []>} : vector<2x48xf32>, vector<48x32xf32>, vector<2x32xf32> -> vector<2x32xf32>
    %203 = vector.broadcast %19 : vector<1x32xf32> to vector<2x32xf32>
    %204 = arith.addf %202, %203 : vector<2x32xf32>
    %205 = arith.negf %204 : vector<2x32xf32>
    %206 = math.exp %205 : vector<2x32xf32>
    %cst_100 = arith.constant 1.000000e+00 : f32
    %207 = vector.broadcast %cst_100 : f32 to vector<2x32xf32>
    %208 = arith.addf %207, %206 : vector<2x32xf32>
    %209 = arith.divf %207, %208 : vector<2x32xf32>
    %cst_101 = arith.constant dense<0.000000e+00> : vector<2x32xf32>
    %210 = tpu.matmul %185, %13, %cst_101 {dimension_numbers = #tpu.dot_dimension_numbers<[1], [0], [0], [1], [0, 0, 1, 1], [], []>} : vector<2x48xf32>, vector<48x32xf32>, vector<2x32xf32> -> vector<2x32xf32>
    %211 = vector.broadcast %21 : vector<1x32xf32> to vector<2x32xf32>
    %212 = arith.addf %210, %211 : vector<2x32xf32>
    %213 = arith.mulf %193, %163 : vector<2x32xf32>
    %214 = arith.mulf %201, %177 : vector<2x32xf32>
    %215 = arith.addf %213, %214 : vector<2x32xf32>
    %216 = arith.mulf %209, %212 : vector<2x32xf32>
    %217 = arith.addf %215, %216 : vector<2x32xf32>
    %cst_102 = arith.constant dense<0.000000e+00> : vector<2xf32>
    %218 = vector.multi_reduction <add>, %217, %cst_102 [1] : vector<2x32xf32> to vector<2xf32>
    %219 = vector.shape_cast %218 : vector<2xf32> to vector<2x1xf32>
    %cst_103 = arith.constant 3.200000e+01 : f32
    %220 = vector.broadcast %cst_103 : f32 to vector<2x1xf32>
    %221 = arith.divf %219, %220 : vector<2x1xf32>
    %222 = vector.broadcast %221 : vector<2x1xf32> to vector<2x32xf32>
    %223 = arith.subf %217, %222 : vector<2x32xf32>
    %224 = arith.mulf %223, %223 : vector<2x32xf32>
    %cst_104 = arith.constant dense<0.000000e+00> : vector<2xf32>
    %225 = vector.multi_reduction <add>, %224, %cst_104 [1] : vector<2x32xf32> to vector<2xf32>
    %226 = vector.shape_cast %225 : vector<2xf32> to vector<2x1xf32>
    %cst_105 = arith.constant 3.200000e+01 : f32
    %227 = vector.broadcast %cst_105 : f32 to vector<2x1xf32>
    %228 = arith.divf %226, %227 : vector<2x1xf32>
    %229 = vector.broadcast %221 : vector<2x1xf32> to vector<2x32xf32>
    %230 = arith.subf %217, %229 : vector<2x32xf32>
    %cst_106 = arith.constant 9.99999974E-6 : f32
    %231 = vector.broadcast %cst_106 : f32 to vector<2x1xf32>
    %232 = arith.addf %228, %231 : vector<2x1xf32>
    %233 = math.rsqrt %232 : vector<2x1xf32>
    %234 = vector.broadcast %233 : vector<2x1xf32> to vector<2x32xf32>
    %235 = arith.mulf %230, %234 : vector<2x32xf32>
    %236 = vector.broadcast %22 : vector<1x32xf32> to vector<2x32xf32>
    %237 = arith.mulf %235, %236 : vector<2x32xf32>
    %238 = vector.broadcast %23 : vector<1x32xf32> to vector<2x32xf32>
    %239 = arith.addf %237, %238 : vector<2x32xf32>
    %240 = vector.broadcast %181 : vector<2x1xf32> to vector<2x32xf32>
    %241 = arith.mulf %240, %239 : vector<2x32xf32>
    %cst_107 = arith.constant 1.000000e+00 : f32
    %242 = vector.broadcast %cst_107 : f32 to vector<2x1xf32>
    %243 = arith.subf %242, %181 : vector<2x1xf32>
    %244 = vector.broadcast %243 : vector<2x1xf32> to vector<2x32xf32>
    %245 = arith.mulf %244, %170 : vector<2x32xf32>
    %246 = arith.addf %241, %245 : vector<2x32xf32>
    %247 = vector.broadcast %181 : vector<2x1xf32> to vector<2x32xf32>
    %248 = arith.mulf %239, %247 : vector<2x32xf32>
    %c0_108 = arith.constant 0 : index
    %c2_109 = arith.constant 2 : index
    %c0_110 = arith.constant 0 : index
    %249 = vector.load %arg11[%c0_108, %c2_109, %c0_110] : memref<2x8x32xf32, #tpu.memory_space<vmem>>, vector<2x1x32xf32>
    %250 = vector.shape_cast %249 : vector<2x1x32xf32> to vector<2x32xf32>
    %251 = vector.shape_cast %248 : vector<2x32xf32> to vector<2x1x32xf32>
    tpu.vector_store %arg11[%c0_108, %c2_109, %c0_110], %251 {strides = array<i32>} : memref<2x8x32xf32, #tpu.memory_space<vmem>>, vector<2x1x32xf32>,
    %c0_111 = arith.constant 0 : index
    %c3_112 = arith.constant 3 : index
    %c0_113 = arith.constant 0 : index
    %252 = vector.load %arg2[%c0_111, %c3_112, %c0_113] : memref<2x8x32xf32, #tpu.memory_space<vmem>>, vector<2x1x32xf32>
    %253 = vector.shape_cast %252 : vector<2x1x32xf32> to vector<2x32xf32>
    %c0_114 = arith.constant 0 : index
    %c3_115 = arith.constant 3 : index
    %c0_116 = arith.constant 0 : index
    %254 = vector.load %arg3[%c0_114, %c3_115, %c0_116] : memref<2x8x48xf32, #tpu.memory_space<vmem>>, vector<2x1x48xf32>
    %255 = vector.shape_cast %254 : vector<2x1x48xf32> to vector<2x48xf32>
    %c0_117 = arith.constant 0 : index
    %c3_118 = arith.constant 3 : index
    %c0_119 = arith.constant 0 : index
    %256 = vector.load %arg4[%c0_117, %c3_118, %c0_119] : memref<2x8x1xf32, #tpu.memory_space<vmem>>, vector<2x1x1xf32>
    %257 = vector.shape_cast %256 : vector<2x1x1xf32> to vector<2x1xf32>
    %cst_120 = arith.constant dense<0.000000e+00> : vector<2x48xf32>
    %258 = tpu.matmul %239, %5, %cst_120 {dimension_numbers = #tpu.dot_dimension_numbers<[1], [0], [0], [1], [0, 0, 1, 1], [], []>} : vector<2x32xf32>, vector<32x48xf32>, vector<2x48xf32> -> vector<2x48xf32>
    %259 = arith.addf %258, %255 : vector<2x48xf32>
    %cst_121 = arith.constant 0.000000e+00 : f32
    %260 = vector.broadcast %cst_121 : f32 to vector<2x48xf32>
    %261 = arith.maximumf %259, %260 : vector<2x48xf32>
    %cst_122 = arith.constant dense<0.000000e+00> : vector<2x32xf32>
    %262 = tpu.matmul %261, %7, %cst_122 {dimension_numbers = #tpu.dot_dimension_numbers<[1], [0], [0], [1], [0, 0, 1, 1], [], []>} : vector<2x48xf32>, vector<48x32xf32>, vector<2x32xf32> -> vector<2x32xf32>
    %263 = vector.broadcast %15 : vector<1x32xf32> to vector<2x32xf32>
    %264 = arith.addf %262, %263 : vector<2x32xf32>
    %265 = arith.negf %264 : vector<2x32xf32>
    %266 = math.exp %265 : vector<2x32xf32>
    %cst_123 = arith.constant 1.000000e+00 : f32
    %267 = vector.broadcast %cst_123 : f32 to vector<2x32xf32>
    %268 = arith.addf %267, %266 : vector<2x32xf32>
    %269 = arith.divf %267, %268 : vector<2x32xf32>
    %cst_124 = arith.constant dense<0.000000e+00> : vector<2x32xf32>
    %270 = tpu.matmul %261, %9, %cst_124 {dimension_numbers = #tpu.dot_dimension_numbers<[1], [0], [0], [1], [0, 0, 1, 1], [], []>} : vector<2x48xf32>, vector<48x32xf32>, vector<2x32xf32> -> vector<2x32xf32>
    %271 = vector.broadcast %17 : vector<1x32xf32> to vector<2x32xf32>
    %272 = arith.addf %270, %271 : vector<2x32xf32>
    %273 = arith.negf %272 : vector<2x32xf32>
    %274 = math.exp %273 : vector<2x32xf32>
    %cst_125 = arith.constant 1.000000e+00 : f32
    %275 = vector.broadcast %cst_125 : f32 to vector<2x32xf32>
    %276 = arith.addf %275, %274 : vector<2x32xf32>
    %277 = arith.divf %275, %276 : vector<2x32xf32>
    %cst_126 = arith.constant dense<0.000000e+00> : vector<2x32xf32>
    %278 = tpu.matmul %261, %11, %cst_126 {dimension_numbers = #tpu.dot_dimension_numbers<[1], [0], [0], [1], [0, 0, 1, 1], [], []>} : vector<2x48xf32>, vector<48x32xf32>, vector<2x32xf32> -> vector<2x32xf32>
    %279 = vector.broadcast %19 : vector<1x32xf32> to vector<2x32xf32>
    %280 = arith.addf %278, %279 : vector<2x32xf32>
    %281 = arith.negf %280 : vector<2x32xf32>
    %282 = math.exp %281 : vector<2x32xf32>
    %cst_127 = arith.constant 1.000000e+00 : f32
    %283 = vector.broadcast %cst_127 : f32 to vector<2x32xf32>
    %284 = arith.addf %283, %282 : vector<2x32xf32>
    %285 = arith.divf %283, %284 : vector<2x32xf32>
    %cst_128 = arith.constant dense<0.000000e+00> : vector<2x32xf32>
    %286 = tpu.matmul %261, %13, %cst_128 {dimension_numbers = #tpu.dot_dimension_numbers<[1], [0], [0], [1], [0, 0, 1, 1], [], []>} : vector<2x48xf32>, vector<48x32xf32>, vector<2x32xf32> -> vector<2x32xf32>
    %287 = vector.broadcast %21 : vector<1x32xf32> to vector<2x32xf32>
    %288 = arith.addf %286, %287 : vector<2x32xf32>
    %289 = arith.mulf %269, %239 : vector<2x32xf32>
    %290 = arith.mulf %277, %253 : vector<2x32xf32>
    %291 = arith.addf %289, %290 : vector<2x32xf32>
    %292 = arith.mulf %285, %288 : vector<2x32xf32>
    %293 = arith.addf %291, %292 : vector<2x32xf32>
    %cst_129 = arith.constant dense<0.000000e+00> : vector<2xf32>
    %294 = vector.multi_reduction <add>, %293, %cst_129 [1] : vector<2x32xf32> to vector<2xf32>
    %295 = vector.shape_cast %294 : vector<2xf32> to vector<2x1xf32>
    %cst_130 = arith.constant 3.200000e+01 : f32
    %296 = vector.broadcast %cst_130 : f32 to vector<2x1xf32>
    %297 = arith.divf %295, %296 : vector<2x1xf32>
    %298 = vector.broadcast %297 : vector<2x1xf32> to vector<2x32xf32>
    %299 = arith.subf %293, %298 : vector<2x32xf32>
    %300 = arith.mulf %299, %299 : vector<2x32xf32>
    %cst_131 = arith.constant dense<0.000000e+00> : vector<2xf32>
    %301 = vector.multi_reduction <add>, %300, %cst_131 [1] : vector<2x32xf32> to vector<2xf32>
    %302 = vector.shape_cast %301 : vector<2xf32> to vector<2x1xf32>
    %cst_132 = arith.constant 3.200000e+01 : f32
    %303 = vector.broadcast %cst_132 : f32 to vector<2x1xf32>
    %304 = arith.divf %302, %303 : vector<2x1xf32>
    %305 = vector.broadcast %297 : vector<2x1xf32> to vector<2x32xf32>
    %306 = arith.subf %293, %305 : vector<2x32xf32>
    %cst_133 = arith.constant 9.99999974E-6 : f32
    %307 = vector.broadcast %cst_133 : f32 to vector<2x1xf32>
    %308 = arith.addf %304, %307 : vector<2x1xf32>
    %309 = math.rsqrt %308 : vector<2x1xf32>
    %310 = vector.broadcast %309 : vector<2x1xf32> to vector<2x32xf32>
    %311 = arith.mulf %306, %310 : vector<2x32xf32>
    %312 = vector.broadcast %22 : vector<1x32xf32> to vector<2x32xf32>
    %313 = arith.mulf %311, %312 : vector<2x32xf32>
    %314 = vector.broadcast %23 : vector<1x32xf32> to vector<2x32xf32>
    %315 = arith.addf %313, %314 : vector<2x32xf32>
    %316 = vector.broadcast %257 : vector<2x1xf32> to vector<2x32xf32>
    %317 = arith.mulf %316, %315 : vector<2x32xf32>
    %cst_134 = arith.constant 1.000000e+00 : f32
    %318 = vector.broadcast %cst_134 : f32 to vector<2x1xf32>
    %319 = arith.subf %318, %257 : vector<2x1xf32>
    %320 = vector.broadcast %319 : vector<2x1xf32> to vector<2x32xf32>
    %321 = arith.mulf %320, %246 : vector<2x32xf32>
    %322 = arith.addf %317, %321 : vector<2x32xf32>
    %323 = vector.broadcast %257 : vector<2x1xf32> to vector<2x32xf32>
    %324 = arith.mulf %315, %323 : vector<2x32xf32>
    %c0_135 = arith.constant 0 : index
    %c3_136 = arith.constant 3 : index
    %c0_137 = arith.constant 0 : index
    %325 = vector.load %arg11[%c0_135, %c3_136, %c0_137] : memref<2x8x32xf32, #tpu.memory_space<vmem>>, vector<2x1x32xf32>
    %326 = vector.shape_cast %325 : vector<2x1x32xf32> to vector<2x32xf32>
    %327 = vector.shape_cast %324 : vector<2x32xf32> to vector<2x1x32xf32>
    tpu.vector_store %arg11[%c0_135, %c3_136, %c0_137], %327 {strides = array<i32>} : memref<2x8x32xf32, #tpu.memory_space<vmem>>, vector<2x1x32xf32>,
    %c0_138 = arith.constant 0 : index
    %c4 = arith.constant 4 : index
    %c0_139 = arith.constant 0 : index
    %328 = vector.load %arg2[%c0_138, %c4, %c0_139] : memref<2x8x32xf32, #tpu.memory_space<vmem>>, vector<2x1x32xf32>
    %329 = vector.shape_cast %328 : vector<2x1x32xf32> to vector<2x32xf32>
    %c0_140 = arith.constant 0 : index
    %c4_141 = arith.constant 4 : index
    %c0_142 = arith.constant 0 : index
    %330 = vector.load %arg3[%c0_140, %c4_141, %c0_142] : memref<2x8x48xf32, #tpu.memory_space<vmem>>, vector<2x1x48xf32>
    %331 = vector.shape_cast %330 : vector<2x1x48xf32> to vector<2x48xf32>
    %c0_143 = arith.constant 0 : index
    %c4_144 = arith.constant 4 : index
    %c0_145 = arith.constant 0 : index
    %332 = vector.load %arg4[%c0_143, %c4_144, %c0_145] : memref<2x8x1xf32, #tpu.memory_space<vmem>>, vector<2x1x1xf32>
    %333 = vector.shape_cast %332 : vector<2x1x1xf32> to vector<2x1xf32>
    %cst_146 = arith.constant dense<0.000000e+00> : vector<2x48xf32>
    %334 = tpu.matmul %315, %5, %cst_146 {dimension_numbers = #tpu.dot_dimension_numbers<[1], [0], [0], [1], [0, 0, 1, 1], [], []>} : vector<2x32xf32>, vector<32x48xf32>, vector<2x48xf32> -> vector<2x48xf32>
    %335 = arith.addf %334, %331 : vector<2x48xf32>
    %cst_147 = arith.constant 0.000000e+00 : f32
    %336 = vector.broadcast %cst_147 : f32 to vector<2x48xf32>
    %337 = arith.maximumf %335, %336 : vector<2x48xf32>
    %cst_148 = arith.constant dense<0.000000e+00> : vector<2x32xf32>
    %338 = tpu.matmul %337, %7, %cst_148 {dimension_numbers = #tpu.dot_dimension_numbers<[1], [0], [0], [1], [0, 0, 1, 1], [], []>} : vector<2x48xf32>, vector<48x32xf32>, vector<2x32xf32> -> vector<2x32xf32>
    %339 = vector.broadcast %15 : vector<1x32xf32> to vector<2x32xf32>
    %340 = arith.addf %338, %339 : vector<2x32xf32>
    %341 = arith.negf %340 : vector<2x32xf32>
    %342 = math.exp %341 : vector<2x32xf32>
    %cst_149 = arith.constant 1.000000e+00 : f32
    %343 = vector.broadcast %cst_149 : f32 to vector<2x32xf32>
    %344 = arith.addf %343, %342 : vector<2x32xf32>
    %345 = arith.divf %343, %344 : vector<2x32xf32>
    %cst_150 = arith.constant dense<0.000000e+00> : vector<2x32xf32>
    %346 = tpu.matmul %337, %9, %cst_150 {dimension_numbers = #tpu.dot_dimension_numbers<[1], [0], [0], [1], [0, 0, 1, 1], [], []>} : vector<2x48xf32>, vector<48x32xf32>, vector<2x32xf32> -> vector<2x32xf32>
    %347 = vector.broadcast %17 : vector<1x32xf32> to vector<2x32xf32>
    %348 = arith.addf %346, %347 : vector<2x32xf32>
    %349 = arith.negf %348 : vector<2x32xf32>
    %350 = math.exp %349 : vector<2x32xf32>
    %cst_151 = arith.constant 1.000000e+00 : f32
    %351 = vector.broadcast %cst_151 : f32 to vector<2x32xf32>
    %352 = arith.addf %351, %350 : vector<2x32xf32>
    %353 = arith.divf %351, %352 : vector<2x32xf32>
    %cst_152 = arith.constant dense<0.000000e+00> : vector<2x32xf32>
    %354 = tpu.matmul %337, %11, %cst_152 {dimension_numbers = #tpu.dot_dimension_numbers<[1], [0], [0], [1], [0, 0, 1, 1], [], []>} : vector<2x48xf32>, vector<48x32xf32>, vector<2x32xf32> -> vector<2x32xf32>
    %355 = vector.broadcast %19 : vector<1x32xf32> to vector<2x32xf32>
    %356 = arith.addf %354, %355 : vector<2x32xf32>
    %357 = arith.negf %356 : vector<2x32xf32>
    %358 = math.exp %357 : vector<2x32xf32>
    %cst_153 = arith.constant 1.000000e+00 : f32
    %359 = vector.broadcast %cst_153 : f32 to vector<2x32xf32>
    %360 = arith.addf %359, %358 : vector<2x32xf32>
    %361 = arith.divf %359, %360 : vector<2x32xf32>
    %cst_154 = arith.constant dense<0.000000e+00> : vector<2x32xf32>
    %362 = tpu.matmul %337, %13, %cst_154 {dimension_numbers = #tpu.dot_dimension_numbers<[1], [0], [0], [1], [0, 0, 1, 1], [], []>} : vector<2x48xf32>, vector<48x32xf32>, vector<2x32xf32> -> vector<2x32xf32>
    %363 = vector.broadcast %21 : vector<1x32xf32> to vector<2x32xf32>
    %364 = arith.addf %362, %363 : vector<2x32xf32>
    %365 = arith.mulf %345, %315 : vector<2x32xf32>
    %366 = arith.mulf %353, %329 : vector<2x32xf32>
    %367 = arith.addf %365, %366 : vector<2x32xf32>
    %368 = arith.mulf %361, %364 : vector<2x32xf32>
    %369 = arith.addf %367, %368 : vector<2x32xf32>
    %cst_155 = arith.constant dense<0.000000e+00> : vector<2xf32>
    %370 = vector.multi_reduction <add>, %369, %cst_155 [1] : vector<2x32xf32> to vector<2xf32>
    %371 = vector.shape_cast %370 : vector<2xf32> to vector<2x1xf32>
    %cst_156 = arith.constant 3.200000e+01 : f32
    %372 = vector.broadcast %cst_156 : f32 to vector<2x1xf32>
    %373 = arith.divf %371, %372 : vector<2x1xf32>
    %374 = vector.broadcast %373 : vector<2x1xf32> to vector<2x32xf32>
    %375 = arith.subf %369, %374 : vector<2x32xf32>
    %376 = arith.mulf %375, %375 : vector<2x32xf32>
    %cst_157 = arith.constant dense<0.000000e+00> : vector<2xf32>
    %377 = vector.multi_reduction <add>, %376, %cst_157 [1] : vector<2x32xf32> to vector<2xf32>
    %378 = vector.shape_cast %377 : vector<2xf32> to vector<2x1xf32>
    %cst_158 = arith.constant 3.200000e+01 : f32
    %379 = vector.broadcast %cst_158 : f32 to vector<2x1xf32>
    %380 = arith.divf %378, %379 : vector<2x1xf32>
    %381 = vector.broadcast %373 : vector<2x1xf32> to vector<2x32xf32>
    %382 = arith.subf %369, %381 : vector<2x32xf32>
    %cst_159 = arith.constant 9.99999974E-6 : f32
    %383 = vector.broadcast %cst_159 : f32 to vector<2x1xf32>
    %384 = arith.addf %380, %383 : vector<2x1xf32>
    %385 = math.rsqrt %384 : vector<2x1xf32>
    %386 = vector.broadcast %385 : vector<2x1xf32> to vector<2x32xf32>
    %387 = arith.mulf %382, %386 : vector<2x32xf32>
    %388 = vector.broadcast %22 : vector<1x32xf32> to vector<2x32xf32>
    %389 = arith.mulf %387, %388 : vector<2x32xf32>
    %390 = vector.broadcast %23 : vector<1x32xf32> to vector<2x32xf32>
    %391 = arith.addf %389, %390 : vector<2x32xf32>
    %392 = vector.broadcast %333 : vector<2x1xf32> to vector<2x32xf32>
    %393 = arith.mulf %392, %391 : vector<2x32xf32>
    %cst_160 = arith.constant 1.000000e+00 : f32
    %394 = vector.broadcast %cst_160 : f32 to vector<2x1xf32>
    %395 = arith.subf %394, %333 : vector<2x1xf32>
    %396 = vector.broadcast %395 : vector<2x1xf32> to vector<2x32xf32>
    %397 = arith.mulf %396, %322 : vector<2x32xf32>
    %398 = arith.addf %393, %397 : vector<2x32xf32>
    %399 = vector.broadcast %333 : vector<2x1xf32> to vector<2x32xf32>
    %400 = arith.mulf %391, %399 : vector<2x32xf32>
    %c0_161 = arith.constant 0 : index
    %c4_162 = arith.constant 4 : index
    %c0_163 = arith.constant 0 : index
    %401 = vector.load %arg11[%c0_161, %c4_162, %c0_163] : memref<2x8x32xf32, #tpu.memory_space<vmem>>, vector<2x1x32xf32>
    %402 = vector.shape_cast %401 : vector<2x1x32xf32> to vector<2x32xf32>
    %403 = vector.shape_cast %400 : vector<2x32xf32> to vector<2x1x32xf32>
    tpu.vector_store %arg11[%c0_161, %c4_162, %c0_163], %403 {strides = array<i32>} : memref<2x8x32xf32, #tpu.memory_space<vmem>>, vector<2x1x32xf32>,
    %c0_164 = arith.constant 0 : index
    %c5 = arith.constant 5 : index
    %c0_165 = arith.constant 0 : index
    %404 = vector.load %arg2[%c0_164, %c5, %c0_165] : memref<2x8x32xf32, #tpu.memory_space<vmem>>, vector<2x1x32xf32>
    %405 = vector.shape_cast %404 : vector<2x1x32xf32> to vector<2x32xf32>
    %c0_166 = arith.constant 0 : index
    %c5_167 = arith.constant 5 : index
    %c0_168 = arith.constant 0 : index
    %406 = vector.load %arg3[%c0_166, %c5_167, %c0_168] : memref<2x8x48xf32, #tpu.memory_space<vmem>>, vector<2x1x48xf32>
    %407 = vector.shape_cast %406 : vector<2x1x48xf32> to vector<2x48xf32>
    %c0_169 = arith.constant 0 : index
    %c5_170 = arith.constant 5 : index
    %c0_171 = arith.constant 0 : index
    %408 = vector.load %arg4[%c0_169, %c5_170, %c0_171] : memref<2x8x1xf32, #tpu.memory_space<vmem>>, vector<2x1x1xf32>
    %409 = vector.shape_cast %408 : vector<2x1x1xf32> to vector<2x1xf32>
    %cst_172 = arith.constant dense<0.000000e+00> : vector<2x48xf32>
    %410 = tpu.matmul %391, %5, %cst_172 {dimension_numbers = #tpu.dot_dimension_numbers<[1], [0], [0], [1], [0, 0, 1, 1], [], []>} : vector<2x32xf32>, vector<32x48xf32>, vector<2x48xf32> -> vector<2x48xf32>
    %411 = arith.addf %410, %407 : vector<2x48xf32>
    %cst_173 = arith.constant 0.000000e+00 : f32
    %412 = vector.broadcast %cst_173 : f32 to vector<2x48xf32>
    %413 = arith.maximumf %411, %412 : vector<2x48xf32>
    %cst_174 = arith.constant dense<0.000000e+00> : vector<2x32xf32>
    %414 = tpu.matmul %413, %7, %cst_174 {dimension_numbers = #tpu.dot_dimension_numbers<[1], [0], [0], [1], [0, 0, 1, 1], [], []>} : vector<2x48xf32>, vector<48x32xf32>, vector<2x32xf32> -> vector<2x32xf32>
    %415 = vector.broadcast %15 : vector<1x32xf32> to vector<2x32xf32>
    %416 = arith.addf %414, %415 : vector<2x32xf32>
    %417 = arith.negf %416 : vector<2x32xf32>
    %418 = math.exp %417 : vector<2x32xf32>
    %cst_175 = arith.constant 1.000000e+00 : f32
    %419 = vector.broadcast %cst_175 : f32 to vector<2x32xf32>
    %420 = arith.addf %419, %418 : vector<2x32xf32>
    %421 = arith.divf %419, %420 : vector<2x32xf32>
    %cst_176 = arith.constant dense<0.000000e+00> : vector<2x32xf32>
    %422 = tpu.matmul %413, %9, %cst_176 {dimension_numbers = #tpu.dot_dimension_numbers<[1], [0], [0], [1], [0, 0, 1, 1], [], []>} : vector<2x48xf32>, vector<48x32xf32>, vector<2x32xf32> -> vector<2x32xf32>
    %423 = vector.broadcast %17 : vector<1x32xf32> to vector<2x32xf32>
    %424 = arith.addf %422, %423 : vector<2x32xf32>
    %425 = arith.negf %424 : vector<2x32xf32>
    %426 = math.exp %425 : vector<2x32xf32>
    %cst_177 = arith.constant 1.000000e+00 : f32
    %427 = vector.broadcast %cst_177 : f32 to vector<2x32xf32>
    %428 = arith.addf %427, %426 : vector<2x32xf32>
    %429 = arith.divf %427, %428 : vector<2x32xf32>
    %cst_178 = arith.constant dense<0.000000e+00> : vector<2x32xf32>
    %430 = tpu.matmul %413, %11, %cst_178 {dimension_numbers = #tpu.dot_dimension_numbers<[1], [0], [0], [1], [0, 0, 1, 1], [], []>} : vector<2x48xf32>, vector<48x32xf32>, vector<2x32xf32> -> vector<2x32xf32>
    %431 = vector.broadcast %19 : vector<1x32xf32> to vector<2x32xf32>
    %432 = arith.addf %430, %431 : vector<2x32xf32>
    %433 = arith.negf %432 : vector<2x32xf32>
    %434 = math.exp %433 : vector<2x32xf32>
    %cst_179 = arith.constant 1.000000e+00 : f32
    %435 = vector.broadcast %cst_179 : f32 to vector<2x32xf32>
    %436 = arith.addf %435, %434 : vector<2x32xf32>
    %437 = arith.divf %435, %436 : vector<2x32xf32>
    %cst_180 = arith.constant dense<0.000000e+00> : vector<2x32xf32>
    %438 = tpu.matmul %413, %13, %cst_180 {dimension_numbers = #tpu.dot_dimension_numbers<[1], [0], [0], [1], [0, 0, 1, 1], [], []>} : vector<2x48xf32>, vector<48x32xf32>, vector<2x32xf32> -> vector<2x32xf32>
    %439 = vector.broadcast %21 : vector<1x32xf32> to vector<2x32xf32>
    %440 = arith.addf %438, %439 : vector<2x32xf32>
    %441 = arith.mulf %421, %391 : vector<2x32xf32>
    %442 = arith.mulf %429, %405 : vector<2x32xf32>
    %443 = arith.addf %441, %442 : vector<2x32xf32>
    %444 = arith.mulf %437, %440 : vector<2x32xf32>
    %445 = arith.addf %443, %444 : vector<2x32xf32>
    %cst_181 = arith.constant dense<0.000000e+00> : vector<2xf32>
    %446 = vector.multi_reduction <add>, %445, %cst_181 [1] : vector<2x32xf32> to vector<2xf32>
    %447 = vector.shape_cast %446 : vector<2xf32> to vector<2x1xf32>
    %cst_182 = arith.constant 3.200000e+01 : f32
    %448 = vector.broadcast %cst_182 : f32 to vector<2x1xf32>
    %449 = arith.divf %447, %448 : vector<2x1xf32>
    %450 = vector.broadcast %449 : vector<2x1xf32> to vector<2x32xf32>
    %451 = arith.subf %445, %450 : vector<2x32xf32>
    %452 = arith.mulf %451, %451 : vector<2x32xf32>
    %cst_183 = arith.constant dense<0.000000e+00> : vector<2xf32>
    %453 = vector.multi_reduction <add>, %452, %cst_183 [1] : vector<2x32xf32> to vector<2xf32>
    %454 = vector.shape_cast %453 : vector<2xf32> to vector<2x1xf32>
    %cst_184 = arith.constant 3.200000e+01 : f32
    %455 = vector.broadcast %cst_184 : f32 to vector<2x1xf32>
    %456 = arith.divf %454, %455 : vector<2x1xf32>
    %457 = vector.broadcast %449 : vector<2x1xf32> to vector<2x32xf32>
    %458 = arith.subf %445, %457 : vector<2x32xf32>
    %cst_185 = arith.constant 9.99999974E-6 : f32
    %459 = vector.broadcast %cst_185 : f32 to vector<2x1xf32>
    %460 = arith.addf %456, %459 : vector<2x1xf32>
    %461 = math.rsqrt %460 : vector<2x1xf32>
    %462 = vector.broadcast %461 : vector<2x1xf32> to vector<2x32xf32>
    %463 = arith.mulf %458, %462 : vector<2x32xf32>
    %464 = vector.broadcast %22 : vector<1x32xf32> to vector<2x32xf32>
    %465 = arith.mulf %463, %464 : vector<2x32xf32>
    %466 = vector.broadcast %23 : vector<1x32xf32> to vector<2x32xf32>
    %467 = arith.addf %465, %466 : vector<2x32xf32>
    %468 = vector.broadcast %409 : vector<2x1xf32> to vector<2x32xf32>
    %469 = arith.mulf %468, %467 : vector<2x32xf32>
    %cst_186 = arith.constant 1.000000e+00 : f32
    %470 = vector.broadcast %cst_186 : f32 to vector<2x1xf32>
    %471 = arith.subf %470, %409 : vector<2x1xf32>
    %472 = vector.broadcast %471 : vector<2x1xf32> to vector<2x32xf32>
    %473 = arith.mulf %472, %398 : vector<2x32xf32>
    %474 = arith.addf %469, %473 : vector<2x32xf32>
    %475 = vector.broadcast %409 : vector<2x1xf32> to vector<2x32xf32>
    %476 = arith.mulf %467, %475 : vector<2x32xf32>
    %c0_187 = arith.constant 0 : index
    %c5_188 = arith.constant 5 : index
    %c0_189 = arith.constant 0 : index
    %477 = vector.load %arg11[%c0_187, %c5_188, %c0_189] : memref<2x8x32xf32, #tpu.memory_space<vmem>>, vector<2x1x32xf32>
    %478 = vector.shape_cast %477 : vector<2x1x32xf32> to vector<2x32xf32>
    %479 = vector.shape_cast %476 : vector<2x32xf32> to vector<2x1x32xf32>
    tpu.vector_store %arg11[%c0_187, %c5_188, %c0_189], %479 {strides = array<i32>} : memref<2x8x32xf32, #tpu.memory_space<vmem>>, vector<2x1x32xf32>,
    %c0_190 = arith.constant 0 : index
    %c6 = arith.constant 6 : index
    %c0_191 = arith.constant 0 : index
    %480 = vector.load %arg2[%c0_190, %c6, %c0_191] : memref<2x8x32xf32, #tpu.memory_space<vmem>>, vector<2x1x32xf32>
    %481 = vector.shape_cast %480 : vector<2x1x32xf32> to vector<2x32xf32>
    %c0_192 = arith.constant 0 : index
    %c6_193 = arith.constant 6 : index
    %c0_194 = arith.constant 0 : index
    %482 = vector.load %arg3[%c0_192, %c6_193, %c0_194] : memref<2x8x48xf32, #tpu.memory_space<vmem>>, vector<2x1x48xf32>
    %483 = vector.shape_cast %482 : vector<2x1x48xf32> to vector<2x48xf32>
    %c0_195 = arith.constant 0 : index
    %c6_196 = arith.constant 6 : index
    %c0_197 = arith.constant 0 : index
    %484 = vector.load %arg4[%c0_195, %c6_196, %c0_197] : memref<2x8x1xf32, #tpu.memory_space<vmem>>, vector<2x1x1xf32>
    %485 = vector.shape_cast %484 : vector<2x1x1xf32> to vector<2x1xf32>
    %cst_198 = arith.constant dense<0.000000e+00> : vector<2x48xf32>
    %486 = tpu.matmul %467, %5, %cst_198 {dimension_numbers = #tpu.dot_dimension_numbers<[1], [0], [0], [1], [0, 0, 1, 1], [], []>} : vector<2x32xf32>, vector<32x48xf32>, vector<2x48xf32> -> vector<2x48xf32>
    %487 = arith.addf %486, %483 : vector<2x48xf32>
    %cst_199 = arith.constant 0.000000e+00 : f32
    %488 = vector.broadcast %cst_199 : f32 to vector<2x48xf32>
    %489 = arith.maximumf %487, %488 : vector<2x48xf32>
    %cst_200 = arith.constant dense<0.000000e+00> : vector<2x32xf32>
    %490 = tpu.matmul %489, %7, %cst_200 {dimension_numbers = #tpu.dot_dimension_numbers<[1], [0], [0], [1], [0, 0, 1, 1], [], []>} : vector<2x48xf32>, vector<48x32xf32>, vector<2x32xf32> -> vector<2x32xf32>
    %491 = vector.broadcast %15 : vector<1x32xf32> to vector<2x32xf32>
    %492 = arith.addf %490, %491 : vector<2x32xf32>
    %493 = arith.negf %492 : vector<2x32xf32>
    %494 = math.exp %493 : vector<2x32xf32>
    %cst_201 = arith.constant 1.000000e+00 : f32
    %495 = vector.broadcast %cst_201 : f32 to vector<2x32xf32>
    %496 = arith.addf %495, %494 : vector<2x32xf32>
    %497 = arith.divf %495, %496 : vector<2x32xf32>
    %cst_202 = arith.constant dense<0.000000e+00> : vector<2x32xf32>
    %498 = tpu.matmul %489, %9, %cst_202 {dimension_numbers = #tpu.dot_dimension_numbers<[1], [0], [0], [1], [0, 0, 1, 1], [], []>} : vector<2x48xf32>, vector<48x32xf32>, vector<2x32xf32> -> vector<2x32xf32>
    %499 = vector.broadcast %17 : vector<1x32xf32> to vector<2x32xf32>
    %500 = arith.addf %498, %499 : vector<2x32xf32>
    %501 = arith.negf %500 : vector<2x32xf32>
    %502 = math.exp %501 : vector<2x32xf32>
    %cst_203 = arith.constant 1.000000e+00 : f32
    %503 = vector.broadcast %cst_203 : f32 to vector<2x32xf32>
    %504 = arith.addf %503, %502 : vector<2x32xf32>
    %505 = arith.divf %503, %504 : vector<2x32xf32>
    %cst_204 = arith.constant dense<0.000000e+00> : vector<2x32xf32>
    %506 = tpu.matmul %489, %11, %cst_204 {dimension_numbers = #tpu.dot_dimension_numbers<[1], [0], [0], [1], [0, 0, 1, 1], [], []>} : vector<2x48xf32>, vector<48x32xf32>, vector<2x32xf32> -> vector<2x32xf32>
    %507 = vector.broadcast %19 : vector<1x32xf32> to vector<2x32xf32>
    %508 = arith.addf %506, %507 : vector<2x32xf32>
    %509 = arith.negf %508 : vector<2x32xf32>
    %510 = math.exp %509 : vector<2x32xf32>
    %cst_205 = arith.constant 1.000000e+00 : f32
    %511 = vector.broadcast %cst_205 : f32 to vector<2x32xf32>
    %512 = arith.addf %511, %510 : vector<2x32xf32>
    %513 = arith.divf %511, %512 : vector<2x32xf32>
    %cst_206 = arith.constant dense<0.000000e+00> : vector<2x32xf32>
    %514 = tpu.matmul %489, %13, %cst_206 {dimension_numbers = #tpu.dot_dimension_numbers<[1], [0], [0], [1], [0, 0, 1, 1], [], []>} : vector<2x48xf32>, vector<48x32xf32>, vector<2x32xf32> -> vector<2x32xf32>
    %515 = vector.broadcast %21 : vector<1x32xf32> to vector<2x32xf32>
    %516 = arith.addf %514, %515 : vector<2x32xf32>
    %517 = arith.mulf %497, %467 : vector<2x32xf32>
    %518 = arith.mulf %505, %481 : vector<2x32xf32>
    %519 = arith.addf %517, %518 : vector<2x32xf32>
    %520 = arith.mulf %513, %516 : vector<2x32xf32>
    %521 = arith.addf %519, %520 : vector<2x32xf32>
    %cst_207 = arith.constant dense<0.000000e+00> : vector<2xf32>
    %522 = vector.multi_reduction <add>, %521, %cst_207 [1] : vector<2x32xf32> to vector<2xf32>
    %523 = vector.shape_cast %522 : vector<2xf32> to vector<2x1xf32>
    %cst_208 = arith.constant 3.200000e+01 : f32
    %524 = vector.broadcast %cst_208 : f32 to vector<2x1xf32>
    %525 = arith.divf %523, %524 : vector<2x1xf32>
    %526 = vector.broadcast %525 : vector<2x1xf32> to vector<2x32xf32>
    %527 = arith.subf %521, %526 : vector<2x32xf32>
    %528 = arith.mulf %527, %527 : vector<2x32xf32>
    %cst_209 = arith.constant dense<0.000000e+00> : vector<2xf32>
    %529 = vector.multi_reduction <add>, %528, %cst_209 [1] : vector<2x32xf32> to vector<2xf32>
    %530 = vector.shape_cast %529 : vector<2xf32> to vector<2x1xf32>
    %cst_210 = arith.constant 3.200000e+01 : f32
    %531 = vector.broadcast %cst_210 : f32 to vector<2x1xf32>
    %532 = arith.divf %530, %531 : vector<2x1xf32>
    %533 = vector.broadcast %525 : vector<2x1xf32> to vector<2x32xf32>
    %534 = arith.subf %521, %533 : vector<2x32xf32>
    %cst_211 = arith.constant 9.99999974E-6 : f32
    %535 = vector.broadcast %cst_211 : f32 to vector<2x1xf32>
    %536 = arith.addf %532, %535 : vector<2x1xf32>
    %537 = math.rsqrt %536 : vector<2x1xf32>
    %538 = vector.broadcast %537 : vector<2x1xf32> to vector<2x32xf32>
    %539 = arith.mulf %534, %538 : vector<2x32xf32>
    %540 = vector.broadcast %22 : vector<1x32xf32> to vector<2x32xf32>
    %541 = arith.mulf %539, %540 : vector<2x32xf32>
    %542 = vector.broadcast %23 : vector<1x32xf32> to vector<2x32xf32>
    %543 = arith.addf %541, %542 : vector<2x32xf32>
    %544 = vector.broadcast %485 : vector<2x1xf32> to vector<2x32xf32>
    %545 = arith.mulf %544, %543 : vector<2x32xf32>
    %cst_212 = arith.constant 1.000000e+00 : f32
    %546 = vector.broadcast %cst_212 : f32 to vector<2x1xf32>
    %547 = arith.subf %546, %485 : vector<2x1xf32>
    %548 = vector.broadcast %547 : vector<2x1xf32> to vector<2x32xf32>
    %549 = arith.mulf %548, %474 : vector<2x32xf32>
    %550 = arith.addf %545, %549 : vector<2x32xf32>
    %551 = vector.broadcast %485 : vector<2x1xf32> to vector<2x32xf32>
    %552 = arith.mulf %543, %551 : vector<2x32xf32>
    %c0_213 = arith.constant 0 : index
    %c6_214 = arith.constant 6 : index
    %c0_215 = arith.constant 0 : index
    %553 = vector.load %arg11[%c0_213, %c6_214, %c0_215] : memref<2x8x32xf32, #tpu.memory_space<vmem>>, vector<2x1x32xf32>
    %554 = vector.shape_cast %553 : vector<2x1x32xf32> to vector<2x32xf32>
    %555 = vector.shape_cast %552 : vector<2x32xf32> to vector<2x1x32xf32>
    tpu.vector_store %arg11[%c0_213, %c6_214, %c0_215], %555 {strides = array<i32>} : memref<2x8x32xf32, #tpu.memory_space<vmem>>, vector<2x1x32xf32>,
    %c0_216 = arith.constant 0 : index
    %c7 = arith.constant 7 : index
    %c0_217 = arith.constant 0 : index
    %556 = vector.load %arg2[%c0_216, %c7, %c0_217] : memref<2x8x32xf32, #tpu.memory_space<vmem>>, vector<2x1x32xf32>
    %557 = vector.shape_cast %556 : vector<2x1x32xf32> to vector<2x32xf32>
    %c0_218 = arith.constant 0 : index
    %c7_219 = arith.constant 7 : index
    %c0_220 = arith.constant 0 : index
    %558 = vector.load %arg3[%c0_218, %c7_219, %c0_220] : memref<2x8x48xf32, #tpu.memory_space<vmem>>, vector<2x1x48xf32>
    %559 = vector.shape_cast %558 : vector<2x1x48xf32> to vector<2x48xf32>
    %c0_221 = arith.constant 0 : index
    %c7_222 = arith.constant 7 : index
    %c0_223 = arith.constant 0 : index
    %560 = vector.load %arg4[%c0_221, %c7_222, %c0_223] : memref<2x8x1xf32, #tpu.memory_space<vmem>>, vector<2x1x1xf32>
    %561 = vector.shape_cast %560 : vector<2x1x1xf32> to vector<2x1xf32>
    %cst_224 = arith.constant dense<0.000000e+00> : vector<2x48xf32>
    %562 = tpu.matmul %543, %5, %cst_224 {dimension_numbers = #tpu.dot_dimension_numbers<[1], [0], [0], [1], [0, 0, 1, 1], [], []>} : vector<2x32xf32>, vector<32x48xf32>, vector<2x48xf32> -> vector<2x48xf32>
    %563 = arith.addf %562, %559 : vector<2x48xf32>
    %cst_225 = arith.constant 0.000000e+00 : f32
    %564 = vector.broadcast %cst_225 : f32 to vector<2x48xf32>
    %565 = arith.maximumf %563, %564 : vector<2x48xf32>
    %cst_226 = arith.constant dense<0.000000e+00> : vector<2x32xf32>
    %566 = tpu.matmul %565, %7, %cst_226 {dimension_numbers = #tpu.dot_dimension_numbers<[1], [0], [0], [1], [0, 0, 1, 1], [], []>} : vector<2x48xf32>, vector<48x32xf32>, vector<2x32xf32> -> vector<2x32xf32>
    %567 = vector.broadcast %15 : vector<1x32xf32> to vector<2x32xf32>
    %568 = arith.addf %566, %567 : vector<2x32xf32>
    %569 = arith.negf %568 : vector<2x32xf32>
    %570 = math.exp %569 : vector<2x32xf32>
    %cst_227 = arith.constant 1.000000e+00 : f32
    %571 = vector.broadcast %cst_227 : f32 to vector<2x32xf32>
    %572 = arith.addf %571, %570 : vector<2x32xf32>
    %573 = arith.divf %571, %572 : vector<2x32xf32>
    %cst_228 = arith.constant dense<0.000000e+00> : vector<2x32xf32>
    %574 = tpu.matmul %565, %9, %cst_228 {dimension_numbers = #tpu.dot_dimension_numbers<[1], [0], [0], [1], [0, 0, 1, 1], [], []>} : vector<2x48xf32>, vector<48x32xf32>, vector<2x32xf32> -> vector<2x32xf32>
    %575 = vector.broadcast %17 : vector<1x32xf32> to vector<2x32xf32>
    %576 = arith.addf %574, %575 : vector<2x32xf32>
    %577 = arith.negf %576 : vector<2x32xf32>
    %578 = math.exp %577 : vector<2x32xf32>
    %cst_229 = arith.constant 1.000000e+00 : f32
    %579 = vector.broadcast %cst_229 : f32 to vector<2x32xf32>
    %580 = arith.addf %579, %578 : vector<2x32xf32>
    %581 = arith.divf %579, %580 : vector<2x32xf32>
    %cst_230 = arith.constant dense<0.000000e+00> : vector<2x32xf32>
    %582 = tpu.matmul %565, %11, %cst_230 {dimension_numbers = #tpu.dot_dimension_numbers<[1], [0], [0], [1], [0, 0, 1, 1], [], []>} : vector<2x48xf32>, vector<48x32xf32>, vector<2x32xf32> -> vector<2x32xf32>
    %583 = vector.broadcast %19 : vector<1x32xf32> to vector<2x32xf32>
    %584 = arith.addf %582, %583 : vector<2x32xf32>
    %585 = arith.negf %584 : vector<2x32xf32>
    %586 = math.exp %585 : vector<2x32xf32>
    %cst_231 = arith.constant 1.000000e+00 : f32
    %587 = vector.broadcast %cst_231 : f32 to vector<2x32xf32>
    %588 = arith.addf %587, %586 : vector<2x32xf32>
    %589 = arith.divf %587, %588 : vector<2x32xf32>
    %cst_232 = arith.constant dense<0.000000e+00> : vector<2x32xf32>
    %590 = tpu.matmul %565, %13, %cst_232 {dimension_numbers = #tpu.dot_dimension_numbers<[1], [0], [0], [1], [0, 0, 1, 1], [], []>} : vector<2x48xf32>, vector<48x32xf32>, vector<2x32xf32> -> vector<2x32xf32>
    %591 = vector.broadcast %21 : vector<1x32xf32> to vector<2x32xf32>
    %592 = arith.addf %590, %591 : vector<2x32xf32>
    %593 = arith.mulf %573, %543 : vector<2x32xf32>
    %594 = arith.mulf %581, %557 : vector<2x32xf32>
    %595 = arith.addf %593, %594 : vector<2x32xf32>
    %596 = arith.mulf %589, %592 : vector<2x32xf32>
    %597 = arith.addf %595, %596 : vector<2x32xf32>
    %cst_233 = arith.constant dense<0.000000e+00> : vector<2xf32>
    %598 = vector.multi_reduction <add>, %597, %cst_233 [1] : vector<2x32xf32> to vector<2xf32>
    %599 = vector.shape_cast %598 : vector<2xf32> to vector<2x1xf32>
    %cst_234 = arith.constant 3.200000e+01 : f32
    %600 = vector.broadcast %cst_234 : f32 to vector<2x1xf32>
    %601 = arith.divf %599, %600 : vector<2x1xf32>
    %602 = vector.broadcast %601 : vector<2x1xf32> to vector<2x32xf32>
    %603 = arith.subf %597, %602 : vector<2x32xf32>
    %604 = arith.mulf %603, %603 : vector<2x32xf32>
    %cst_235 = arith.constant dense<0.000000e+00> : vector<2xf32>
    %605 = vector.multi_reduction <add>, %604, %cst_235 [1] : vector<2x32xf32> to vector<2xf32>
    %606 = vector.shape_cast %605 : vector<2xf32> to vector<2x1xf32>
    %cst_236 = arith.constant 3.200000e+01 : f32
    %607 = vector.broadcast %cst_236 : f32 to vector<2x1xf32>
    %608 = arith.divf %606, %607 : vector<2x1xf32>
    %609 = vector.broadcast %601 : vector<2x1xf32> to vector<2x32xf32>
    %610 = arith.subf %597, %609 : vector<2x32xf32>
    %cst_237 = arith.constant 9.99999974E-6 : f32
    %611 = vector.broadcast %cst_237 : f32 to vector<2x1xf32>
    %612 = arith.addf %608, %611 : vector<2x1xf32>
    %613 = math.rsqrt %612 : vector<2x1xf32>
    %614 = vector.broadcast %613 : vector<2x1xf32> to vector<2x32xf32>
    %615 = arith.mulf %610, %614 : vector<2x32xf32>
    %616 = vector.broadcast %22 : vector<1x32xf32> to vector<2x32xf32>
    %617 = arith.mulf %615, %616 : vector<2x32xf32>
    %618 = vector.broadcast %23 : vector<1x32xf32> to vector<2x32xf32>
    %619 = arith.addf %617, %618 : vector<2x32xf32>
    %620 = vector.broadcast %561 : vector<2x1xf32> to vector<2x32xf32>
    %621 = arith.mulf %620, %619 : vector<2x32xf32>
    %cst_238 = arith.constant 1.000000e+00 : f32
    %622 = vector.broadcast %cst_238 : f32 to vector<2x1xf32>
    %623 = arith.subf %622, %561 : vector<2x1xf32>
    %624 = vector.broadcast %623 : vector<2x1xf32> to vector<2x32xf32>
    %625 = arith.mulf %624, %550 : vector<2x32xf32>
    %626 = arith.addf %621, %625 : vector<2x32xf32>
    %627 = vector.broadcast %561 : vector<2x1xf32> to vector<2x32xf32>
    %628 = arith.mulf %619, %627 : vector<2x32xf32>
    %c0_239 = arith.constant 0 : index
    %c7_240 = arith.constant 7 : index
    %c0_241 = arith.constant 0 : index
    %629 = vector.load %arg11[%c0_239, %c7_240, %c0_241] : memref<2x8x32xf32, #tpu.memory_space<vmem>>, vector<2x1x32xf32>
    %630 = vector.shape_cast %629 : vector<2x1x32xf32> to vector<2x32xf32>
    %631 = vector.shape_cast %628 : vector<2x32xf32> to vector<2x1x32xf32>
    tpu.vector_store %arg11[%c0_239, %c7_240, %c0_241], %631 {strides = array<i32>} : memref<2x8x32xf32, #tpu.memory_space<vmem>>, vector<2x1x32xf32>,
    %c0_242 = arith.constant 0 : index
    %c0_243 = arith.constant 0 : index
    %632 = vector.load %arg13[%c0_242, %c0_243] : memref<2x32xf32, #tpu.memory_space<vmem>>, vector<2x32xf32>
    tpu.vector_store %arg13[%c0_242, %c0_243], %619 {strides = array<i32>} : memref<2x32xf32, #tpu.memory_space<vmem>>, vector<2x32xf32>,
    %c0_244 = arith.constant 0 : index
    %c0_245 = arith.constant 0 : index
    %633 = vector.load %arg14[%c0_244, %c0_245] : memref<2x32xf32, #tpu.memory_space<vmem>>, vector<2x32xf32>
    tpu.vector_store %arg14[%c0_244, %c0_245], %626 {strides = array<i32>} : memref<2x32xf32, #tpu.memory_space<vmem>>, vector<2x32xf32>,
    %c0_i32_246 = arith.constant 0 : i32
    %634 = arith.cmpi eq, %arg1, %c0_i32_246 : i32
    %635 = arith.extui %634 : i1 to i32
    %c0_i32_247 = arith.constant 0 : i32
    %636 = arith.cmpi ne, %635, %c0_i32_247 : i32
    scf.if %636 {
      %c0_248 = arith.constant 0 : index
      %c0_249 = arith.constant 0 : index
      %637 = vector.load %arg12[%c0_248, %c0_249] : memref<2x32xf32, #tpu.memory_space<vmem>>, vector<2x32xf32>
      tpu.vector_store %arg12[%c0_248, %c0_249], %626 {strides = array<i32>} : memref<2x32xf32, #tpu.memory_space<vmem>>, vector<2x32xf32>,
    } else {
    }
    return
  }
  func.func @transform_0(%arg0: i32, %arg1: i32) -> (i32, i32, i32) {
    %c0_i32 = arith.constant 0 : i32
    %c0_i32_0 = arith.constant 0 : i32
    return %arg0, %arg1, %c0_i32 : i32, i32, i32
  }
  func.func @transform_1(%arg0: i32, %arg1: i32) -> (i32, i32, i32) {
    %c0_i32 = arith.constant 0 : i32
    %c0_i32_0 = arith.constant 0 : i32
    return %arg0, %arg1, %c0_i32 : i32, i32, i32
  }
  func.func @transform_2(%arg0: i32, %arg1: i32) -> (i32, i32, i32) {
    %c0_i32 = arith.constant 0 : i32
    %c0_i32_0 = arith.constant 0 : i32
    return %arg0, %arg1, %c0_i32 : i32, i32, i32
  }
  func.func @transform_3(%arg0: i32, %arg1: i32) -> (i32, i32) {
    %c0_i32 = arith.constant 0 : i32
    %c0_i32_0 = arith.constant 0 : i32
    %c0_i32_1 = arith.constant 0 : i32
    return %c0_i32, %c0_i32_0 : i32, i32
  }
  func.func @transform_4(%arg0: i32, %arg1: i32) -> (i32, i32) {
    %c0_i32 = arith.constant 0 : i32
    %c0_i32_0 = arith.constant 0 : i32
    %c0_i32_1 = arith.constant 0 : i32
    return %c0_i32, %c0_i32_0 : i32, i32
  }
  func.func @transform_5(%arg0: i32, %arg1: i32) -> (i32, i32, i32) {
    %c0_i32 = arith.constant 0 : i32
    %c0_i32_0 = arith.constant 0 : i32
    %c0_i32_1 = arith.constant 0 : i32
    %c0_i32_2 = arith.constant 0 : i32
    return %c0_i32, %c0_i32_0, %c0_i32_1 : i32, i32, i32
  }
  func.func @transform_6(%arg0: i32, %arg1: i32) -> (i32, i32, i32) {
    %c0_i32 = arith.constant 0 : i32
    %c0_i32_0 = arith.constant 0 : i32
    %c0_i32_1 = arith.constant 0 : i32
    %c0_i32_2 = arith.constant 0 : i32
    return %c0_i32, %c0_i32_0, %c0_i32_1 : i32, i32, i32
  }
  func.func @transform_7(%arg0: i32, %arg1: i32) -> (i32, i32) {
    %c0_i32 = arith.constant 0 : i32
    %c0_i32_0 = arith.constant 0 : i32
    %c0_i32_1 = arith.constant 0 : i32
    return %c0_i32, %c0_i32_0 : i32, i32
  }
  func.func @transform_8(%arg0: i32, %arg1: i32) -> (i32, i32) {
    %c0_i32 = arith.constant 0 : i32
    %c0_i32_0 = arith.constant 0 : i32
    %c0_i32_1 = arith.constant 0 : i32
    return %c0_i32, %c0_i32_0 : i32, i32
  }
  func.func @transform_9(%arg0: i32, %arg1: i32) -> (i32, i32, i32) {
    %c0_i32 = arith.constant 0 : i32
    %c0_i32_0 = arith.constant 0 : i32
    return %arg0, %arg1, %c0_i32 : i32, i32, i32
  }
  func.func @transform_10(%arg0: i32, %arg1: i32) -> (i32, i32) {
    %c0_i32 = arith.constant 0 : i32
    %c0_i32_0 = arith.constant 0 : i32
    return %arg0, %c0_i32 : i32, i32
  }
}

</mosaic_0001>

<llo_original>
// kernel: lr_crvnn_forward.2
$region0: #{lr_crvnn_forward.2}
  #allocation0 [shape = 'u32[]', space=smem, size = 0x4, offset = 0x4, fixed_abs, tag = 'smem constant byte address 0x4 - core index']
  #allocation1 [shape = 'u32[144,128]{1,0:T(1,128)}', space=vmem, size = 0x12000, scoped, tag = 'internal scratch']
  %s0 = inlined_call_operand.vmem [shape: f32[16,32], index: 0, kind: input, shape index: {}]
  %s1 = inlined_call_operand.vmem [shape: f32[16,1], index: 1, kind: input, shape index: {}]
  %s2 = inlined_call_operand.vmem [shape: f32[32,32], index: 2, kind: input, shape index: {}]
  %s3 = inlined_call_operand.vmem [shape: f32[1,32], index: 3, kind: input, shape index: {}]
  %s4 = inlined_call_operand.vmem [shape: f32[1,32], index: 4, kind: input, shape index: {}]
  %s5 = inlined_call_operand.vmem [shape: f32[1,32], index: 5, kind: input, shape index: {}]
  %s6 = inlined_call_operand.vmem [shape: f32[32,48], index: 6, kind: input, shape index: {}]
  %s7 = inlined_call_operand.vmem [shape: f32[1,48], index: 7, kind: input, shape index: {}]
  %s8 = inlined_call_operand.vmem [shape: f32[16,32], index: 8, kind: output, shape index: {0}]
  %s9 = inlined_call_operand.vmem [shape: f32[16,48], index: 9, kind: output, shape index: {1}]
  %10 = xla_tuple %s8, %s9
  %s11 = sld [smem:[#allocation0]]
  $region50: #{lr_crvnn_forward.2} parent=0
    _
  %s13 = ssub.s32 1, %s11
  %s14 = scalar_select 0, %s13, %s11
  // Predicated region
  $region2: #{lr_crvnn_forward.2} parent=0 // pred_check
    _
  $region3: #{lr_crvnn_forward.2} parent=0 // pred_check_branch
    %16 = sbr.rel (0) target = $region5
  $region4: #{lr_crvnn_forward.2} parent=0 // pred_region
    _
  $region5: #{lr_crvnn_forward.2} parent=0 // pred_fallthru
    _
  // Predicated region
  $region6: #{lr_crvnn_forward.2} parent=0 // pred_check
    _
  $region7: #{lr_crvnn_forward.2} parent=0 // pred_check_branch
    %18 = sbr.rel (0) target = $region9
  $region8: #{lr_crvnn_forward.2} parent=0 // pred_region
    _
  $region9: #{lr_crvnn_forward.2} parent=0 // pred_fallthru
    _
  // Predicated region
  $region10: #{lr_crvnn_forward.2} parent=0 // pred_check
    _
  $region11: #{lr_crvnn_forward.2} parent=0 // pred_check_branch
    %20 = sbr.rel (0) target = $region13
  $region12: #{lr_crvnn_forward.2} parent=0 // pred_region
    _
  $region13: #{lr_crvnn_forward.2} parent=0 // pred_fallthru
    _
  // Predicated region
  $region14: #{lr_crvnn_forward.2} parent=0 // pred_check
    _
  $region15: #{lr_crvnn_forward.2} parent=0 // pred_check_branch
    %22 = sbr.rel (0) target = $region17
  $region16: #{lr_crvnn_forward.2} parent=0 // pred_region
    _
  $region17: #{lr_crvnn_forward.2} parent=0 // pred_fallthru
    _
  // Predicated region
  $region18: #{lr_crvnn_forward.2} parent=0 // pred_check
    _
  $region19: #{lr_crvnn_forward.2} parent=0 // pred_check_branch
    %24 = sbr.rel (0) target = $region21
  $region20: #{lr_crvnn_forward.2} parent=0 // pred_region
    _
  $region21: #{lr_crvnn_forward.2} parent=0 // pred_fallthru
    _
  // Predicated region
  $region22: #{lr_crvnn_forward.2} parent=0 // pred_check
    _
  $region23: #{lr_crvnn_forward.2} parent=0 // pred_check_branch
    %26 = sbr.rel (0) target = $region25
  $region24: #{lr_crvnn_forward.2} parent=0 // pred_region
    _
  $region25: #{lr_crvnn_forward.2} parent=0 // pred_fallthru
    _
  // Predicated region
  $region26: #{lr_crvnn_forward.2} parent=0 // pred_check
    _
  $region27: #{lr_crvnn_forward.2} parent=0 // pred_check_branch
    %28 = sbr.rel (0) target = $region29
  $region28: #{lr_crvnn_forward.2} parent=0 // pred_region
    _
  $region29: #{lr_crvnn_forward.2} parent=0 // pred_fallthru
    _
  // Predicated region
  $region30: #{lr_crvnn_forward.2} parent=0 // pred_check
    _
  $region31: #{lr_crvnn_forward.2} parent=0 // pred_check_branch
    %30 = sbr.rel (0) target = $region33
  $region32: #{lr_crvnn_forward.2} parent=0 // pred_region
    _
  $region33: #{lr_crvnn_forward.2} parent=0 // pred_fallthru
    _
  %v31 = vld [vmem:[%s1] sm:$0xff]
  %v32 = vld [vmem:[%s1 + $0x8] sm:$0xff]
  %v33 = vld [vmem:[%s0] sm:$0xff]
  %v34 = vld [vmem:[%s0 + $0x8] sm:$0xff]
  %36 = vset.pattern.permute.xlu0 0
  %37 = vperm.xlu0 %36, %v31
  %v38 = vpop.permute.xlu0 %37
  %41 = vset.pattern.permute.xlu0 0
  %42 = vperm.xlu0 %41, %v32
  %v43 = vpop.permute.xlu0 %42
  %v45 = vmul.f32 %v33, %v38
  %v46 = vmul.f32 %v34, %v43
  %v47 = vld [vmem:[%s2] sm:$0xff]
  %v48 = vld [vmem:[%s2 + $0x8] sm:$0xff]
  %v49 = vld [vmem:[%s2 + $0x10] sm:$0xff]
  %v50 = vld [vmem:[%s2 + $0x18] sm:$0xff]
  %v51 = vld [vmem:[%s3] sm:$0x1]
  %v53 = vlaneseq
  %v54 = vshrl.u32 %v53, 7
  %v55 = vsub.s32 0, %v54
  %v56 = vrot.slane %v51, %v55
  %vm58 = vcmask 261120
  %v60 = vsel %vm58, %v45, 0
  %v63 = vsel %vm58, %v46, 0
  %65 = vmatprep.subr.mxu0 0.0
  %66 = vmatpush1.msra.mxu0 0.0
  %67 = vmatprep.subr.mxu0 0.0
  %68 = vmatpush1.msra.mxu0 0.0
  %69 = vmatprep.subr.mxu0 0.0
  %70 = vmatpush1.msra.mxu0 0.0
  %71 = vmatprep.subr.mxu0 0.0
  %72 = vmatpush1.msra.mxu0 0.0
  %73 = vmatprep.subr.mxu0 0.0
  %74 = vmatpush1.msra.mxu0 0.0
  %75 = vmatprep.subr.mxu0 0.0
  %76 = vmatpush1.msra.mxu0 0.0
  %77 = vmatprep.subr.mxu0 0.0
  %78 = vmatpush1.msra.mxu0 0.0
  %79 = vmatprep.subr.mxu0 0.0
  %80 = vmatpush1.msra.mxu0 0.0
  %81 = vmatprep.subr.mxu0 0.0
  %82 = vmatpush1.msra.mxu0 0.0
  %83 = vmatprep.subr.mxu0 0.0
  %84 = vmatpush1.msra.mxu0 0.0
  %85 = vmatprep.subr.mxu0 0.0
  %86 = vmatpush1.msra.mxu0 0.0
  %87 = vmatprep.subr.mxu0 0.0
  %88 = vmatpush1.msra.mxu0 0.0
  %89 = vmatprep.subr.mxu0 0.0
  %90 = vmatpush1.msra.mxu0 %v50
  %91 = vmatprep.subr.mxu0 0.0
  %92 = vmatpush1.msra.mxu0 %v49
  %93 = vmatprep.subr.mxu0 0.0
  %94 = vmatpush1.msra.mxu0 %v48
  %95 = vmatprep.subr.mxu0 0.0
  %96 = vmatpush1.msra.mxu0 %v47
  %97 = vmatprep.subr.mxu0 0.0
  %98 = vmatpush2.msra.mxu0 0.0
  %99 = vmatprep.subr.mxu0 0.0
  %100 = vmatpush2.msra.mxu0 0.0
  %101 = vmatprep.subr.mxu0 0.0
  %102 = vmatpush2.msra.mxu0 0.0
  %103 = vmatprep.subr.mxu0 0.0
  %104 = vmatpush2.msra.mxu0 0.0
  %105 = vmatprep.subr.mxu0 0.0
  %106 = vmatpush2.msra.mxu0 0.0
  %107 = vmatprep.subr.mxu0 0.0
  %108 = vmatpush2.msra.mxu0 0.0
  %109 = vmatprep.subr.mxu0 0.0
  %110 = vmatpush2.msra.mxu0 0.0
  %111 = vmatprep.subr.mxu0 0.0
  %112 = vmatpush2.msra.mxu0 0.0
  %113 = vmatprep.subr.mxu0 0.0
  %114 = vmatpush2.msra.mxu0 0.0
  %115 = vmatprep.subr.mxu0 0.0
  %116 = vmatpush2.msra.mxu0 0.0
  %117 = vmatprep.subr.mxu0 0.0
  %118 = vmatpush2.msra.mxu0 0.0
  %119 = vmatprep.subr.mxu0 0.0
  %120 = vmatpush2.msra.mxu0 0.0
  %121 = vmatprep.subr.mxu0 0.0
  %122 = vmatpush2.msra.mxu0 0.0
  %123 = vmatprep.subr.mxu0 0.0
  %124 = vmatpush2.msra.mxu0 0.0
  %125 = vmatprep.subr.mxu0 0.0
  %126 = vmatpush2.msra.mxu0 0.0
  %127 = vmatprep.subr.mxu0 0.0
  %128 = vmatpush2.msra.mxu0 0.0
  %129 = vmatprep.mubr.f32.mxu0 0.0
  %130 = vmatmul.mubr.f32.gmra.mxu0 %v60
  %v131 = vpop.f32.mrf.mxu0
  %v132 = vadd.f32 %v56, %v131
  %v133 = vpop.f32.mrf.mxu0
  %134 = vmatprep.mubr.f32.mxu0 0.0
  %135 = vmatmul.mubr.f32.gmra.mxu0 %v63
  %v136 = vpop.f32.mrf.mxu0
  %v137 = vadd.f32 %v56, %v136
  %v138 = vpop.f32.mrf.mxu0
  %139 = vdwg.mxu0
  %v140 = vld [vmem:[%s4] sm:$0x1]
  %v141 = vld [vmem:[%s5] sm:$0x1]
  %v142 = vsel %vm58, %v132, 0.0
  %143 = vadd.xlane.f32.xlu0 %v142
  %v144 = vpop.xlane.xlu0 %143
  %v145 = vsel %vm58, %v137, 0.0
  %146 = vadd.xlane.f32.xlu0 %v145
  %v147 = vpop.xlane.xlu0 %146
  %v148 = vrcp.pop 32.0
  %v149 = vmul.f32 %v144, %v148
  %v150 = vmul.f32 %v147, %v148
  %v151 = vsub.f32 %v132, %v149
  %v152 = vsub.f32 %v137, %v150
  %v153 = vmul.f32 %v151, %v151
  %v154 = vmul.f32 %v152, %v152
  %v155 = vsel %vm58, %v153, 0.0
  %156 = vadd.xlane.f32.xlu0 %v155
  %v157 = vpop.xlane.xlu0 %156
  %v158 = vsel %vm58, %v154, 0.0
  %159 = vadd.xlane.f32.xlu0 %v158
  %v160 = vpop.xlane.xlu0 %159
  %v161 = vmul.f32 %v157, %v148
  %v162 = vmul.f32 %v160, %v148
  %v163 = vadd.f32 %v161, 1e-05
  %v164 = vadd.f32 %v162, 1e-05
  %v165 = vrsqrt.pop %v163
  %v166 = vrsqrt.pop %v164
  %v167 = vmul.f32 %v151, %v165
  %v168 = vmul.f32 %v152, %v166
  %v170 = vlaneseq
  %v171 = vshrl.u32 %v170, 7
  %v172 = vsub.s32 0, %v171
  %v173 = vrot.slane %v140, %v172
  %v175 = vmul.f32 %v167, %v173
  %v176 = vmul.f32 %v168, %v173
  %v178 = vlaneseq
  %v179 = vshrl.u32 %v178, 7
  %v180 = vsub.s32 0, %v179
  %v181 = vrot.slane %v141, %v180
  %v183 = vadd.f32 %v175, %v181
  %v184 = vadd.f32 %v176, %v181
  %v185 = vmul.f32 %v183, %v38
  %v186 = vmul.f32 %v184, %v43
  %187 = vst.msk [vmem:[%s8] sm:$0xff] %vm58, %v185
  %188 = vst.msk [vmem:[%s8 + $0x8] sm:$0xff] %vm58, %v186
  %v189 = vld [vmem:[%s6] sm:$0xff]
  %v190 = vld [vmem:[%s6 + $0x8] sm:$0xff]
  %v191 = vld [vmem:[%s6 + $0x10] sm:$0xff]
  %v192 = vld [vmem:[%s6 + $0x18] sm:$0xff]
  %v193 = vld [vmem:[%s7] sm:$0x1]
  %v195 = vlaneseq
  %v196 = vshrl.u32 %v195, 7
  %v197 = vsub.s32 0, %v196
  %v198 = vrot.slane %v193, %v197
  %v201 = vsel %vm58, %v185, 0
  %v204 = vsel %vm58, %v186, 0
  %206 = vmatprep.subr.mxu0 0.0
  %207 = vmatpush1.msra.mxu0 0.0
  %208 = vmatprep.subr.mxu0 0.0
  %209 = vmatpush1.msra.mxu0 0.0
  %210 = vmatprep.subr.mxu0 0.0
  %211 = vmatpush1.msra.mxu0 0.0
  %212 = vmatprep.subr.mxu0 0.0
  %213 = vmatpush1.msra.mxu0 0.0
  %214 = vmatprep.subr.mxu0 0.0
  %215 = vmatpush1.msra.mxu0 0.0
  %216 = vmatprep.subr.mxu0 0.0
  %217 = vmatpush1.msra.mxu0 0.0
  %218 = vmatprep.subr.mxu0 0.0
  %219 = vmatpush1.msra.mxu0 0.0
  %220 = vmatprep.subr.mxu0 0.0
  %221 = vmatpush1.msra.mxu0 0.0
  %222 = vmatprep.subr.mxu0 0.0
  %223 = vmatpush1.msra.mxu0 0.0
  %224 = vmatprep.subr.mxu0 0.0
  %225 = vmatpush1.msra.mxu0 0.0
  %226 = vmatprep.subr.mxu0 0.0
  %227 = vmatpush1.msra.mxu0 0.0
  %228 = vmatprep.subr.mxu0 0.0
  %229 = vmatpush1.msra.mxu0 0.0
  %230 = vmatprep.subr.mxu0 0.0
  %231 = vmatpush1.msra.mxu0 %v192
  %232 = vmatprep.subr.mxu0 0.0
  %233 = vmatpush1.msra.mxu0 %v191
  %234 = vmatprep.subr.mxu0 0.0
  %235 = vmatpush1.msra.mxu0 %v190
  %236 = vmatprep.subr.mxu0 0.0
  %237 = vmatpush1.msra.mxu0 %v189
  %238 = vmatprep.subr.mxu0 0.0
  %239 = vmatpush2.msra.mxu0 0.0
  %240 = vmatprep.subr.mxu0 0.0
  %241 = vmatpush2.msra.mxu0 0.0
  %242 = vmatprep.subr.mxu0 0.0
  %243 = vmatpush2.msra.mxu0 0.0
  %244 = vmatprep.subr.mxu0 0.0
  %245 = vmatpush2.msra.mxu0 0.0
  %246 = vmatprep.subr.mxu0 0.0
  %247 = vmatpush2.msra.mxu0 0.0
  %248 = vmatprep.subr.mxu0 0.0
  %249 = vmatpush2.msra.mxu0 0.0
  %250 = vmatprep.subr.mxu0 0.0
  %251 = vmatpush2.msra.mxu0 0.0
  %252 = vmatprep.subr.mxu0 0.0
  %253 = vmatpush2.msra.mxu0 0.0
  %254 = vmatprep.subr.mxu0 0.0
  %255 = vmatpush2.msra.mxu0 0.0
  %256 = vmatprep.subr.mxu0 0.0
  %257 = vmatpush2.msra.mxu0 0.0
  %258 = vmatprep.subr.mxu0 0.0
  %259 = vmatpush2.msra.mxu0 0.0
  %260 = vmatprep.subr.mxu0 0.0
  %261 = vmatpush2.msra.mxu0 0.0
  %262 = vmatprep.subr.mxu0 0.0
  %263 = vmatpush2.msra.mxu0 0.0
  %264 = vmatprep.subr.mxu0 0.0
  %265 = vmatpush2.msra.mxu0 0.0
  %266 = vmatprep.subr.mxu0 0.0
  %267 = vmatpush2.msra.mxu0 0.0
  %268 = vmatprep.subr.mxu0 0.0
  %269 = vmatpush2.msra.mxu0 0.0
  %270 = vmatprep.mubr.f32.mxu0 0.0
  %271 = vmatmul.mubr.f32.gmra.mxu0 %v201
  %v272 = vpop.f32.mrf.mxu0
  %v273 = vadd.f32 %v198, %v272
  %v274 = vpop.f32.mrf.mxu0
  %275 = vmatprep.mubr.f32.mxu0 0.0
  %276 = vmatmul.mubr.f32.gmra.mxu0 %v204
  %v277 = vpop.f32.mrf.mxu0
  %v278 = vadd.f32 %v198, %v277
  %v279 = vpop.f32.mrf.mxu0
  %280 = vdwg.mxu0
  %vm281 = vcmask 392192
  %282 = vst.msk [vmem:[%s9] sm:$0xff] %vm281, %v273
  %283 = vst.msk [vmem:[%s9 + $0x8] sm:$0xff] %vm281, %v278
  // Predicated region
  $region34: #{lr_crvnn_forward.2} parent=0 // pred_check
    _
  $region35: #{lr_crvnn_forward.2} parent=0 // pred_check_branch
    %285 = sbr.rel (0) target = $region37
  $region36: #{lr_crvnn_forward.2} parent=0 // pred_region
    _
  $region37: #{lr_crvnn_forward.2} parent=0 // pred_fallthru
    _
  // Predicated region
  $region38: #{lr_crvnn_forward.2} parent=0 // pred_check
    _
  $region39: #{lr_crvnn_forward.2} parent=0 // pred_check_branch
    %287 = sbr.rel (0) target = $region41
  $region40: #{lr_crvnn_forward.2} parent=0 // pred_region
    _
  $region41: #{lr_crvnn_forward.2} parent=0 // pred_fallthru
    _
  // Predicated region
  $region42: #{lr_crvnn_forward.2} parent=0 // pred_check
    _
  $region43: #{lr_crvnn_forward.2} parent=0 // pred_check_branch
    %289 = sbr.rel (0) target = $region45
  $region44: #{lr_crvnn_forward.2} parent=0 // pred_region
    _
  $region45: #{lr_crvnn_forward.2} parent=0 // pred_fallthru
    _
  // Predicated region
  $region46: #{lr_crvnn_forward.2} parent=0 // pred_check
    _
  $region47: #{lr_crvnn_forward.2} parent=0 // pred_check_branch
    %291 = sbr.rel (0) target = $region49
  $region48: #{lr_crvnn_forward.2} parent=0 // pred_region
    _
  $region49: #{lr_crvnn_forward.2} parent=0 // pred_fallthru
    _

// kernel: lr_crvnn_forward.3
$region0: #{lr_crvnn_forward.3}
  #allocation0 [shape = 'u32[]', space=smem, size = 0x4, offset = 0x4, fixed_abs, tag = 'smem constant byte address 0x4 - core index']
  #allocation1 [shape = 'u32[144,128]{1,0:T(1,128)}', space=vmem, size = 0x12000, scoped, tag = 'internal scratch']
  #allocation2 [shape = 'f32[2,32]{1,0:T(2,128)}', space=vmem, size = 0x400, scoped, tag = 'scratch operand']
  #allocation3 [shape = 'f32[2,32]{1,0:T(2,128)}', space=vmem, size = 0x400, scoped, tag = 'scratch operand']
  %s0 = inlined_call_operand.vmem [shape: f32[2,8,32], index: 0, kind: input, shape index: {}]
  %s1 = inlined_call_operand.vmem [shape: f32[2,8,48], index: 1, kind: input, shape index: {}]
  %s2 = inlined_call_operand.vmem [shape: f32[2,8,1], index: 2, kind: input, shape index: {}]
  %s3 = inlined_call_operand.vmem [shape: f32[1,32], index: 3, kind: input, shape index: {}]
  %s4 = inlined_call_operand.vmem [shape: f32[32,48], index: 4, kind: input, shape index: {}]
  %s5 = inlined_call_operand.vmem [shape: f32[4,48,32], index: 5, kind: input, shape index: {}]
  %s6 = inlined_call_operand.vmem [shape: f32[4,1,32], index: 6, kind: input, shape index: {}]
  %s7 = inlined_call_operand.vmem [shape: f32[1,32], index: 7, kind: input, shape index: {}]
  %s8 = inlined_call_operand.vmem [shape: f32[1,32], index: 8, kind: input, shape index: {}]
  %s9 = inlined_call_operand.hbm [shape: f32[2,8,32], index: 9, kind: output, shape index: {0}]
  %s10 = inlined_call_operand.hbm [shape: f32[2,32], index: 10, kind: output, shape index: {1}]
  %11 = xla_tuple %s9, %s10
  %s12 = sld [smem:[#allocation0]]
  $region62: #{lr_crvnn_forward.3} parent=0
    _
  %s14 = ssub.s32 1, %s12
  %s15 = scalar_select 0, %s14, %s12
  $region1: #{lr_crvnn_forward.3} parent=0
    #allocation4 [shape = 'u8[8192]{0}', space=vmem, size = 0x2000, scoped, tag = 'output window, operand 0, single buffered']
    #allocation5 [shape = 's32[1]{0}', space=sflag, size = 0x4, scoped, tag = 'scoped memory for lr_crvnn_forward.3']
    #allocation6 [shape = 'u8[1024]{0}', space=vmem, size = 0x400, scoped, tag = 'output window, operand 1, single buffered']
    #allocation7 [shape = 's32[1]{0}', space=sflag, size = 0x4, scoped, tag = 'scoped memory for lr_crvnn_forward.3']
    %16 = vsyncpa [#allocation5], 0
    %17 = vsyncpa [#allocation7], 0
    // Predicated region
    $region2: #{lr_crvnn_forward.3} parent=1 // pred_check
      _
    $region3: #{lr_crvnn_forward.3} parent=1 // pred_check_branch
      %19 = sbr.rel (0) target = $region5
    $region4: #{lr_crvnn_forward.3} parent=1 // pred_region
      _
    $region5: #{lr_crvnn_forward.3} parent=1 // pred_fallthru
      _
    // Predicated region
    $region6: #{lr_crvnn_forward.3} parent=1 // pred_check
      _
    $region7: #{lr_crvnn_forward.3} parent=1 // pred_check_branch
      %21 = sbr.rel (0) target = $region9
    $region8: #{lr_crvnn_forward.3} parent=1 // pred_region
      _
    $region9: #{lr_crvnn_forward.3} parent=1 // pred_fallthru
      _
    // Predicated region
    $region10: #{lr_crvnn_forward.3} parent=1 // pred_check
      _
    $region11: #{lr_crvnn_forward.3} parent=1 // pred_check_branch
      %23 = sbr.rel (0) target = $region13
    $region12: #{lr_crvnn_forward.3} parent=1 // pred_region
      _
    $region13: #{lr_crvnn_forward.3} parent=1 // pred_fallthru
      _
    // Predicated region
    $region14: #{lr_crvnn_forward.3} parent=1 // pred_check
      _
    $region15: #{lr_crvnn_forward.3} parent=1 // pred_check_branch
      %25 = sbr.rel (0) target = $region17
    $region16: #{lr_crvnn_forward.3} parent=1 // pred_region
      _
    $region17: #{lr_crvnn_forward.3} parent=1 // pred_fallthru
      _
    // Predicated region
    $region18: #{lr_crvnn_forward.3} parent=1 // pred_check
      _
    $region19: #{lr_crvnn_forward.3} parent=1 // pred_check_branch
      %27 = sbr.rel (0) target = $region21
    $region20: #{lr_crvnn_forward.3} parent=1 // pred_region
      _
    $region21: #{lr_crvnn_forward.3} parent=1 // pred_fallthru
      _
    // Predicated region
    $region22: #{lr_crvnn_forward.3} parent=1 // pred_check
      _
    $region23: #{lr_crvnn_forward.3} parent=1 // pred_check_branch
      %29 = sbr.rel (0) target = $region25
    $region24: #{lr_crvnn_forward.3} parent=1 // pred_region
      _
    $region25: #{lr_crvnn_forward.3} parent=1 // pred_fallthru
      _
    // Predicated region
    $region26: #{lr_crvnn_forward.3} parent=1 // pred_check
      _
    $region27: #{lr_crvnn_forward.3} parent=1 // pred_check_branch
      %31 = sbr.rel (0) target = $region29
    $region28: #{lr_crvnn_forward.3} parent=1 // pred_region
      _
    $region29: #{lr_crvnn_forward.3} parent=1 // pred_fallthru
      _
    // Predicated region
    $region30: #{lr_crvnn_forward.3} parent=1 // pred_check
      _
    $region31: #{lr_crvnn_forward.3} parent=1 // pred_check_branch
      %33 = sbr.rel (0) target = $region33
    $region32: #{lr_crvnn_forward.3} parent=1 // pred_region
      _
    $region33: #{lr_crvnn_forward.3} parent=1 // pred_fallthru
      _
    // Predicated region
    $region34: #{lr_crvnn_forward.3} parent=1 // pred_check
      _
    $region35: #{lr_crvnn_forward.3} parent=1 // pred_check_branch
      %35 = sbr.rel (0) target = $region37
    $region36: #{lr_crvnn_forward.3} parent=1 // pred_region
      _
    $region37: #{lr_crvnn_forward.3} parent=1 // pred_fallthru
      _
    %p36 = scmp.eq.s32.totalorder 0, 0
    // Predicated region
    $region38: #{lr_crvnn_forward.3} parent=1 // pred_check
      %p37 = pneg %p36
    $region39: #{lr_crvnn_forward.3} parent=1 // pred_check_branch
      %39 = sbr.rel (%p37) target = $region41
    $region40: #{lr_crvnn_forward.3} parent=1 // pred_region
      %v40 = vld [vmem:[%s3] sm:$0x1]
      %v42 = vlaneseq
      %v43 = vshrl.u32 %v42, 7
      %v44 = vsub.s32 0, %v43
      %v45 = vrot.slane %v40, %v44
      %vm47 = vcmask 254976
      %48 = vst.msk [vmem:[#allocation2] sm:$0x3] %vm47, %v45
      %49 = vst.msk [vmem:[#allocation3] sm:$0x3] %vm47, %v45
    $region41: #{lr_crvnn_forward.3} parent=1 // pred_fallthru
      _
    %v50 = vld [vmem:[#allocation2] sm:$0x3]
    %v51 = vld [vmem:[#allocation3] sm:$0x3]
    %v52 = vld [vmem:[%s4] sm:$0xff]
    %v53 = vld [vmem:[%s4 + $0x8] sm:$0xff]
    %v54 = vld [vmem:[%s4 + $0x10] sm:$0xff]
    %v55 = vld [vmem:[%s4 + $0x18] sm:$0xff]
    %v56 = vld [vmem:[%s5] sm:$0xff]
    %v57 = vld [vmem:[%s5 + $0x8] sm:$0xff]
    %v58 = vld [vmem:[%s5 + $0x10] sm:$0xff]
    %v59 = vld [vmem:[%s5 + $0x18] sm:$0xff]
    %v60 = vld [vmem:[%s5 + $0x20] sm:$0xff]
    %v61 = vld [vmem:[%s5 + $0x28] sm:$0xff]
    %s62 = scalar_lea.vmem %s5, 48
    %v63 = vld [vmem:[%s62] sm:$0xff]
    %v64 = vld [vmem:[%s62 + $0x8] sm:$0xff]
    %v65 = vld [vmem:[%s62 + $0x10] sm:$0xff]
    %v66 = vld [vmem:[%s62 + $0x18] sm:$0xff]
    %v67 = vld [vmem:[%s62 + $0x20] sm:$0xff]
    %v68 = vld [vmem:[%s62 + $0x28] sm:$0xff]
    %s69 = scalar_lea.vmem %s5, 96
    %v70 = vld [vmem:[%s69] sm:$0xff]
    %v71 = vld [vmem:[%s69 + $0x8] sm:$0xff]
    %v72 = vld [vmem:[%s69 + $0x10] sm:$0xff]
    %v73 = vld [vmem:[%s69 + $0x18] sm:$0xff]
    %v74 = vld [vmem:[%s69 + $0x20] sm:$0xff]
    %v75 = vld [vmem:[%s69 + $0x28] sm:$0xff]
    %s76 = scalar_lea.vmem %s5, 144
    %v77 = vld [vmem:[%s76] sm:$0xff]
    %v78 = vld [vmem:[%s76 + $0x8] sm:$0xff]
    %v79 = vld [vmem:[%s76 + $0x10] sm:$0xff]
    %v80 = vld [vmem:[%s76 + $0x18] sm:$0xff]
    %v81 = vld [vmem:[%s76 + $0x20] sm:$0xff]
    %v82 = vld [vmem:[%s76 + $0x28] sm:$0xff]
    %v83 = vld [vmem:[%s6] sm:$0x1]
    %s84 = scalar_lea.vmem %s6, 1
    %v85 = vld [vmem:[%s84] sm:$0x1]
    %s86 = scalar_lea.vmem %s6, 2
    %v87 = vld [vmem:[%s86] sm:$0x1]
    %s88 = scalar_lea.vmem %s6, 3
    %v89 = vld [vmem:[%s88] sm:$0x1]
    %v90 = vld [vmem:[%s7] sm:$0x1]
    %v91 = vld [vmem:[%s8] sm:$0x1]
    %v92 = vld [vmem:[%s0] sm:$0x1]
    %v93 = vld [vmem:[%s0 + $0x8] sm:$0x1]
    %v94 = vld [vmem:[%s1] sm:$0x1]
    %v95 = vld [vmem:[%s1 + $0x8] sm:$0x1]
    %v96 = vld [vmem:[%s2] sm:$0x1]
    %v97 = vld [vmem:[%s2 + $0x8] sm:$0x1]
    %v100 = vrot.slane %v95, 7
    %vm101 = vcmask 1041409
    %v102 = vsel %vm101, %v100, %v94
    %vm104 = vcmask 261120
    %v106 = vsel %vm104, %v50, 0
    %108 = vmatprep.subr.mxu0 0.0
    %109 = vmatpush1.msra.mxu0 0.0
    %110 = vmatprep.subr.mxu0 0.0
    %111 = vmatpush1.msra.mxu0 0.0
    %112 = vmatprep.subr.mxu0 0.0
    %113 = vmatpush1.msra.mxu0 0.0
    %114 = vmatprep.subr.mxu0 0.0
    %115 = vmatpush1.msra.mxu0 0.0
    %116 = vmatprep.subr.mxu0 0.0
    %117 = vmatpush1.msra.mxu0 0.0
    %118 = vmatprep.subr.mxu0 0.0
    %119 = vmatpush1.msra.mxu0 0.0
    %120 = vmatprep.subr.mxu0 0.0
    %121 = vmatpush1.msra.mxu0 0.0
    %122 = vmatprep.subr.mxu0 0.0
    %123 = vmatpush1.msra.mxu0 0.0
    %124 = vmatprep.subr.mxu0 0.0
    %125 = vmatpush1.msra.mxu0 0.0
    %126 = vmatprep.subr.mxu0 0.0
    %127 = vmatpush1.msra.mxu0 0.0
    %128 = vmatprep.subr.mxu0 0.0
    %129 = vmatpush1.msra.mxu0 0.0
    %130 = vmatprep.subr.mxu0 0.0
    %131 = vmatpush1.msra.mxu0 0.0
    %132 = vmatprep.subr.mxu0 0.0
    %133 = vmatpush1.msra.mxu0 %v55
    %134 = vmatprep.subr.mxu0 0.0
    %135 = vmatpush1.msra.mxu0 %v54
    %136 = vmatprep.subr.mxu0 0.0
    %137 = vmatpush1.msra.mxu0 %v53
    %138 = vmatprep.subr.mxu0 0.0
    %139 = vmatpush1.msra.mxu0 %v52
    %140 = vmatprep.subr.mxu0 0.0
    %141 = vmatpush2.msra.mxu0 0.0
    %142 = vmatprep.subr.mxu0 0.0
    %143 = vmatpush2.msra.mxu0 0.0
    %144 = vmatprep.subr.mxu0 0.0
    %145 = vmatpush2.msra.mxu0 0.0
    %146 = vmatprep.subr.mxu0 0.0
    %147 = vmatpush2.msra.mxu0 0.0
    %148 = vmatprep.subr.mxu0 0.0
    %149 = vmatpush2.msra.mxu0 0.0
    %150 = vmatprep.subr.mxu0 0.0
    %151 = vmatpush2.msra.mxu0 0.0
    %152 = vmatprep.subr.mxu0 0.0
    %153 = vmatpush2.msra.mxu0 0.0
    %154 = vmatprep.subr.mxu0 0.0
    %155 = vmatpush2.msra.mxu0 0.0
    %156 = vmatprep.subr.mxu0 0.0
    %157 = vmatpush2.msra.mxu0 0.0
    %158 = vmatprep.subr.mxu0 0.0
    %159 = vmatpush2.msra.mxu0 0.0
    %160 = vmatprep.subr.mxu0 0.0
    %161 = vmatpush2.msra.mxu0 0.0
    %162 = vmatprep.subr.mxu0 0.0
    %163 = vmatpush2.msra.mxu0 0.0
    %164 = vmatprep.subr.mxu0 0.0
    %165 = vmatpush2.msra.mxu0 0.0
    %166 = vmatprep.subr.mxu0 0.0
    %167 = vmatpush2.msra.mxu0 0.0
    %168 = vmatprep.subr.mxu0 0.0
    %169 = vmatpush2.msra.mxu0 0.0
    %170 = vmatprep.subr.mxu0 0.0
    %171 = vmatpush2.msra.mxu0 0.0
    %172 = vmatprep.mubr.f32.mxu0 0.0
    %173 = vmatmul.mubr.f32.gmra.mxu0 %v106
    %v174 = vpop.f32.mrf.mxu0
    %v175 = vadd.f32 %v102, %v174
    %v176 = vpop.f32.mrf.mxu0
    %177 = vdwg.mxu0
    %v178 = vmax.f32 %v175, 0.0
    %v180 = vlaneseq
    %v181 = vshrl.u32 %v180, 7
    %v182 = vsub.s32 0, %v181
    %v183 = vrot.slane %v83, %v182
    %vm185 = vcmask 392192
    %v187 = vsel %vm185, %v178, 0
    %189 = vmatprep.subr.mxu0 0.0
    %190 = vmatpush1.msra.mxu0 0.0
    %191 = vmatprep.subr.mxu0 0.0
    %192 = vmatpush1.msra.mxu0 0.0
    %193 = vmatprep.subr.mxu0 0.0
    %194 = vmatpush1.msra.mxu0 0.0
    %195 = vmatprep.subr.mxu0 0.0
    %196 = vmatpush1.msra.mxu0 0.0
    %197 = vmatprep.subr.mxu0 0.0
    %198 = vmatpush1.msra.mxu0 0.0
    %199 = vmatprep.subr.mxu0 0.0
    %200 = vmatpush1.msra.mxu0 0.0
    %201 = vmatprep.subr.mxu0 0.0
    %202 = vmatpush1.msra.mxu0 0.0
    %203 = vmatprep.subr.mxu0 0.0
    %204 = vmatpush1.msra.mxu0 0.0
    %205 = vmatprep.subr.mxu0 0.0
    %206 = vmatpush1.msra.mxu0 0.0
    %207 = vmatprep.subr.mxu0 0.0
    %208 = vmatpush1.msra.mxu0 0.0
    %209 = vmatprep.subr.mxu0 0.0
    %210 = vmatpush1.msra.mxu0 %v61
    %211 = vmatprep.subr.mxu0 0.0
    %212 = vmatpush1.msra.mxu0 %v60
    %213 = vmatprep.subr.mxu0 0.0
    %214 = vmatpush1.msra.mxu0 %v59
    %215 = vmatprep.subr.mxu0 0.0
    %216 = vmatpush1.msra.mxu0 %v58
    %217 = vmatprep.subr.mxu0 0.0
    %218 = vmatpush1.msra.mxu0 %v57
    %219 = vmatprep.subr.mxu0 0.0
    %220 = vmatpush1.msra.mxu0 %v56
    %221 = vmatprep.subr.mxu0 0.0
    %222 = vmatpush2.msra.mxu0 0.0
    %223 = vmatprep.subr.mxu0 0.0
    %224 = vmatpush2.msra.mxu0 0.0
    %225 = vmatprep.subr.mxu0 0.0
    %226 = vmatpush2.msra.mxu0 0.0
    %227 = vmatprep.subr.mxu0 0.0
    %228 = vmatpush2.msra.mxu0 0.0
    %229 = vmatprep.subr.mxu0 0.0
    %230 = vmatpush2.msra.mxu0 0.0
    %231 = vmatprep.subr.mxu0 0.0
    %232 = vmatpush2.msra.mxu0 0.0
    %233 = vmatprep.subr.mxu0 0.0
    %234 = vmatpush2.msra.mxu0 0.0
    %235 = vmatprep.subr.mxu0 0.0
    %236 = vmatpush2.msra.mxu0 0.0
    %237 = vmatprep.subr.mxu0 0.0
    %238 = vmatpush2.msra.mxu0 0.0
    %239 = vmatprep.subr.mxu0 0.0
    %240 = vmatpush2.msra.mxu0 0.0
    %241 = vmatprep.subr.mxu0 0.0
    %242 = vmatpush2.msra.mxu0 0.0
    %243 = vmatprep.subr.mxu0 0.0
    %244 = vmatpush2.msra.mxu0 0.0
    %245 = vmatprep.subr.mxu0 0.0
    %246 = vmatpush2.msra.mxu0 0.0
    %247 = vmatprep.subr.mxu0 0.0
    %248 = vmatpush2.msra.mxu0 0.0
    %249 = vmatprep.subr.mxu0 0.0
    %250 = vmatpush2.msra.mxu0 0.0
    %251 = vmatprep.subr.mxu0 0.0
    %252 = vmatpush2.msra.mxu0 0.0
    %253 = vmatprep.mubr.f32.mxu0 0.0
    %254 = vmatmul.mubr.f32.gmra.mxu0 %v187
    %v255 = vpop.f32.mrf.mxu0
    %v256 = vadd.f32 %v183, %v255
    %v257 = vpop.f32.mrf.mxu0
    %258 = vdwg.mxu0
    %v259 = vxor.u32 %v256, 2147483648
    %v260 = vmul.f32 %v259, 1.442695
    %v261 = vpow.pop %v260
    %v262 = vadd.f32 %v261, 1.0
    %v263 = vrcp.pop %v262
    %v264 = vmul.f32 1.0, %v263
    %v266 = vlaneseq
    %v267 = vshrl.u32 %v266, 7
    %v268 = vsub.s32 0, %v267
    %v269 = vrot.slane %v85, %v268
    %271 = vmatprep.subr.mxu0 0.0
    %272 = vmatpush1.msra.mxu0 0.0
    %273 = vmatprep.subr.mxu0 0.0
    %274 = vmatpush1.msra.mxu0 0.0
    %275 = vmatprep.subr.mxu0 0.0
    %276 = vmatpush1.msra.mxu0 0.0
    %277 = vmatprep.subr.mxu0 0.0
    %278 = vmatpush1.msra.mxu0 0.0
    %279 = vmatprep.subr.mxu0 0.0
    %280 = vmatpush1.msra.mxu0 0.0
    %281 = vmatprep.subr.mxu0 0.0
    %282 = vmatpush1.msra.mxu0 0.0
    %283 = vmatprep.subr.mxu0 0.0
    %284 = vmatpush1.msra.mxu0 0.0
    %285 = vmatprep.subr.mxu0 0.0
    %286 = vmatpush1.msra.mxu0 0.0
    %287 = vmatprep.subr.mxu0 0.0
    %288 = vmatpush1.msra.mxu0 0.0
    %289 = vmatprep.subr.mxu0 0.0
    %290 = vmatpush1.msra.mxu0 0.0
    %291 = vmatprep.subr.mxu0 0.0
    %292 = vmatpush1.msra.mxu0 %v68
    %293 = vmatprep.subr.mxu0 0.0
    %294 = vmatpush1.msra.mxu0 %v67
    %295 = vmatprep.subr.mxu0 0.0
    %296 = vmatpush1.msra.mxu0 %v66
    %297 = vmatprep.subr.mxu0 0.0
    %298 = vmatpush1.msra.mxu0 %v65
    %299 = vmatprep.subr.mxu0 0.0
    %300 = vmatpush1.msra.mxu0 %v64
    %301 = vmatprep.subr.mxu0 0.0
    %302 = vmatpush1.msra.mxu0 %v63
    %303 = vmatprep.subr.mxu0 0.0
    %304 = vmatpush2.msra.mxu0 0.0
    %305 = vmatprep.subr.mxu0 0.0
    %306 = vmatpush2.msra.mxu0 0.0
    %307 = vmatprep.subr.mxu0 0.0
    %308 = vmatpush2.msra.mxu0 0.0
    %309 = vmatprep.subr.mxu0 0.0
    %310 = vmatpush2.msra.mxu0 0.0
    %311 = vmatprep.subr.mxu0 0.0
    %312 = vmatpush2.msra.mxu0 0.0
    %313 = vmatprep.subr.mxu0 0.0
    %314 = vmatpush2.msra.mxu0 0.0
    %315 = vmatprep.subr.mxu0 0.0
    %316 = vmatpush2.msra.mxu0 0.0
    %317 = vmatprep.subr.mxu0 0.0
    %318 = vmatpush2.msra.mxu0 0.0
    %319 = vmatprep.subr.mxu0 0.0
    %320 = vmatpush2.msra.mxu0 0.0
    %321 = vmatprep.subr.mxu0 0.0
    %322 = vmatpush2.msra.mxu0 0.0
    %323 = vmatprep.subr.mxu0 0.0
    %324 = vmatpush2.msra.mxu0 0.0
    %325 = vmatprep.subr.mxu0 0.0
    %326 = vmatpush2.msra.mxu0 0.0
    %327 = vmatprep.subr.mxu0 0.0
    %328 = vmatpush2.msra.mxu0 0.0
    %329 = vmatprep.subr.mxu0 0.0
    %330 = vmatpush2.msra.mxu0 0.0
    %331 = vmatprep.subr.mxu0 0.0
    %332 = vmatpush2.msra.mxu0 0.0
    %333 = vmatprep.subr.mxu0 0.0
    %334 = vmatpush2.msra.mxu0 0.0
    %335 = vmatprep.mubr.f32.mxu0 0.0
    %336 = vmatmul.mubr.f32.gmra.mxu0 %v187
    %v337 = vpop.f32.mrf.mxu0
    %v338 = vadd.f32 %v269, %v337
    %v339 = vpop.f32.mrf.mxu0
    %340 = vdwg.mxu0
    %v341 = vxor.u32 %v338, 2147483648
    %v342 = vmul.f32 %v341, 1.442695
    %v343 = vpow.pop %v342
    %v344 = vadd.f32 %v343, 1.0
    %v345 = vrcp.pop %v344
    %v346 = vmul.f32 1.0, %v345
    %v348 = vlaneseq
    %v349 = vshrl.u32 %v348, 7
    %v350 = vsub.s32 0, %v349
    %v351 = vrot.slane %v87, %v350
    %353 = vmatprep.subr.mxu0 0.0
    %354 = vmatpush1.msra.mxu0 0.0
    %355 = vmatprep.subr.mxu0 0.0
    %356 = vmatpush1.msra.mxu0 0.0
    %357 = vmatprep.subr.mxu0 0.0
    %358 = vmatpush1.msra.mxu0 0.0
    %359 = vmatprep.subr.mxu0 0.0
    %360 = vmatpush1.msra.mxu0 0.0
    %361 = vmatprep.subr.mxu0 0.0
    %362 = vmatpush1.msra.mxu0 0.0
    %363 = vmatprep.subr.mxu0 0.0
    %364 = vmatpush1.msra.mxu0 0.0
    %365 = vmatprep.subr.mxu0 0.0
    %366 = vmatpush1.msra.mxu0 0.0
    %367 = vmatprep.subr.mxu0 0.0
    %368 = vmatpush1.msra.mxu0 0.0
    %369 = vmatprep.subr.mxu0 0.0
    %370 = vmatpush1.msra.mxu0 0.0
    %371 = vmatprep.subr.mxu0 0.0
    %372 = vmatpush1.msra.mxu0 0.0
    %373 = vmatprep.subr.mxu0 0.0
    %374 = vmatpush1.msra.mxu0 %v75
    %375 = vmatprep.subr.mxu0 0.0
    %376 = vmatpush1.msra.mxu0 %v74
    %377 = vmatprep.subr.mxu0 0.0
    %378 = vmatpush1.msra.mxu0 %v73
    %379 = vmatprep.subr.mxu0 0.0
    %380 = vmatpush1.msra.mxu0 %v72
    %381 = vmatprep.subr.mxu0 0.0
    %382 = vmatpush1.msra.mxu0 %v71
    %383 = vmatprep.subr.mxu0 0.0
    %384 = vmatpush1.msra.mxu0 %v70
    %385 = vmatprep.subr.mxu0 0.0
    %386 = vmatpush2.msra.mxu0 0.0
    %387 = vmatprep.subr.mxu0 0.0
    %388 = vmatpush2.msra.mxu0 0.0
    %389 = vmatprep.subr.mxu0 0.0
    %390 = vmatpush2.msra.mxu0 0.0
    %391 = vmatprep.subr.mxu0 0.0
    %392 = vmatpush2.msra.mxu0 0.0
    %393 = vmatprep.subr.mxu0 0.0
    %394 = vmatpush2.msra.mxu0 0.0
    %395 = vmatprep.subr.mxu0 0.0
    %396 = vmatpush2.msra.mxu0 0.0
    %397 = vmatprep.subr.mxu0 0.0
    %398 = vmatpush2.msra.mxu0 0.0
    %399 = vmatprep.subr.mxu0 0.0
    %400 = vmatpush2.msra.mxu0 0.0
    %401 = vmatprep.subr.mxu0 0.0
    %402 = vmatpush2.msra.mxu0 0.0
    %403 = vmatprep.subr.mxu0 0.0
    %404 = vmatpush2.msra.mxu0 0.0
    %405 = vmatprep.subr.mxu0 0.0
    %406 = vmatpush2.msra.mxu0 0.0
    %407 = vmatprep.subr.mxu0 0.0
    %408 = vmatpush2.msra.mxu0 0.0
    %409 = vmatprep.subr.mxu0 0.0
    %410 = vmatpush2.msra.mxu0 0.0
    %411 = vmatprep.subr.mxu0 0.0
    %412 = vmatpush2.msra.mxu0 0.0
    %413 = vmatprep.subr.mxu0 0.0
    %414 = vmatpush2.msra.mxu0 0.0
    %415 = vmatprep.subr.mxu0 0.0
    %416 = vmatpush2.msra.mxu0 0.0
    %417 = vmatprep.mubr.f32.mxu0 0.0
    %418 = vmatmul.mubr.f32.gmra.mxu0 %v187
    %v419 = vpop.f32.mrf.mxu0
    %v420 = vadd.f32 %v351, %v419
    %v421 = vpop.f32.mrf.mxu0
    %422 = vdwg.mxu0
    %v423 = vxor.u32 %v420, 2147483648
    %v424 = vmul.f32 %v423, 1.442695
    %v425 = vpow.pop %v424
    %v426 = vadd.f32 %v425, 1.0
    %v427 = vrcp.pop %v426
    %v428 = vmul.f32 1.0, %v427
    %v430 = vlaneseq
    %v431 = vshrl.u32 %v430, 7
    %v432 = vsub.s32 0, %v431
    %v433 = vrot.slane %v89, %v432
    %435 = vmatprep.subr.mxu0 0.0
    %436 = vmatpush1.msra.mxu0 0.0
    %437 = vmatprep.subr.mxu0 0.0
    %438 = vmatpush1.msra.mxu0 0.0
    %439 = vmatprep.subr.mxu0 0.0
    %440 = vmatpush1.msra.mxu0 0.0
    %441 = vmatprep.subr.mxu0 0.0
    %442 = vmatpush1.msra.mxu0 0.0
    %443 = vmatprep.subr.mxu0 0.0
    %444 = vmatpush1.msra.mxu0 0.0
    %445 = vmatprep.subr.mxu0 0.0
    %446 = vmatpush1.msra.mxu0 0.0
    %447 = vmatprep.subr.mxu0 0.0
    %448 = vmatpush1.msra.mxu0 0.0
    %449 = vmatprep.subr.mxu0 0.0
    %450 = vmatpush1.msra.mxu0 0.0
    %451 = vmatprep.subr.mxu0 0.0
    %452 = vmatpush1.msra.mxu0 0.0
    %453 = vmatprep.subr.mxu0 0.0
    %454 = vmatpush1.msra.mxu0 0.0
    %455 = vmatprep.subr.mxu0 0.0
    %456 = vmatpush1.msra.mxu0 %v82
    %457 = vmatprep.subr.mxu0 0.0
    %458 = vmatpush1.msra.mxu0 %v81
    %459 = vmatprep.subr.mxu0 0.0
    %460 = vmatpush1.msra.mxu0 %v80
    %461 = vmatprep.subr.mxu0 0.0
    %462 = vmatpush1.msra.mxu0 %v79
    %463 = vmatprep.subr.mxu0 0.0
    %464 = vmatpush1.msra.mxu0 %v78
    %465 = vmatprep.subr.mxu0 0.0
    %466 = vmatpush1.msra.mxu0 %v77
    %467 = vmatprep.subr.mxu0 0.0
    %468 = vmatpush2.msra.mxu0 0.0
    %469 = vmatprep.subr.mxu0 0.0
    %470 = vmatpush2.msra.mxu0 0.0
    %471 = vmatprep.subr.mxu0 0.0
    %472 = vmatpush2.msra.mxu0 0.0
    %473 = vmatprep.subr.mxu0 0.0
    %474 = vmatpush2.msra.mxu0 0.0
    %475 = vmatprep.subr.mxu0 0.0
    %476 = vmatpush2.msra.mxu0 0.0
    %477 = vmatprep.subr.mxu0 0.0
    %478 = vmatpush2.msra.mxu0 0.0
    %479 = vmatprep.subr.mxu0 0.0
    %480 = vmatpush2.msra.mxu0 0.0
    %481 = vmatprep.subr.mxu0 0.0
    %482 = vmatpush2.msra.mxu0 0.0
    %483 = vmatprep.subr.mxu0 0.0
    %484 = vmatpush2.msra.mxu0 0.0
    %485 = vmatprep.subr.mxu0 0.0
    %486 = vmatpush2.msra.mxu0 0.0
    %487 = vmatprep.subr.mxu0 0.0
    %488 = vmatpush2.msra.mxu0 0.0
    %489 = vmatprep.subr.mxu0 0.0
    %490 = vmatpush2.msra.mxu0 0.0
    %491 = vmatprep.subr.mxu0 0.0
    %492 = vmatpush2.msra.mxu0 0.0
    %493 = vmatprep.subr.mxu0 0.0
    %494 = vmatpush2.msra.mxu0 0.0
    %495 = vmatprep.subr.mxu0 0.0
    %496 = vmatpush2.msra.mxu0 0.0
    %497 = vmatprep.subr.mxu0 0.0
    %498 = vmatpush2.msra.mxu0 0.0
    %499 = vmatprep.mubr.f32.mxu0 0.0
    %500 = vmatmul.mubr.f32.gmra.mxu0 %v187
    %v501 = vpop.f32.mrf.mxu0
    %v502 = vadd.f32 %v433, %v501
    %v503 = vpop.f32.mrf.mxu0
    %504 = vdwg.mxu0
    %v505 = vmul.f32 %v264, %v50
    %v508 = vrot.slane %v93, 7
    %v509 = vsel %vm101, %v508, %v92
    %v511 = vmul.f32 %v346, %v509
    %v512 = vadd.f32 %v505, %v511
    %v513 = vmul.f32 %v428, %v502
    %v514 = vadd.f32 %v512, %v513
    %vm515 = vcmask 254976
    %v516 = vsel %vm515, %v514, 0.0
    %517 = vadd.xlane.f32.xlu0 %v516
    %v518 = vpop.xlane.xlu0 %517
    %v519 = vrcp.pop 32.0
    %v520 = vmul.f32 %v518, %v519
    %v521 = vsub.f32 %v514, %v520
    %v522 = vmul.f32 %v521, %v521
    %v523 = vsel %vm515, %v522, 0.0
    %524 = vadd.xlane.f32.xlu0 %v523
    %v525 = vpop.xlane.xlu0 %524
    %v526 = vmul.f32 %v525, %v519
    %v527 = vadd.f32 %v526, 1e-05
    %v528 = vrsqrt.pop %v527
    %v529 = vmul.f32 %v521, %v528
    %v531 = vlaneseq
    %v532 = vshrl.u32 %v531, 7
    %v533 = vsub.s32 0, %v532
    %v534 = vrot.slane %v90, %v533
    %v536 = vmul.f32 %v529, %v534
    %v538 = vlaneseq
    %v539 = vshrl.u32 %v538, 7
    %v540 = vsub.s32 0, %v539
    %v541 = vrot.slane %v91, %v540
    %v543 = vadd.f32 %v536, %v541
    %545 = vset.pattern.permute.xlu0 0
    %546 = vperm.xlu0 %545, %v96
    %v547 = vpop.permute.xlu0 %546
    %550 = vset.pattern.permute.xlu0 0
    %551 = vperm.xlu0 %550, %v97
    %v552 = vpop.permute.xlu0 %551
    %v555 = vrot.slane %v543, 1
    %v558 = vmul.f32 %v547, %v543
    %v559 = vmul.f32 %v552, %v555
    %v560 = vsub.f32 1.0, %v96
    %v561 = vsub.f32 1.0, %v97
    %563 = vset.pattern.permute.xlu0 0
    %564 = vperm.xlu0 %563, %v560
    %v565 = vpop.permute.xlu0 %564
    %568 = vset.pattern.permute.xlu0 0
    %569 = vperm.xlu0 %568, %v561
    %v570 = vpop.permute.xlu0 %569
    %v573 = vrot.slane %v51, 1
    %v576 = vmul.f32 %v565, %v51
    %v577 = vmul.f32 %v570, %v573
    %v578 = vadd.f32 %v558, %v576
    %v579 = vadd.f32 %v559, %v577
    %vm580 = vcmask 253952
    %581 = vst.msk [vmem:[#allocation4] sm:$0x1] %vm580, %v558
    %582 = vst.msk [vmem:[#allocation4 + $0x8] sm:$0x1] %vm580, %v559
    %v583 = vld [vmem:[%s0 + $0x1] sm:$0x1]
    %v584 = vld [vmem:[%s0 + $0x9] sm:$0x1]
    %v585 = vld [vmem:[%s1 + $0x1] sm:$0x1]
    %v586 = vld [vmem:[%s1 + $0x9] sm:$0x1]
    %v587 = vld [vmem:[%s2 + $0x1] sm:$0x1]
    %v588 = vld [vmem:[%s2 + $0x9] sm:$0x1]
    %v591 = vrot.slane %v586, 7
    %v592 = vsel %vm101, %v591, %v585
    %v594 = vsel %vm104, %v543, 0
    %596 = vmatprep.subr.mxu0 0.0
    %597 = vmatpush1.msra.mxu0 0.0
    %598 = vmatprep.subr.mxu0 0.0
    %599 = vmatpush1.msra.mxu0 0.0
    %600 = vmatprep.subr.mxu0 0.0
    %601 = vmatpush1.msra.mxu0 0.0
    %602 = vmatprep.subr.mxu0 0.0
    %603 = vmatpush1.msra.mxu0 0.0
    %604 = vmatprep.subr.mxu0 0.0
    %605 = vmatpush1.msra.mxu0 0.0
    %606 = vmatprep.subr.mxu0 0.0
    %607 = vmatpush1.msra.mxu0 0.0
    %608 = vmatprep.subr.mxu0 0.0
    %609 = vmatpush1.msra.mxu0 0.0
    %610 = vmatprep.subr.mxu0 0.0
    %611 = vmatpush1.msra.mxu0 0.0
    %612 = vmatprep.subr.mxu0 0.0
    %613 = vmatpush1.msra.mxu0 0.0
    %614 = vmatprep.subr.mxu0 0.0
    %615 = vmatpush1.msra.mxu0 0.0
    %616 = vmatprep.subr.mxu0 0.0
    %617 = vmatpush1.msra.mxu0 0.0
    %618 = vmatprep.subr.mxu0 0.0
    %619 = vmatpush1.msra.mxu0 0.0
    %620 = vmatprep.subr.mxu0 0.0
    %621 = vmatpush1.msra.mxu0 %v55
    %622 = vmatprep.subr.mxu0 0.0
    %623 = vmatpush1.msra.mxu0 %v54
    %624 = vmatprep.subr.mxu0 0.0
    %625 = vmatpush1.msra.mxu0 %v53
    %626 = vmatprep.subr.mxu0 0.0
    %627 = vmatpush1.msra.mxu0 %v52
    %628 = vmatprep.subr.mxu0 0.0
    %629 = vmatpush2.msra.mxu0 0.0
    %630 = vmatprep.subr.mxu0 0.0
    %631 = vmatpush2.msra.mxu0 0.0
    %632 = vmatprep.subr.mxu0 0.0
    %633 = vmatpush2.msra.mxu0 0.0
    %634 = vmatprep.subr.mxu0 0.0
    %635 = vmatpush2.msra.mxu0 0.0
    %636 = vmatprep.subr.mxu0 0.0
    %637 = vmatpush2.msra.mxu0 0.0
    %638 = vmatprep.subr.mxu0 0.0
    %639 = vmatpush2.msra.mxu0 0.0
    %640 = vmatprep.subr.mxu0 0.0
    %641 = vmatpush2.msra.mxu0 0.0
    %642 = vmatprep.subr.mxu0 0.0
    %643 = vmatpush2.msra.mxu0 0.0
    %644 = vmatprep.subr.mxu0 0.0
    %645 = vmatpush2.msra.mxu0 0.0
    %646 = vmatprep.subr.mxu0 0.0
    %647 = vmatpush2.msra.mxu0 0.0
    %648 = vmatprep.subr.mxu0 0.0
    %649 = vmatpush2.msra.mxu0 0.0
    %650 = vmatprep.subr.mxu0 0.0
    %651 = vmatpush2.msra.mxu0 0.0
    %652 = vmatprep.subr.mxu0 0.0
    %653 = vmatpush2.msra.mxu0 0.0
    %654 = vmatprep.subr.mxu0 0.0
    %655 = vmatpush2.msra.mxu0 0.0
    %656 = vmatprep.subr.mxu0 0.0
    %657 = vmatpush2.msra.mxu0 0.0
    %658 = vmatprep.subr.mxu0 0.0
    %659 = vmatpush2.msra.mxu0 0.0
    %660 = vmatprep.mubr.f32.mxu0 0.0
    %661 = vmatmul.mubr.f32.gmra.mxu0 %v594
    %v662 = vpop.f32.mrf.mxu0
    %v663 = vadd.f32 %v592, %v662
    %v664 = vpop.f32.mrf.mxu0
    %665 = vdwg.mxu0
    %v666 = vmax.f32 %v663, 0.0
    %v668 = vsel %vm185, %v666, 0
    %670 = vmatprep.subr.mxu0 0.0
    %671 = vmatpush1.msra.mxu0 0.0
    %672 = vmatprep.subr.mxu0 0.0
    %673 = vmatpush1.msra.mxu0 0.0
    %674 = vmatprep.subr.mxu0 0.0
    %675 = vmatpush1.msra.mxu0 0.0
    %676 = vmatprep.subr.mxu0 0.0
    %677 = vmatpush1.msra.mxu0 0.0
    %678 = vmatprep.subr.mxu0 0.0
    %679 = vmatpush1.msra.mxu0 0.0
    %680 = vmatprep.subr.mxu0 0.0
    %681 = vmatpush1.msra.mxu0 0.0
    %682 = vmatprep.subr.mxu0 0.0
    %683 = vmatpush1.msra.mxu0 0.0
    %684 = vmatprep.subr.mxu0 0.0
    %685 = vmatpush1.msra.mxu0 0.0
    %686 = vmatprep.subr.mxu0 0.0
    %687 = vmatpush1.msra.mxu0 0.0
    %688 = vmatprep.subr.mxu0 0.0
    %689 = vmatpush1.msra.mxu0 0.0
    %690 = vmatprep.subr.mxu0 0.0
    %691 = vmatpush1.msra.mxu0 %v61
    %692 = vmatprep.subr.mxu0 0.0
    %693 = vmatpush1.msra.mxu0 %v60
    %694 = vmatprep.subr.mxu0 0.0
    %695 = vmatpush1.msra.mxu0 %v59
    %696 = vmatprep.subr.mxu0 0.0
    %697 = vmatpush1.msra.mxu0 %v58
    %698 = vmatprep.subr.mxu0 0.0
    %699 = vmatpush1.msra.mxu0 %v57
    %700 = vmatprep.subr.mxu0 0.0
    %701 = vmatpush1.msra.mxu0 %v56
    %702 = vmatprep.subr.mxu0 0.0
    %703 = vmatpush2.msra.mxu0 0.0
    %704 = vmatprep.subr.mxu0 0.0
    %705 = vmatpush2.msra.mxu0 0.0
    %706 = vmatprep.subr.mxu0 0.0
    %707 = vmatpush2.msra.mxu0 0.0
    %708 = vmatprep.subr.mxu0 0.0
    %709 = vmatpush2.msra.mxu0 0.0
    %710 = vmatprep.subr.mxu0 0.0
    %711 = vmatpush2.msra.mxu0 0.0
    %712 = vmatprep.subr.mxu0 0.0
    %713 = vmatpush2.msra.mxu0 0.0
    %714 = vmatprep.subr.mxu0 0.0
    %715 = vmatpush2.msra.mxu0 0.0
    %716 = vmatprep.subr.mxu0 0.0
    %717 = vmatpush2.msra.mxu0 0.0
    %718 = vmatprep.subr.mxu0 0.0
    %719 = vmatpush2.msra.mxu0 0.0
    %720 = vmatprep.subr.mxu0 0.0
    %721 = vmatpush2.msra.mxu0 0.0
    %722 = vmatprep.subr.mxu0 0.0
    %723 = vmatpush2.msra.mxu0 0.0
    %724 = vmatprep.subr.mxu0 0.0
    %725 = vmatpush2.msra.mxu0 0.0
    %726 = vmatprep.subr.mxu0 0.0
    %727 = vmatpush2.msra.mxu0 0.0
    %728 = vmatprep.subr.mxu0 0.0
    %729 = vmatpush2.msra.mxu0 0.0
    %730 = vmatprep.subr.mxu0 0.0
    %731 = vmatpush2.msra.mxu0 0.0
    %732 = vmatprep.subr.mxu0 0.0
    %733 = vmatpush2.msra.mxu0 0.0
    %734 = vmatprep.mubr.f32.mxu0 0.0
    %735 = vmatmul.mubr.f32.gmra.mxu0 %v668
    %v736 = vpop.f32.mrf.mxu0
    %v737 = vadd.f32 %v183, %v736
    %v738 = vpop.f32.mrf.mxu0
    %739 = vdwg.mxu0
    %v740 = vxor.u32 %v737, 2147483648
    %v741 = vmul.f32 %v740, 1.442695
    %v742 = vpow.pop %v741
    %v743 = vadd.f32 %v742, 1.0
    %v744 = vrcp.pop %v743
    %v745 = vmul.f32 1.0, %v744
    %746 = vmatprep.subr.mxu0 0.0
    %747 = vmatpush1.msra.mxu0 0.0
    %748 = vmatprep.subr.mxu0 0.0
    %749 = vmatpush1.msra.mxu0 0.0
    %750 = vmatprep.subr.mxu0 0.0
    %751 = vmatpush1.msra.mxu0 0.0
    %752 = vmatprep.subr.mxu0 0.0
    %753 = vmatpush1.msra.mxu0 0.0
    %754 = vmatprep.subr.mxu0 0.0
    %755 = vmatpush1.msra.mxu0 0.0
    %756 = vmatprep.subr.mxu0 0.0
    %757 = vmatpush1.msra.mxu0 0.0
    %758 = vmatprep.subr.mxu0 0.0
    %759 = vmatpush1.msra.mxu0 0.0
    %760 = vmatprep.subr.mxu0 0.0
    %761 = vmatpush1.msra.mxu0 0.0
    %762 = vmatprep.subr.mxu0 0.0
    %763 = vmatpush1.msra.mxu0 0.0
    %764 = vmatprep.subr.mxu0 0.0
    %765 = vmatpush1.msra.mxu0 0.0
    %766 = vmatprep.subr.mxu0 0.0
    %767 = vmatpush1.msra.mxu0 %v68
    %768 = vmatprep.subr.mxu0 0.0
    %769 = vmatpush1.msra.mxu0 %v67
    %770 = vmatprep.subr.mxu0 0.0
    %771 = vmatpush1.msra.mxu0 %v66
    %772 = vmatprep.subr.mxu0 0.0
    %773 = vmatpush1.msra.mxu0 %v65
    %774 = vmatprep.subr.mxu0 0.0
    %775 = vmatpush1.msra.mxu0 %v64
    %776 = vmatprep.subr.mxu0 0.0
    %777 = vmatpush1.msra.mxu0 %v63
    %778 = vmatprep.subr.mxu0 0.0
    %779 = vmatpush2.msra.mxu0 0.0
    %780 = vmatprep.subr.mxu0 0.0
    %781 = vmatpush2.msra.mxu0 0.0
    %782 = vmatprep.subr.mxu0 0.0
    %783 = vmatpush2.msra.mxu0 0.0
    %784 = vmatprep.subr.mxu0 0.0
    %785 = vmatpush2.msra.mxu0 0.0
    %786 = vmatprep.subr.mxu0 0.0
    %787 = vmatpush2.msra.mxu0 0.0
    %788 = vmatprep.subr.mxu0 0.0
    %789 = vmatpush2.msra.mxu0 0.0
    %790 = vmatprep.subr.mxu0 0.0
    %791 = vmatpush2.msra.mxu0 0.0
    %792 = vmatprep.subr.mxu0 0.0
    %793 = vmatpush2.msra.mxu0 0.0
    %794 = vmatprep.subr.mxu0 0.0
    %795 = vmatpush2.msra.mxu0 0.0
    %796 = vmatprep.subr.mxu0 0.0
    %797 = vmatpush2.msra.mxu0 0.0
    %798 = vmatprep.subr.mxu0 0.0
    %799 = vmatpush2.msra.mxu0 0.0
    %800 = vmatprep.subr.mxu0 0.0
    %801 = vmatpush2.msra.mxu0 0.0
    %802 = vmatprep.subr.mxu0 0.0
    %803 = vmatpush2.msra.mxu0 0.0
    %804 = vmatprep.subr.mxu0 0.0
    %805 = vmatpush2.msra.mxu0 0.0
    %806 = vmatprep.subr.mxu0 0.0
    %807 = vmatpush2.msra.mxu0 0.0
    %808 = vmatprep.subr.mxu0 0.0
    %809 = vmatpush2.msra.mxu0 0.0
    %810 = vmatprep.mubr.f32.mxu0 0.0
    %811 = vmatmul.mubr.f32.gmra.mxu0 %v668
    %v812 = vpop.f32.mrf.mxu0
    %v813 = vadd.f32 %v269, %v812
    %v814 = vpop.f32.mrf.mxu0
    %815 = vdwg.mxu0
    %v816 = vxor.u32 %v813, 2147483648
    %v817 = vmul.f32 %v816, 1.442695
    %v818 = vpow.pop %v817
    %v819 = vadd.f32 %v818, 1.0
    %v820 = vrcp.pop %v819
    %v821 = vmul.f32 1.0, %v820
    %822 = vmatprep.subr.mxu0 0.0
    %823 = vmatpush1.msra.mxu0 0.0
    %824 = vmatprep.subr.mxu0 0.0
    %825 = vmatpush1.msra.mxu0 0.0
    %826 = vmatprep.subr.mxu0 0.0
    %827 = vmatpush1.msra.mxu0 0.0
    %828 = vmatprep.subr.mxu0 0.0
    %829 = vmatpush1.msra.mxu0 0.0
    %830 = vmatprep.subr.mxu0 0.0
    %831 = vmatpush1.msra.mxu0 0.0
    %832 = vmatprep.subr.mxu0 0.0
    %833 = vmatpush1.msra.mxu0 0.0
    %834 = vmatprep.subr.mxu0 0.0
    %835 = vmatpush1.msra.mxu0 0.0
    %836 = vmatprep.subr.mxu0 0.0
    %837 = vmatpush1.msra.mxu0 0.0
    %838 = vmatprep.subr.mxu0 0.0
    %839 = vmatpush1.msra.mxu0 0.0
    %840 = vmatprep.subr.mxu0 0.0
    %841 = vmatpush1.msra.mxu0 0.0
    %842 = vmatprep.subr.mxu0 0.0
    %843 = vmatpush1.msra.mxu0 %v75
    %844 = vmatprep.subr.mxu0 0.0
    %845 = vmatpush1.msra.mxu0 %v74
    %846 = vmatprep.subr.mxu0 0.0
    %847 = vmatpush1.msra.mxu0 %v73
    %848 = vmatprep.subr.mxu0 0.0
    %849 = vmatpush1.msra.mxu0 %v72
    %850 = vmatprep.subr.mxu0 0.0
    %851 = vmatpush1.msra.mxu0 %v71
    %852 = vmatprep.subr.mxu0 0.0
    %853 = vmatpush1.msra.mxu0 %v70
    %854 = vmatprep.subr.mxu0 0.0
    %855 = vmatpush2.msra.mxu0 0.0
    %856 = vmatprep.subr.mxu0 0.0
    %857 = vmatpush2.msra.mxu0 0.0
    %858 = vmatprep.subr.mxu0 0.0
    %859 = vmatpush2.msra.mxu0 0.0
    %860 = vmatprep.subr.mxu0 0.0
    %861 = vmatpush2.msra.mxu0 0.0
    %862 = vmatprep.subr.mxu0 0.0
    %863 = vmatpush2.msra.mxu0 0.0
    %864 = vmatprep.subr.mxu0 0.0
    %865 = vmatpush2.msra.mxu0 0.0
    %866 = vmatprep.subr.mxu0 0.0
    %867 = vmatpush2.msra.mxu0 0.0
    %868 = vmatprep.subr.mxu0 0.0
    %869 = vmatpush2.msra.mxu0 0.0
    %870 = vmatprep.subr.mxu0 0.0
    %871 = vmatpush2.msra.mxu0 0.0
    %872 = vmatprep.subr.mxu0 0.0
    %873 = vmatpush2.msra.mxu0 0.0
    %874 = vmatprep.subr.mxu0 0.0
    %875 = vmatpush2.msra.mxu0 0.0
    %876 = vmatprep.subr.mxu0 0.0
    %877 = vmatpush2.msra.mxu0 0.0
    %878 = vmatprep.subr.mxu0 0.0
    %879 = vmatpush2.msra.mxu0 0.0
    %880 = vmatprep.subr.mxu0 0.0
    %881 = vmatpush2.msra.mxu0 0.0
    %882 = vmatprep.subr.mxu0 0.0
    %883 = vmatpush2.msra.mxu0 0.0
    %884 = vmatprep.subr.mxu0 0.0
    %885 = vmatpush2.msra.mxu0 0.0
    %886 = vmatprep.mubr.f32.mxu0 0.0
    %887 = vmatmul.mubr.f32.gmra.mxu0 %v668
    %v888 = vpop.f32.mrf.mxu0
    %v889 = vadd.f32 %v351, %v888
    %v890 = vpop.f32.mrf.mxu0
    %891 = vdwg.mxu0
    %v892 = vxor.u32 %v889, 2147483648
    %v893 = vmul.f32 %v892, 1.442695
    %v894 = vpow.pop %v893
    %v895 = vadd.f32 %v894, 1.0
    %v896 = vrcp.pop %v895
    %v897 = vmul.f32 1.0, %v896
    %898 = vmatprep.subr.mxu0 0.0
    %899 = vmatpush1.msra.mxu0 0.0
    %900 = vmatprep.subr.mxu0 0.0
    %901 = vmatpush1.msra.mxu0 0.0
    %902 = vmatprep.subr.mxu0 0.0
    %903 = vmatpush1.msra.mxu0 0.0
    %904 = vmatprep.subr.mxu0 0.0
    %905 = vmatpush1.msra.mxu0 0.0
    %906 = vmatprep.subr.mxu0 0.0
    %907 = vmatpush1.msra.mxu0 0.0
    %908 = vmatprep.subr.mxu0 0.0
    %909 = vmatpush1.msra.mxu0 0.0
    %910 = vmatprep.subr.mxu0 0.0
    %911 = vmatpush1.msra.mxu0 0.0
    %912 = vmatprep.subr.mxu0 0.0
    %913 = vmatpush1.msra.mxu0 0.0
    %914 = vmatprep.subr.mxu0 0.0
    %915 = vmatpush1.msra.mxu0 0.0
    %916 = vmatprep.subr.mxu0 0.0
    %917 = vmatpush1.msra.mxu0 0.0
    %918 = vmatprep.subr.mxu0 0.0
    %919 = vmatpush1.msra.mxu0 %v82
    %920 = vmatprep.subr.mxu0 0.0
    %921 = vmatpush1.msra.mxu0 %v81
    %922 = vmatprep.subr.mxu0 0.0
    %923 = vmatpush1.msra.mxu0 %v80
    %924 = vmatprep.subr.mxu0 0.0
    %925 = vmatpush1.msra.mxu0 %v79
    %926 = vmatprep.subr.mxu0 0.0
    %927 = vmatpush1.msra.mxu0 %v78
    %928 = vmatprep.subr.mxu0 0.0
    %929 = vmatpush1.msra.mxu0 %v77
    %930 = vmatprep.subr.mxu0 0.0
    %931 = vmatpush2.msra.mxu0 0.0
    %932 = vmatprep.subr.mxu0 0.0
    %933 = vmatpush2.msra.mxu0 0.0
    %934 = vmatprep.subr.mxu0 0.0
    %935 = vmatpush2.msra.mxu0 0.0
    %936 = vmatprep.subr.mxu0 0.0
    %937 = vmatpush2.msra.mxu0 0.0
    %938 = vmatprep.subr.mxu0 0.0
    %939 = vmatpush2.msra.mxu0 0.0
    %940 = vmatprep.subr.mxu0 0.0
    %941 = vmatpush2.msra.mxu0 0.0
    %942 = vmatprep.subr.mxu0 0.0
    %943 = vmatpush2.msra.mxu0 0.0
    %944 = vmatprep.subr.mxu0 0.0
    %945 = vmatpush2.msra.mxu0 0.0
    %946 = vmatprep.subr.mxu0 0.0
    %947 = vmatpush2.msra.mxu0 0.0
    %948 = vmatprep.subr.mxu0 0.0
    %949 = vmatpush2.msra.mxu0 0.0
    %950 = vmatprep.subr.mxu0 0.0
    %951 = vmatpush2.msra.mxu0 0.0
    %952 = vmatprep.subr.mxu0 0.0
    %953 = vmatpush2.msra.mxu0 0.0
    %954 = vmatprep.subr.mxu0 0.0
    %955 = vmatpush2.msra.mxu0 0.0
    %956 = vmatprep.subr.mxu0 0.0
    %957 = vmatpush2.msra.mxu0 0.0
    %958 = vmatprep.subr.mxu0 0.0
    %959 = vmatpush2.msra.mxu0 0.0
    %960 = vmatprep.subr.mxu0 0.0
    %961 = vmatpush2.msra.mxu0 0.0
    %962 = vmatprep.mubr.f32.mxu0 0.0
    %963 = vmatmul.mubr.f32.gmra.mxu0 %v668
    %v964 = vpop.f32.mrf.mxu0
    %v965 = vadd.f32 %v433, %v964
    %v966 = vpop.f32.mrf.mxu0
    %967 = vdwg.mxu0
    %v968 = vmul.f32 %v745, %v543
    %v971 = vrot.slane %v584, 7
    %v972 = vsel %vm101, %v971, %v583
    %v974 = vmul.f32 %v821, %v972
    %v975 = vadd.f32 %v968, %v974
    %v976 = vmul.f32 %v897, %v965
    %v977 = vadd.f32 %v975, %v976
    %v978 = vsel %vm515, %v977, 0.0
    %979 = vadd.xlane.f32.xlu0 %v978
    %v980 = vpop.xlane.xlu0 %979
    %v981 = vmul.f32 %v980, %v519
    %v982 = vsub.f32 %v977, %v981
    %v983 = vmul.f32 %v982, %v982
    %v984 = vsel %vm515, %v983, 0.0
    %985 = vadd.xlane.f32.xlu0 %v984
    %v986 = vpop.xlane.xlu0 %985
    %v987 = vmul.f32 %v986, %v519
    %v988 = vadd.f32 %v987, 1e-05
    %v989 = vrsqrt.pop %v988
    %v990 = vmul.f32 %v982, %v989
    %v991 = vmul.f32 %v990, %v534
    %v992 = vadd.f32 %v991, %v541
    %994 = vset.pattern.permute.xlu0 0
    %995 = vperm.xlu0 %994, %v587
    %v996 = vpop.permute.xlu0 %995
    %999 = vset.pattern.permute.xlu0 0
    %1000 = vperm.xlu0 %999, %v588
    %v1001 = vpop.permute.xlu0 %1000
    %v1004 = vrot.slane %v992, 1
    %v1007 = vmul.f32 %v996, %v992
    %v1008 = vmul.f32 %v1001, %v1004
    %v1009 = vsub.f32 1.0, %v587
    %v1010 = vsub.f32 1.0, %v588
    %1012 = vset.pattern.permute.xlu0 0
    %1013 = vperm.xlu0 %1012, %v1009
    %v1014 = vpop.permute.xlu0 %1013
    %1017 = vset.pattern.permute.xlu0 0
    %1018 = vperm.xlu0 %1017, %v1010
    %v1019 = vpop.permute.xlu0 %1018
    %v1021 = vmul.f32 %v1014, %v578
    %v1022 = vmul.f32 %v1019, %v579
    %v1023 = vadd.f32 %v1007, %v1021
    %v1024 = vadd.f32 %v1008, %v1022
    %1025 = vst.msk [vmem:[#allocation4 + $0x1] sm:$0x1] %vm580, %v1007
    %1026 = vst.msk [vmem:[#allocation4 + $0x9] sm:$0x1] %vm580, %v1008
    %v1027 = vld [vmem:[%s0 + $0x2] sm:$0x1]
    %v1028 = vld [vmem:[%s0 + $0xa] sm:$0x1]
    %v1029 = vld [vmem:[%s1 + $0x2] sm:$0x1]
    %v1030 = vld [vmem:[%s1 + $0xa] sm:$0x1]
    %v1031 = vld [vmem:[%s2 + $0x2] sm:$0x1]
    %v1032 = vld [vmem:[%s2 + $0xa] sm:$0x1]
    %v1035 = vrot.slane %v1030, 7
    %v1036 = vsel %vm101, %v1035, %v1029
    %v1038 = vsel %vm104, %v992, 0
    %1040 = vmatprep.subr.mxu0 0.0
    %1041 = vmatpush1.msra.mxu0 0.0
    %1042 = vmatprep.subr.mxu0 0.0
    %1043 = vmatpush1.msra.mxu0 0.0
    %1044 = vmatprep.subr.mxu0 0.0
    %1045 = vmatpush1.msra.mxu0 0.0
    %1046 = vmatprep.subr.mxu0 0.0
    %1047 = vmatpush1.msra.mxu0 0.0
    %1048 = vmatprep.subr.mxu0 0.0
    %1049 = vmatpush1.msra.mxu0 0.0
    %1050 = vmatprep.subr.mxu0 0.0
    %1051 = vmatpush1.msra.mxu0 0.0
    %1052 = vmatprep.subr.mxu0 0.0
    %1053 = vmatpush1.msra.mxu0 0.0
    %1054 = vmatprep.subr.mxu0 0.0
    %1055 = vmatpush1.msra.mxu0 0.0
    %1056 = vmatprep.subr.mxu0 0.0
    %1057 = vmatpush1.msra.mxu0 0.0
    %1058 = vmatprep.subr.mxu0 0.0
    %1059 = vmatpush1.msra.mxu0 0.0
    %1060 = vmatprep.subr.mxu0 0.0
    %1061 = vmatpush1.msra.mxu0 0.0
    %1062 = vmatprep.subr.mxu0 0.0
    %1063 = vmatpush1.msra.mxu0 0.0
    %1064 = vmatprep.subr.mxu0 0.0
    %1065 = vmatpush1.msra.mxu0 %v55
    %1066 = vmatprep.subr.mxu0 0.0
    %1067 = vmatpush1.msra.mxu0 %v54
    %1068 = vmatprep.subr.mxu0 0.0
    %1069 = vmatpush1.msra.mxu0 %v53
    %1070 = vmatprep.subr.mxu0 0.0
    %1071 = vmatpush1.msra.mxu0 %v52
    %1072 = vmatprep.subr.mxu0 0.0
    %1073 = vmatpush2.msra.mxu0 0.0
    %1074 = vmatprep.subr.mxu0 0.0
    %1075 = vmatpush2.msra.mxu0 0.0
    %1076 = vmatprep.subr.mxu0 0.0
    %1077 = vmatpush2.msra.mxu0 0.0
    %1078 = vmatprep.subr.mxu0 0.0
    %1079 = vmatpush2.msra.mxu0 0.0
    %1080 = vmatprep.subr.mxu0 0.0
    %1081 = vmatpush2.msra.mxu0 0.0
    %1082 = vmatprep.subr.mxu0 0.0
    %1083 = vmatpush2.msra.mxu0 0.0
    %1084 = vmatprep.subr.mxu0 0.0
    %1085 = vmatpush2.msra.mxu0 0.0
    %1086 = vmatprep.subr.mxu0 0.0
    %1087 = vmatpush2.msra.mxu0 0.0
    %1088 = vmatprep.subr.mxu0 0.0
    %1089 = vmatpush2.msra.mxu0 0.0
    %1090 = vmatprep.subr.mxu0 0.0
    %1091 = vmatpush2.msra.mxu0 0.0
    %1092 = vmatprep.subr.mxu0 0.0
    %1093 = vmatpush2.msra.mxu0 0.0
    %1094 = vmatprep.subr.mxu0 0.0
    %1095 = vmatpush2.msra.mxu0 0.0
    %1096 = vmatprep.subr.mxu0 0.0
    %1097 = vmatpush2.msra.mxu0 0.0
    %1098 = vmatprep.subr.mxu0 0.0
    %1099 = vmatpush2.msra.mxu0 0.0
    %1100 = vmatprep.subr.mxu0 0.0
    %1101 = vmatpush2.msra.mxu0 0.0
    %1102 = vmatprep.subr.mxu0 0.0
    %1103 = vmatpush2.msra.mxu0 0.0
    %1104 = vmatprep.mubr.f32.mxu0 0.0
    %1105 = vmatmul.mubr.f32.gmra.mxu0 %v1038
    %v1106 = vpop.f32.mrf.mxu0
    %v1107 = vadd.f32 %v1036, %v1106
    %v1108 = vpop.f32.mrf.mxu0
    %1109 = vdwg.mxu0
    %v1110 = vmax.f32 %v1107, 0.0
    %v1112 = vsel %vm185, %v1110, 0
    %1114 = vmatprep.subr.mxu0 0.0
    %1115 = vmatpush1.msra.mxu0 0.0
    %1116 = vmatprep.subr.mxu0 0.0
    %1117 = vmatpush1.msra.mxu0 0.0
    %1118 = vmatprep.subr.mxu0 0.0
    %1119 = vmatpush1.msra.mxu0 0.0
    %1120 = vmatprep.subr.mxu0 0.0
    %1121 = vmatpush1.msra.mxu0 0.0
    %1122 = vmatprep.subr.mxu0 0.0
    %1123 = vmatpush1.msra.mxu0 0.0
    %1124 = vmatprep.subr.mxu0 0.0
    %1125 = vmatpush1.msra.mxu0 0.0
    %1126 = vmatprep.subr.mxu0 0.0
    %1127 = vmatpush1.msra.mxu0 0.0
    %1128 = vmatprep.subr.mxu0 0.0
    %1129 = vmatpush1.msra.mxu0 0.0
    %1130 = vmatprep.subr.mxu0 0.0
    %1131 = vmatpush1.msra.mxu0 0.0
    %1132 = vmatprep.subr.mxu0 0.0
    %1133 = vmatpush1.msra.mxu0 0.0
    %1134 = vmatprep.subr.mxu0 0.0
    %1135 = vmatpush1.msra.mxu0 %v61
    %1136 = vmatprep.subr.mxu0 0.0
    %1137 = vmatpush1.msra.mxu0 %v60
    %1138 = vmatprep.subr.mxu0 0.0
    %1139 = vmatpush1.msra.mxu0 %v59
    %1140 = vmatprep.subr.mxu0 0.0
    %1141 = vmatpush1.msra.mxu0 %v58
    %1142 = vmatprep.subr.mxu0 0.0
    %1143 = vmatpush1.msra.mxu0 %v57
    %1144 = vmatprep.subr.mxu0 0.0
    %1145 = vmatpush1.msra.mxu0 %v56
    %1146 = vmatprep.subr.mxu0 0.0
    %1147 = vmatpush2.msra.mxu0 0.0
    %1148 = vmatprep.subr.mxu0 0.0
    %1149 = vmatpush2.msra.mxu0 0.0
    %1150 = vmatprep.subr.mxu0 0.0
    %1151 = vmatpush2.msra.mxu0 0.0
    %1152 = vmatprep.subr.mxu0 0.0
    %1153 = vmatpush2.msra.mxu0 0.0
    %1154 = vmatprep.subr.mxu0 0.0
    %1155 = vmatpush2.msra.mxu0 0.0
    %1156 = vmatprep.subr.mxu0 0.0
    %1157 = vmatpush2.msra.mxu0 0.0
    %1158 = vmatprep.subr.mxu0 0.0
    %1159 = vmatpush2.msra.mxu0 0.0
    %1160 = vmatprep.subr.mxu0 0.0
    %1161 = vmatpush2.msra.mxu0 0.0
    %1162 = vmatprep.subr.mxu0 0.0
    %1163 = vmatpush2.msra.mxu0 0.0
    %1164 = vmatprep.subr.mxu0 0.0
    %1165 = vmatpush2.msra.mxu0 0.0
    %1166 = vmatprep.subr.mxu0 0.0
    %1167 = vmatpush2.msra.mxu0 0.0
    %1168 = vmatprep.subr.mxu0 0.0
    %1169 = vmatpush2.msra.mxu0 0.0
    %1170 = vmatprep.subr.mxu0 0.0
    %1171 = vmatpush2.msra.mxu0 0.0
    %1172 = vmatprep.subr.mxu0 0.0
    %1173 = vmatpush2.msra.mxu0 0.0
    %1174 = vmatprep.subr.mxu0 0.0
    %1175 = vmatpush2.msra.mxu0 0.0
    %1176 = vmatprep.subr.mxu0 0.0
    %1177 = vmatpush2.msra.mxu0 0.0
    %1178 = vmatprep.mubr.f32.mxu0 0.0
    %1179 = vmatmul.mubr.f32.gmra.mxu0 %v1112
    %v1180 = vpop.f32.mrf.mxu0
    %v1181 = vadd.f32 %v183, %v1180
    %v1182 = vpop.f32.mrf.mxu0
    %1183 = vdwg.mxu0
    %v1184 = vxor.u32 %v1181, 2147483648
    %v1185 = vmul.f32 %v1184, 1.442695
    %v1186 = vpow.pop %v1185
    %v1187 = vadd.f32 %v1186, 1.0
    %v1188 = vrcp.pop %v1187
    %v1189 = vmul.f32 1.0, %v1188
    %1190 = vmatprep.subr.mxu0 0.0
    %1191 = vmatpush1.msra.mxu0 0.0
    %1192 = vmatprep.subr.mxu0 0.0
    %1193 = vmatpush1.msra.mxu0 0.0
    %1194 = vmatprep.subr.mxu0 0.0
    %1195 = vmatpush1.msra.mxu0 0.0
    %1196 = vmatprep.subr.mxu0 0.0
    %1197 = vmatpush1.msra.mxu0 0.0
    %1198 = vmatprep.subr.mxu0 0.0
    %1199 = vmatpush1.msra.mxu0 0.0
    %1200 = vmatprep.subr.mxu0 0.0
    %1201 = vmatpush1.msra.mxu0 0.0
    %1202 = vmatprep.subr.mxu0 0.0
    %1203 = vmatpush1.msra.mxu0 0.0
    %1204 = vmatprep.subr.mxu0 0.0
    %1205 = vmatpush1.msra.mxu0 0.0
    %1206 = vmatprep.subr.mxu0 0.0
    %1207 = vmatpush1.msra.mxu0 0.0
    %1208 = vmatprep.subr.mxu0 0.0
    %1209 = vmatpush1.msra.mxu0 0.0
    %1210 = vmatprep.subr.mxu0 0.0
    %1211 = vmatpush1.msra.mxu0 %v68
    %1212 = vmatprep.subr.mxu0 0.0
    %1213 = vmatpush1.msra.mxu0 %v67
    %1214 = vmatprep.subr.mxu0 0.0
    %1215 = vmatpush1.msra.mxu0 %v66
    %1216 = vmatprep.subr.mxu0 0.0
    %1217 = vmatpush1.msra.mxu0 %v65
    %1218 = vmatprep.subr.mxu0 0.0
    %1219 = vmatpush1.msra.mxu0 %v64
    %1220 = vmatprep.subr.mxu0 0.0
    %1221 = vmatpush1.msra.mxu0 %v63
    %1222 = vmatprep.subr.mxu0 0.0
    %1223 = vmatpush2.msra.mxu0 0.0
    %1224 = vmatprep.subr.mxu0 0.0
    %1225 = vmatpush2.msra.mxu0 0.0
    %1226 = vmatprep.subr.mxu0 0.0
    %1227 = vmatpush2.msra.mxu0 0.0
    %1228 = vmatprep.subr.mxu0 0.0
    %1229 = vmatpush2.msra.mxu0 0.0
    %1230 = vmatprep.subr.mxu0 0.0
    %1231 = vmatpush2.msra.mxu0 0.0
    %1232 = vmatprep.subr.mxu0 0.0
    %1233 = vmatpush2.msra.mxu0 0.0
    %1234 = vmatprep.subr.mxu0 0.0
    %1235 = vmatpush2.msra.mxu0 0.0
    %1236 = vmatprep.subr.mxu0 0.0
    %1237 = vmatpush2.msra.mxu0 0.0
    %1238 = vmatprep.subr.mxu0 0.0
    %1239 = vmatpush2.msra.mxu0 0.0
    %1240 = vmatprep.subr.mxu0 0.0
    %1241 = vmatpush2.msra.mxu0 0.0
    %1242 = vmatprep.subr.mxu0 0.0
    %1243 = vmatpush2.msra.mxu0 0.0
    %1244 = vmatprep.subr.mxu0 0.0
    %1245 = vmatpush2.msra.mxu0 0.0
    %1246 = vmatprep.subr.mxu0 0.0
    %1247 = vmatpush2.msra.mxu0 0.0
    %1248 = vmatprep.subr.mxu0 0.0
    %1249 = vmatpush2.msra.mxu0 0.0
    %1250 = vmatprep.subr.mxu0 0.0
    %1251 = vmatpush2.msra.mxu0 0.0
    %1252 = vmatprep.subr.mxu0 0.0
    %1253 = vmatpush2.msra.mxu0 0.0
    %1254 = vmatprep.mubr.f32.mxu0 0.0
    %1255 = vmatmul.mubr.f32.gmra.mxu0 %v1112
    %v1256 = vpop.f32.mrf.mxu0
    %v1257 = vadd.f32 %v269, %v1256
    %v1258 = vpop.f32.mrf.mxu0
    %1259 = vdwg.mxu0
    %v1260 = vxor.u32 %v1257, 2147483648
    %v1261 = vmul.f32 %v1260, 1.442695
    %v1262 = vpow.pop %v1261
    %v1263 = vadd.f32 %v1262, 1.0
    %v1264 = vrcp.pop %v1263
    %v1265 = vmul.f32 1.0, %v1264
    %1266 = vmatprep.subr.mxu0 0.0
    %1267 = vmatpush1.msra.mxu0 0.0
    %1268 = vmatprep.subr.mxu0 0.0
    %1269 = vmatpush1.msra.mxu0 0.0
    %1270 = vmatprep.subr.mxu0 0.0
    %1271 = vmatpush1.msra.mxu0 0.0
    %1272 = vmatprep.subr.mxu0 0.0
    %1273 = vmatpush1.msra.mxu0 0.0
    %1274 = vmatprep.subr.mxu0 0.0
    %1275 = vmatpush1.msra.mxu0 0.0
    %1276 = vmatprep.subr.mxu0 0.0
    %1277 = vmatpush1.msra.mxu0 0.0
    %1278 = vmatprep.subr.mxu0 0.0
    %1279 = vmatpush1.msra.mxu0 0.0
    %1280 = vmatprep.subr.mxu0 0.0
    %1281 = vmatpush1.msra.mxu0 0.0
    %1282 = vmatprep.subr.mxu0 0.0
    %1283 = vmatpush1.msra.mxu0 0.0
    %1284 = vmatprep.subr.mxu0 0.0
    %1285 = vmatpush1.msra.mxu0 0.0
    %1286 = vmatprep.subr.mxu0 0.0
    %1287 = vmatpush1.msra.mxu0 %v75
    %1288 = vmatprep.subr.mxu0 0.0
    %1289 = vmatpush1.msra.mxu0 %v74
    %1290 = vmatprep.subr.mxu0 0.0
    %1291 = vmatpush1.msra.mxu0 %v73
    %1292 = vmatprep.subr.mxu0 0.0
    %1293 = vmatpush1.msra.mxu0 %v72
    %1294 = vmatprep.subr.mxu0 0.0
    %1295 = vmatpush1.msra.mxu0 %v71
    %1296 = vmatprep.subr.mxu0 0.0
    %1297 = vmatpush1.msra.mxu0 %v70
    %1298 = vmatprep.subr.mxu0 0.0
    %1299 = vmatpush2.msra.mxu0 0.0
    %1300 = vmatprep.subr.mxu0 0.0
    %1301 = vmatpush2.msra.mxu0 0.0
    %1302 = vmatprep.subr.mxu0 0.0
    %1303 = vmatpush2.msra.mxu0 0.0
    %1304 = vmatprep.subr.mxu0 0.0
    %1305 = vmatpush2.msra.mxu0 0.0
    %1306 = vmatprep.subr.mxu0 0.0
    %1307 = vmatpush2.msra.mxu0 0.0
    %1308 = vmatprep.subr.mxu0 0.0
    %1309 = vmatpush2.msra.mxu0 0.0
    %1310 = vmatprep.subr.mxu0 0.0
    %1311 = vmatpush2.msra.mxu0 0.0
    %1312 = vmatprep.subr.mxu0 0.0
    %1313 = vmatpush2.msra.mxu0 0.0
    %1314 = vmatprep.subr.mxu0 0.0
    %1315 = vmatpush2.msra.mxu0 0.0
    %1316 = vmatprep.subr.mxu0 0.0
    %1317 = vmatpush2.msra.mxu0 0.0
    %1318 = vmatprep.subr.mxu0 0.0
    %1319 = vmatpush2.msra.mxu0 0.0
    %1320 = vmatprep.subr.mxu0 0.0
    %1321 = vmatpush2.msra.mxu0 0.0
    %1322 = vmatprep.subr.mxu0 0.0
    %1323 = vmatpush2.msra.mxu0 0.0
    %1324 = vmatprep.subr.mxu0 0.0
    %1325 = vmatpush2.msra.mxu0 0.0
    %1326 = vmatprep.subr.mxu0 0.0
    %1327 = vmatpush2.msra.mxu0 0.0
    %1328 = vmatprep.subr.mxu0 0.0
    %1329 = vmatpush2.msra.mxu0 0.0
    %1330 = vmatprep.mubr.f32.mxu0 0.0
    %1331 = vmatmul.mubr.f32.gmra.mxu0 %v1112
    %v1332 = vpop.f32.mrf.mxu0
    %v1333 = vadd.f32 %v351, %v1332
    %v1334 = vpop.f32.mrf.mxu0
    %1335 = vdwg.mxu0
    %v1336 = vxor.u32 %v1333, 2147483648
    %v1337 = vmul.f32 %v1336, 1.442695
    %v1338 = vpow.pop %v1337
    %v1339 = vadd.f32 %v1338, 1.0
    %v1340 = vrcp.pop %v1339
    %v1341 = vmul.f32 1.0, %v1340
    %1342 = vmatprep.subr.mxu0 0.0
    %1343 = vmatpush1.msra.mxu0 0.0
    %1344 = vmatprep.subr.mxu0 0.0
    %1345 = vmatpush1.msra.mxu0 0.0
    %1346 = vmatprep.subr.mxu0 0.0
    %1347 = vmatpush1.msra.mxu0 0.0
    %1348 = vmatprep.subr.mxu0 0.0
    %1349 = vmatpush1.msra.mxu0 0.0
    %1350 = vmatprep.subr.mxu0 0.0
    %1351 = vmatpush1.msra.mxu0 0.0
    %1352 = vmatprep.subr.mxu0 0.0
    %1353 = vmatpush1.msra.mxu0 0.0
    %1354 = vmatprep.subr.mxu0 0.0
    %1355 = vmatpush1.msra.mxu0 0.0
    %1356 = vmatprep.subr.mxu0 0.0
    %1357 = vmatpush1.msra.mxu0 0.0
    %1358 = vmatprep.subr.mxu0 0.0
    %1359 = vmatpush1.msra.mxu0 0.0
    %1360 = vmatprep.subr.mxu0 0.0
    %1361 = vmatpush1.msra.mxu0 0.0
    %1362 = vmatprep.subr.mxu0 0.0
    %1363 = vmatpush1.msra.mxu0 %v82
    %1364 = vmatprep.subr.mxu0 0.0
    %1365 = vmatpush1.msra.mxu0 %v81
    %1366 = vmatprep.subr.mxu0 0.0
    %1367 = vmatpush1.msra.mxu0 %v80
    %1368 = vmatprep.subr.mxu0 0.0
    %1369 = vmatpush1.msra.mxu0 %v79
    %1370 = vmatprep.subr.mxu0 0.0
    %1371 = vmatpush1.msra.mxu0 %v78
    %1372 = vmatprep.subr.mxu0 0.0
    %1373 = vmatpush1.msra.mxu0 %v77
    %1374 = vmatprep.subr.mxu0 0.0
    %1375 = vmatpush2.msra.mxu0 0.0
    %1376 = vmatprep.subr.mxu0 0.0
    %1377 = vmatpush2.msra.mxu0 0.0
    %1378 = vmatprep.subr.mxu0 0.0
    %1379 = vmatpush2.msra.mxu0 0.0
    %1380 = vmatprep.subr.mxu0 0.0
    %1381 = vmatpush2.msra.mxu0 0.0
    %1382 = vmatprep.subr.mxu0 0.0
    %1383 = vmatpush2.msra.mxu0 0.0
    %1384 = vmatprep.subr.mxu0 0.0
    %1385 = vmatpush2.msra.mxu0 0.0
    %1386 = vmatprep.subr.mxu0 0.0
    %1387 = vmatpush2.msra.mxu0 0.0
    %1388 = vmatprep.subr.mxu0 0.0
    %1389 = vmatpush2.msra.mxu0 0.0
    %1390 = vmatprep.subr.mxu0 0.0
    %1391 = vmatpush2.msra.mxu0 0.0
    %1392 = vmatprep.subr.mxu0 0.0
    %1393 = vmatpush2.msra.mxu0 0.0
    %1394 = vmatprep.subr.mxu0 0.0
    %1395 = vmatpush2.msra.mxu0 0.0
    %1396 = vmatprep.subr.mxu0 0.0
    %1397 = vmatpush2.msra.mxu0 0.0
    %1398 = vmatprep.subr.mxu0 0.0
    %1399 = vmatpush2.msra.mxu0 0.0
    %1400 = vmatprep.subr.mxu0 0.0
    %1401 = vmatpush2.msra.mxu0 0.0
    %1402 = vmatprep.subr.mxu0 0.0
    %1403 = vmatpush2.msra.mxu0 0.0
    %1404 = vmatprep.subr.mxu0 0.0
    %1405 = vmatpush2.msra.mxu0 0.0
    %1406 = vmatprep.mubr.f32.mxu0 0.0
    %1407 = vmatmul.mubr.f32.gmra.mxu0 %v1112
    %v1408 = vpop.f32.mrf.mxu0
    %v1409 = vadd.f32 %v433, %v1408
    %v1410 = vpop.f32.mrf.mxu0
    %1411 = vdwg.mxu0
    %v1412 = vmul.f32 %v1189, %v992
    %v1415 = vrot.slane %v1028, 7
    %v1416 = vsel %vm101, %v1415, %v1027
    %v1418 = vmul.f32 %v1265, %v1416
    %v1419 = vadd.f32 %v1412, %v1418
    %v1420 = vmul.f32 %v1341, %v1409
    %v1421 = vadd.f32 %v1419, %v1420
    %v1422 = vsel %vm515, %v1421, 0.0
    %1423 = vadd.xlane.f32.xlu0 %v1422
    %v1424 = vpop.xlane.xlu0 %1423
    %v1425 = vmul.f32 %v1424, %v519
    %v1426 = vsub.f32 %v1421, %v1425
    %v1427 = vmul.f32 %v1426, %v1426
    %v1428 = vsel %vm515, %v1427, 0.0
    %1429 = vadd.xlane.f32.xlu0 %v1428
    %v1430 = vpop.xlane.xlu0 %1429
    %v1431 = vmul.f32 %v1430, %v519
    %v1432 = vadd.f32 %v1431, 1e-05
    %v1433 = vrsqrt.pop %v1432
    %v1434 = vmul.f32 %v1426, %v1433
    %v1435 = vmul.f32 %v1434, %v534
    %v1436 = vadd.f32 %v1435, %v541
    %1438 = vset.pattern.permute.xlu0 0
    %1439 = vperm.xlu0 %1438, %v1031
    %v1440 = vpop.permute.xlu0 %1439
    %1443 = vset.pattern.permute.xlu0 0
    %1444 = vperm.xlu0 %1443, %v1032
    %v1445 = vpop.permute.xlu0 %1444
    %v1448 = vrot.slane %v1436, 1
    %v1451 = vmul.f32 %v1440, %v1436
    %v1452 = vmul.f32 %v1445, %v1448
    %v1453 = vsub.f32 1.0, %v1031
    %v1454 = vsub.f32 1.0, %v1032
    %1456 = vset.pattern.permute.xlu0 0
    %1457 = vperm.xlu0 %1456, %v1453
    %v1458 = vpop.permute.xlu0 %1457
    %1461 = vset.pattern.permute.xlu0 0
    %1462 = vperm.xlu0 %1461, %v1454
    %v1463 = vpop.permute.xlu0 %1462
    %v1465 = vmul.f32 %v1458, %v1023
    %v1466 = vmul.f32 %v1463, %v1024
    %v1467 = vadd.f32 %v1451, %v1465
    %v1468 = vadd.f32 %v1452, %v1466
    %1469 = vst.msk [vmem:[#allocation4 + $0x2] sm:$0x1] %vm580, %v1451
    %1470 = vst.msk [vmem:[#allocation4 + $0xa] sm:$0x1] %vm580, %v1452
    %v1471 = vld [vmem:[%s0 + $0x3] sm:$0x1]
    %v1472 = vld [vmem:[%s0 + $0xb] sm:$0x1]
    %v1473 = vld [vmem:[%s1 + $0x3] sm:$0x1]
    %v1474 = vld [vmem:[%s1 + $0xb] sm:$0x1]
    %v1475 = vld [vmem:[%s2 + $0x3] sm:$0x1]
    %v1476 = vld [vmem:[%s2 + $0xb] sm:$0x1]
    %v1479 = vrot.slane %v1474, 7
    %v1480 = vsel %vm101, %v1479, %v1473
    %v1482 = vsel %vm104, %v1436, 0
    %1484 = vmatprep.subr.mxu0 0.0
    %1485 = vmatpush1.msra.mxu0 0.0
    %1486 = vmatprep.subr.mxu0 0.0
    %1487 = vmatpush1.msra.mxu0 0.0
    %1488 = vmatprep.subr.mxu0 0.0
    %1489 = vmatpush1.msra.mxu0 0.0
    %1490 = vmatprep.subr.mxu0 0.0
    %1491 = vmatpush1.msra.mxu0 0.0
    %1492 = vmatprep.subr.mxu0 0.0
    %1493 = vmatpush1.msra.mxu0 0.0
    %1494 = vmatprep.subr.mxu0 0.0
    %1495 = vmatpush1.msra.mxu0 0.0
    %1496 = vmatprep.subr.mxu0 0.0
    %1497 = vmatpush1.msra.mxu0 0.0
    %1498 = vmatprep.subr.mxu0 0.0
    %1499 = vmatpush1.msra.mxu0 0.0
    %1500 = vmatprep.subr.mxu0 0.0
    %1501 = vmatpush1.msra.mxu0 0.0
    %1502 = vmatprep.subr.mxu0 0.0
    %1503 = vmatpush1.msra.mxu0 0.0
    %1504 = vmatprep.subr.mxu0 0.0
    %1505 = vmatpush1.msra.mxu0 0.0
    %1506 = vmatprep.subr.mxu0 0.0
    %1507 = vmatpush1.msra.mxu0 0.0
    %1508 = vmatprep.subr.mxu0 0.0
    %1509 = vmatpush1.msra.mxu0 %v55
    %1510 = vmatprep.subr.mxu0 0.0
    %1511 = vmatpush1.msra.mxu0 %v54
    %1512 = vmatprep.subr.mxu0 0.0
    %1513 = vmatpush1.msra.mxu0 %v53
    %1514 = vmatprep.subr.mxu0 0.0
    %1515 = vmatpush1.msra.mxu0 %v52
    %1516 = vmatprep.subr.mxu0 0.0
    %1517 = vmatpush2.msra.mxu0 0.0
    %1518 = vmatprep.subr.mxu0 0.0
    %1519 = vmatpush2.msra.mxu0 0.0
    %1520 = vmatprep.subr.mxu0 0.0
    %1521 = vmatpush2.msra.mxu0 0.0
    %1522 = vmatprep.subr.mxu0 0.0
    %1523 = vmatpush2.msra.mxu0 0.0
    %1524 = vmatprep.subr.mxu0 0.0
    %1525 = vmatpush2.msra.mxu0 0.0
    %1526 = vmatprep.subr.mxu0 0.0
    %1527 = vmatpush2.msra.mxu0 0.0
    %1528 = vmatprep.subr.mxu0 0.0
    %1529 = vmatpush2.msra.mxu0 0.0
    %1530 = vmatprep.subr.mxu0 0.0
    %1531 = vmatpush2.msra.mxu0 0.0
    %1532 = vmatprep.subr.mxu0 0.0
    %1533 = vmatpush2.msra.mxu0 0.0
    %1534 = vmatprep.subr.mxu0 0.0
    %1535 = vmatpush2.msra.mxu0 0.0
    %1536 = vmatprep.subr.mxu0 0.0
    %1537 = vmatpush2.msra.mxu0 0.0
    %1538 = vmatprep.subr.mxu0 0.0
    %1539 = vmatpush2.msra.mxu0 0.0
    %1540 = vmatprep.subr.mxu0 0.0
    %1541 = vmatpush2.msra.mxu0 0.0
    %1542 = vmatprep.subr.mxu0 0.0
    %1543 = vmatpush2.msra.mxu0 0.0
    %1544 = vmatprep.subr.mxu0 0.0
    %1545 = vmatpush2.msra.mxu0 0.0
    %1546 = vmatprep.subr.mxu0 0.0
    %1547 = vmatpush2.msra.mxu0 0.0
    %1548 = vmatprep.mubr.f32.mxu0 0.0
    %1549 = vmatmul.mubr.f32.gmra.mxu0 %v1482
    %v1550 = vpop.f32.mrf.mxu0
    %v1551 = vadd.f32 %v1480, %v1550
    %v1552 = vpop.f32.mrf.mxu0
    %1553 = vdwg.mxu0
    %v1554 = vmax.f32 %v1551, 0.0
    %v1556 = vsel %vm185, %v1554, 0
    %1558 = vmatprep.subr.mxu0 0.0
    %1559 = vmatpush1.msra.mxu0 0.0
    %1560 = vmatprep.subr.mxu0 0.0
    %1561 = vmatpush1.msra.mxu0 0.0
    %1562 = vmatprep.subr.mxu0 0.0
    %1563 = vmatpush1.msra.mxu0 0.0
    %1564 = vmatprep.subr.mxu0 0.0
    %1565 = vmatpush1.msra.mxu0 0.0
    %1566 = vmatprep.subr.mxu0 0.0
    %1567 = vmatpush1.msra.mxu0 0.0
    %1568 = vmatprep.subr.mxu0 0.0
    %1569 = vmatpush1.msra.mxu0 0.0
    %1570 = vmatprep.subr.mxu0 0.0
    %1571 = vmatpush1.msra.mxu0 0.0
    %1572 = vmatprep.subr.mxu0 0.0
    %1573 = vmatpush1.msra.mxu0 0.0
    %1574 = vmatprep.subr.mxu0 0.0
    %1575 = vmatpush1.msra.mxu0 0.0
    %1576 = vmatprep.subr.mxu0 0.0
    %1577 = vmatpush1.msra.mxu0 0.0
    %1578 = vmatprep.subr.mxu0 0.0
    %1579 = vmatpush1.msra.mxu0 %v61
    %1580 = vmatprep.subr.mxu0 0.0
    %1581 = vmatpush1.msra.mxu0 %v60
    %1582 = vmatprep.subr.mxu0 0.0
    %1583 = vmatpush1.msra.mxu0 %v59
    %1584 = vmatprep.subr.mxu0 0.0
    %1585 = vmatpush1.msra.mxu0 %v58
    %1586 = vmatprep.subr.mxu0 0.0
    %1587 = vmatpush1.msra.mxu0 %v57
    %1588 = vmatprep.subr.mxu0 0.0
    %1589 = vmatpush1.msra.mxu0 %v56
    %1590 = vmatprep.subr.mxu0 0.0
    %1591 = vmatpush2.msra.mxu0 0.0
    %1592 = vmatprep.subr.mxu0 0.0
    %1593 = vmatpush2.msra.mxu0 0.0
    %1594 = vmatprep.subr.mxu0 0.0
    %1595 = vmatpush2.msra.mxu0 0.0
    %1596 = vmatprep.subr.mxu0 0.0
    %1597 = vmatpush2.msra.mxu0 0.0
    %1598 = vmatprep.subr.mxu0 0.0
    %1599 = vmatpush2.msra.mxu0 0.0
    %1600 = vmatprep.subr.mxu0 0.0
    %1601 = vmatpush2.msra.mxu0 0.0
    %1602 = vmatprep.subr.mxu0 0.0
    %1603 = vmatpush2.msra.mxu0 0.0
    %1604 = vmatprep.subr.mxu0 0.0
    %1605 = vmatpush2.msra.mxu0 0.0
    %1606 = vmatprep.subr.mxu0 0.0
    %1607 = vmatpush2.msra.mxu0 0.0
    %1608 = vmatprep.subr.mxu0 0.0
    %1609 = vmatpush2.msra.mxu0 0.0
    %1610 = vmatprep.subr.mxu0 0.0
    %1611 = vmatpush2.msra.mxu0 0.0
    %1612 = vmatprep.subr.mxu0 0.0
    %1613 = vmatpush2.msra.mxu0 0.0
    %1614 = vmatprep.subr.mxu0 0.0
    %1615 = vmatpush2.msra.mxu0 0.0
    %1616 = vmatprep.subr.mxu0 0.0
    %1617 = vmatpush2.msra.mxu0 0.0
    %1618 = vmatprep.subr.mxu0 0.0
    %1619 = vmatpush2.msra.mxu0 0.0
    %1620 = vmatprep.subr.mxu0 0.0
    %1621 = vmatpush2.msra.mxu0 0.0
    %1622 = vmatprep.mubr.f32.mxu0 0.0
    %1623 = vmatmul.mubr.f32.gmra.mxu0 %v1556
    %v1624 = vpop.f32.mrf.mxu0
    %v1625 = vadd.f32 %v183, %v1624
    %v1626 = vpop.f32.mrf.mxu0
    %1627 = vdwg.mxu0
    %v1628 = vxor.u32 %v1625, 2147483648
    %v1629 = vmul.f32 %v1628, 1.442695
    %v1630 = vpow.pop %v1629
    %v1631 = vadd.f32 %v1630, 1.0
    %v1632 = vrcp.pop %v1631
    %v1633 = vmul.f32 1.0, %v1632
    %1634 = vmatprep.subr.mxu0 0.0
    %1635 = vmatpush1.msra.mxu0 0.0
    %1636 = vmatprep.subr.mxu0 0.0
    %1637 = vmatpush1.msra.mxu0 0.0
    %1638 = vmatprep.subr.mxu0 0.0
    %1639 = vmatpush1.msra.mxu0 0.0
    %1640 = vmatprep.subr.mxu0 0.0
    %1641 = vmatpush1.msra.mxu0 0.0
    %1642 = vmatprep.subr.mxu0 0.0
    %1643 = vmatpush1.msra.mxu0 0.0
    %1644 = vmatprep.subr.mxu0 0.0
    %1645 = vmatpush1.msra.mxu0 0.0
    %1646 = vmatprep.subr.mxu0 0.0
    %1647 = vmatpush1.msra.mxu0 0.0
    %1648 = vmatprep.subr.mxu0 0.0
    %1649 = vmatpush1.msra.mxu0 0.0
    %1650 = vmatprep.subr.mxu0 0.0
    %1651 = vmatpush1.msra.mxu0 0.0
    %1652 = vmatprep.subr.mxu0 0.0
    %1653 = vmatpush1.msra.mxu0 0.0
    %1654 = vmatprep.subr.mxu0 0.0
    %1655 = vmatpush1.msra.mxu0 %v68
    %1656 = vmatprep.subr.mxu0 0.0
    %1657 = vmatpush1.msra.mxu0 %v67
    %1658 = vmatprep.subr.mxu0 0.0
    %1659 = vmatpush1.msra.mxu0 %v66
    %1660 = vmatprep.subr.mxu0 0.0
    %1661 = vmatpush1.msra.mxu0 %v65
    %1662 = vmatprep.subr.mxu0 0.0
    %1663 = vmatpush1.msra.mxu0 %v64
    %1664 = vmatprep.subr.mxu0 0.0
    %1665 = vmatpush1.msra.mxu0 %v63
    %1666 = vmatprep.subr.mxu0 0.0
    %1667 = vmatpush2.msra.mxu0 0.0
    %1668 = vmatprep.subr.mxu0 0.0
    %1669 = vmatpush2.msra.mxu0 0.0
    %1670 = vmatprep.subr.mxu0 0.0
    %1671 = vmatpush2.msra.mxu0 0.0
    %1672 = vmatprep.subr.mxu0 0.0
    %1673 = vmatpush2.msra.mxu0 0.0
    %1674 = vmatprep.subr.mxu0 0.0
    %1675 = vmatpush2.msra.mxu0 0.0
    %1676 = vmatprep.subr.mxu0 0.0
    %1677 = vmatpush2.msra.mxu0 0.0
    %1678 = vmatprep.subr.mxu0 0.0
    %1679 = vmatpush2.msra.mxu0 0.0
    %1680 = vmatprep.subr.mxu0 0.0
    %1681 = vmatpush2.msra.mxu0 0.0
    %1682 = vmatprep.subr.mxu0 0.0
    %1683 = vmatpush2.msra.mxu0 0.0
    %1684 = vmatprep.subr.mxu0 0.0
    %1685 = vmatpush2.msra.mxu0 0.0
    %1686 = vmatprep.subr.mxu0 0.0
    %1687 = vmatpush2.msra.mxu0 0.0
    %1688 = vmatprep.subr.mxu0 0.0
    %1689 = vmatpush2.msra.mxu0 0.0
    %1690 = vmatprep.subr.mxu0 0.0
    %1691 = vmatpush2.msra.mxu0 0.0
    %1692 = vmatprep.subr.mxu0 0.0
    %1693 = vmatpush2.msra.mxu0 0.0
    %1694 = vmatprep.subr.mxu0 0.0
    %1695 = vmatpush2.msra.mxu0 0.0
    %1696 = vmatprep.subr.mxu0 0.0
    %1697 = vmatpush2.msra.mxu0 0.0
    %1698 = vmatprep.mubr.f32.mxu0 0.0
    %1699 = vmatmul.mubr.f32.gmra.mxu0 %v1556
    %v1700 = vpop.f32.mrf.mxu0
    %v1701 = vadd.f32 %v269, %v1700
    %v1702 = vpop.f32.mrf.mxu0
    %1703 = vdwg.mxu0
    %v1704 = vxor.u32 %v1701, 2147483648
    %v1705 = vmul.f32 %v1704, 1.442695
    %v1706 = vpow.pop %v1705
    %v1707 = vadd.f32 %v1706, 1.0
    %v1708 = vrcp.pop %v1707
    %v1709 = vmul.f32 1.0, %v1708
    %1710 = vmatprep.subr.mxu0 0.0
    %1711 = vmatpush1.msra.mxu0 0.0
    %1712 = vmatprep.subr.mxu0 0.0
    %1713 = vmatpush1.msra.mxu0 0.0
    %1714 = vmatprep.subr.mxu0 0.0
    %1715 = vmatpush1.msra.mxu0 0.0
    %1716 = vmatprep.subr.mxu0 0.0
    %1717 = vmatpush1.msra.mxu0 0.0
    %1718 = vmatprep.subr.mxu0 0.0
    %1719 = vmatpush1.msra.mxu0 0.0
    %1720 = vmatprep.subr.mxu0 0.0
    %1721 = vmatpush1.msra.mxu0 0.0
    %1722 = vmatprep.subr.mxu0 0.0
    %1723 = vmatpush1.msra.mxu0 0.0
    %1724 = vmatprep.subr.mxu0 0.0
    %1725 = vmatpush1.msra.mxu0 0.0
    %1726 = vmatprep.subr.mxu0 0.0
    %1727 = vmatpush1.msra.mxu0 0.0
    %1728 = vmatprep.subr.mxu0 0.0
    %1729 = vmatpush1.msra.mxu0 0.0
    %1730 = vmatprep.subr.mxu0 0.0
    %1731 = vmatpush1.msra.mxu0 %v75
    %1732 = vmatprep.subr.mxu0 0.0
    %1733 = vmatpush1.msra.mxu0 %v74
    %1734 = vmatprep.subr.mxu0 0.0
    %1735 = vmatpush1.msra.mxu0 %v73
    %1736 = vmatprep.subr.mxu0 0.0
    %1737 = vmatpush1.msra.mxu0 %v72
    %1738 = vmatprep.subr.mxu0 0.0
    %1739 = vmatpush1.msra.mxu0 %v71
    %1740 = vmatprep.subr.mxu0 0.0
    %1741 = vmatpush1.msra.mxu0 %v70
    %1742 = vmatprep.subr.mxu0 0.0
    %1743 = vmatpush2.msra.mxu0 0.0
    %1744 = vmatprep.subr.mxu0 0.0
    %1745 = vmatpush2.msra.mxu0 0.0
    %1746 = vmatprep.subr.mxu0 0.0
    %1747 = vmatpush2.msra.mxu0 0.0
    %1748 = vmatprep.subr.mxu0 0.0
    %1749 = vmatpush2.msra.mxu0 0.0
    %1750 = vmatprep.subr.mxu0 0.0
    %1751 = vmatpush2.msra.mxu0 0.0
    %1752 = vmatprep.subr.mxu0 0.0
    %1753 = vmatpush2.msra.mxu0 0.0
    %1754 = vmatprep.subr.mxu0 0.0
    %1755 = vmatpush2.msra.mxu0 0.0
    %1756 = vmatprep.subr.mxu0 0.0
    %1757 = vmatpush2.msra.mxu0 0.0
    %1758 = vmatprep.subr.mxu0 0.0
    %1759 = vmatpush2.msra.mxu0 0.0
    %1760 = vmatprep.subr.mxu0 0.0
    %1761 = vmatpush2.msra.mxu0 0.0
    %1762 = vmatprep.subr.mxu0 0.0
    %1763 = vmatpush2.msra.mxu0 0.0
    %1764 = vmatprep.subr.mxu0 0.0
    %1765 = vmatpush2.msra.mxu0 0.0
    %1766 = vmatprep.subr.mxu0 0.0
    %1767 = vmatpush2.msra.mxu0 0.0
    %1768 = vmatprep.subr.mxu0 0.0
    %1769 = vmatpush2.msra.mxu0 0.0
    %1770 = vmatprep.subr.mxu0 0.0
    %1771 = vmatpush2.msra.mxu0 0.0
    %1772 = vmatprep.subr.mxu0 0.0
    %1773 = vmatpush2.msra.mxu0 0.0
    %1774 = vmatprep.mubr.f32.mxu0 0.0
    %1775 = vmatmul.mubr.f32.gmra.mxu0 %v1556
    %v1776 = vpop.f32.mrf.mxu0
    %v1777 = vadd.f32 %v351, %v1776
    %v1778 = vpop.f32.mrf.mxu0
    %1779 = vdwg.mxu0
    %v1780 = vxor.u32 %v1777, 2147483648
    %v1781 = vmul.f32 %v1780, 1.442695
    %v1782 = vpow.pop %v1781
    %v1783 = vadd.f32 %v1782, 1.0
    %v1784 = vrcp.pop %v1783
    %v1785 = vmul.f32 1.0, %v1784
    %1786 = vmatprep.subr.mxu0 0.0
    %1787 = vmatpush1.msra.mxu0 0.0
    %1788 = vmatprep.subr.mxu0 0.0
    %1789 = vmatpush1.msra.mxu0 0.0
    %1790 = vmatprep.subr.mxu0 0.0
    %1791 = vmatpush1.msra.mxu0 0.0
    %1792 = vmatprep.subr.mxu0 0.0
    %1793 = vmatpush1.msra.mxu0 0.0
    %1794 = vmatprep.subr.mxu0 0.0
    %1795 = vmatpush1.msra.mxu0 0.0
    %1796 = vmatprep.subr.mxu0 0.0
    %1797 = vmatpush1.msra.mxu0 0.0
    %1798 = vmatprep.subr.mxu0 0.0
    %1799 = vmatpush1.msra.mxu0 0.0
    %1800 = vmatprep.subr.mxu0 0.0
    %1801 = vmatpush1.msra.mxu0 0.0
    %1802 = vmatprep.subr.mxu0 0.0
    %1803 = vmatpush1.msra.mxu0 0.0
    %1804 = vmatprep.subr.mxu0 0.0
    %1805 = vmatpush1.msra.mxu0 0.0
    %1806 = vmatprep.subr.mxu0 0.0
    %1807 = vmatpush1.msra.mxu0 %v82
    %1808 = vmatprep.subr.mxu0 0.0
    %1809 = vmatpush1.msra.mxu0 %v81
    %1810 = vmatprep.subr.mxu0 0.0
    %1811 = vmatpush1.msra.mxu0 %v80
    %1812 = vmatprep.subr.mxu0 0.0
    %1813 = vmatpush1.msra.mxu0 %v79
    %1814 = vmatprep.subr.mxu0 0.0
    %1815 = vmatpush1.msra.mxu0 %v78
    %1816 = vmatprep.subr.mxu0 0.0
    %1817 = vmatpush1.msra.mxu0 %v77
    %1818 = vmatprep.subr.mxu0 0.0
    %1819 = vmatpush2.msra.mxu0 0.0
    %1820 = vmatprep.subr.mxu0 0.0
    %1821 = vmatpush2.msra.mxu0 0.0
    %1822 = vmatprep.subr.mxu0 0.0
    %1823 = vmatpush2.msra.mxu0 0.0
    %1824 = vmatprep.subr.mxu0 0.0
    %1825 = vmatpush2.msra.mxu0 0.0
    %1826 = vmatprep.subr.mxu0 0.0
    %1827 = vmatpush2.msra.mxu0 0.0
    %1828 = vmatprep.subr.mxu0 0.0
    %1829 = vmatpush2.msra.mxu0 0.0
    %1830 = vmatprep.subr.mxu0 0.0
    %1831 = vmatpush2.msra.mxu0 0.0
    %1832 = vmatprep.subr.mxu0 0.0
    %1833 = vmatpush2.msra.mxu0 0.0
    %1834 = vmatprep.subr.mxu0 0.0
    %1835 = vmatpush2.msra.mxu0 0.0
    %1836 = vmatprep.subr.mxu0 0.0
    %1837 = vmatpush2.msra.mxu0 0.0
    %1838 = vmatprep.subr.mxu0 0.0
    %1839 = vmatpush2.msra.mxu0 0.0
    %1840 = vmatprep.subr.mxu0 0.0
    %1841 = vmatpush2.msra.mxu0 0.0
    %1842 = vmatprep.subr.mxu0 0.0
    %1843 = vmatpush2.msra.mxu0 0.0
    %1844 = vmatprep.subr.mxu0 0.0
    %1845 = vmatpush2.msra.mxu0 0.0
    %1846 = vmatprep.subr.mxu0 0.0
    %1847 = vmatpush2.msra.mxu0 0.0
    %1848 = vmatprep.subr.mxu0 0.0
    %1849 = vmatpush2.msra.mxu0 0.0
    %1850 = vmatprep.mubr.f32.mxu0 0.0
    %1851 = vmatmul.mubr.f32.gmra.mxu0 %v1556
    %v1852 = vpop.f32.mrf.mxu0
    %v1853 = vadd.f32 %v433, %v1852
    %v1854 = vpop.f32.mrf.mxu0
    %1855 = vdwg.mxu0
    %v1856 = vmul.f32 %v1633, %v1436
    %v1859 = vrot.slane %v1472, 7
    %v1860 = vsel %vm101, %v1859, %v1471
    %v1862 = vmul.f32 %v1709, %v1860
    %v1863 = vadd.f32 %v1856, %v1862
    %v1864 = vmul.f32 %v1785, %v1853
    %v1865 = vadd.f32 %v1863, %v1864
    %v1866 = vsel %vm515, %v1865, 0.0
    %1867 = vadd.xlane.f32.xlu0 %v1866
    %v1868 = vpop.xlane.xlu0 %1867
    %v1869 = vmul.f32 %v1868, %v519
    %v1870 = vsub.f32 %v1865, %v1869
    %v1871 = vmul.f32 %v1870, %v1870
    %v1872 = vsel %vm515, %v1871, 0.0
    %1873 = vadd.xlane.f32.xlu0 %v1872
    %v1874 = vpop.xlane.xlu0 %1873
    %v1875 = vmul.f32 %v1874, %v519
    %v1876 = vadd.f32 %v1875, 1e-05
    %v1877 = vrsqrt.pop %v1876
    %v1878 = vmul.f32 %v1870, %v1877
    %v1879 = vmul.f32 %v1878, %v534
    %v1880 = vadd.f32 %v1879, %v541
    %1882 = vset.pattern.permute.xlu0 0
    %1883 = vperm.xlu0 %1882, %v1475
    %v1884 = vpop.permute.xlu0 %1883
    %1887 = vset.pattern.permute.xlu0 0
    %1888 = vperm.xlu0 %1887, %v1476
    %v1889 = vpop.permute.xlu0 %1888
    %v1892 = vrot.slane %v1880, 1
    %v1895 = vmul.f32 %v1884, %v1880
    %v1896 = vmul.f32 %v1889, %v1892
    %v1897 = vsub.f32 1.0, %v1475
    %v1898 = vsub.f32 1.0, %v1476
    %1900 = vset.pattern.permute.xlu0 0
    %1901 = vperm.xlu0 %1900, %v1897
    %v1902 = vpop.permute.xlu0 %1901
    %1905 = vset.pattern.permute.xlu0 0
    %1906 = vperm.xlu0 %1905, %v1898
    %v1907 = vpop.permute.xlu0 %1906
    %v1909 = vmul.f32 %v1902, %v1467
    %v1910 = vmul.f32 %v1907, %v1468
    %v1911 = vadd.f32 %v1895, %v1909
    %v1912 = vadd.f32 %v1896, %v1910
    %1913 = vst.msk [vmem:[#allocation4 + $0x3] sm:$0x1] %vm580, %v1895
    %1914 = vst.msk [vmem:[#allocation4 + $0xb] sm:$0x1] %vm580, %v1896
    %v1915 = vld [vmem:[%s0 + $0x4] sm:$0x1]
    %v1916 = vld [vmem:[%s0 + $0xc] sm:$0x1]
    %v1917 = vld [vmem:[%s1 + $0x4] sm:$0x1]
    %v1918 = vld [vmem:[%s1 + $0xc] sm:$0x1]
    %v1919 = vld [vmem:[%s2 + $0x4] sm:$0x1]
    %v1920 = vld [vmem:[%s2 + $0xc] sm:$0x1]
    %v1923 = vrot.slane %v1918, 7
    %v1924 = vsel %vm101, %v1923, %v1917
    %v1926 = vsel %vm104, %v1880, 0
    %1928 = vmatprep.subr.mxu0 0.0
    %1929 = vmatpush1.msra.mxu0 0.0
    %1930 = vmatprep.subr.mxu0 0.0
    %1931 = vmatpush1.msra.mxu0 0.0
    %1932 = vmatprep.subr.mxu0 0.0
    %1933 = vmatpush1.msra.mxu0 0.0
    %1934 = vmatprep.subr.mxu0 0.0
    %1935 = vmatpush1.msra.mxu0 0.0
    %1936 = vmatprep.subr.mxu0 0.0
    %1937 = vmatpush1.msra.mxu0 0.0
    %1938 = vmatprep.subr.mxu0 0.0
    %1939 = vmatpush1.msra.mxu0 0.0
    %1940 = vmatprep.subr.mxu0 0.0
    %1941 = vmatpush1.msra.mxu0 0.0
    %1942 = vmatprep.subr.mxu0 0.0
    %1943 = vmatpush1.msra.mxu0 0.0
    %1944 = vmatprep.subr.mxu0 0.0
    %1945 = vmatpush1.msra.mxu0 0.0
    %1946 = vmatprep.subr.mxu0 0.0
    %1947 = vmatpush1.msra.mxu0 0.0
    %1948 = vmatprep.subr.mxu0 0.0
    %1949 = vmatpush1.msra.mxu0 0.0
    %1950 = vmatprep.subr.mxu0 0.0
    %1951 = vmatpush1.msra.mxu0 0.0
    %1952 = vmatprep.subr.mxu0 0.0
    %1953 = vmatpush1.msra.mxu0 %v55
    %1954 = vmatprep.subr.mxu0 0.0
    %1955 = vmatpush1.msra.mxu0 %v54
    %1956 = vmatprep.subr.mxu0 0.0
    %1957 = vmatpush1.msra.mxu0 %v53
    %1958 = vmatprep.subr.mxu0 0.0
    %1959 = vmatpush1.msra.mxu0 %v52
    %1960 = vmatprep.subr.mxu0 0.0
    %1961 = vmatpush2.msra.mxu0 0.0
    %1962 = vmatprep.subr.mxu0 0.0
    %1963 = vmatpush2.msra.mxu0 0.0
    %1964 = vmatprep.subr.mxu0 0.0
    %1965 = vmatpush2.msra.mxu0 0.0
    %1966 = vmatprep.subr.mxu0 0.0
    %1967 = vmatpush2.msra.mxu0 0.0
    %1968 = vmatprep.subr.mxu0 0.0
    %1969 = vmatpush2.msra.mxu0 0.0
    %1970 = vmatprep.subr.mxu0 0.0
    %1971 = vmatpush2.msra.mxu0 0.0
    %1972 = vmatprep.subr.mxu0 0.0
    %1973 = vmatpush2.msra.mxu0 0.0
    %1974 = vmatprep.subr.mxu0 0.0
    %1975 = vmatpush2.msra.mxu0 0.0
    %1976 = vmatprep.subr.mxu0 0.0
    %1977 = vmatpush2.msra.mxu0 0.0
    %1978 = vmatprep.subr.mxu0 0.0
    %1979 = vmatpush2.msra.mxu0 0.0
    %1980 = vmatprep.subr.mxu0 0.0
    %1981 = vmatpush2.msra.mxu0 0.0
    %1982 = vmatprep.subr.mxu0 0.0
    %1983 = vmatpush2.msra.mxu0 0.0
    %1984 = vmatprep.subr.mxu0 0.0
    %1985 = vmatpush2.msra.mxu0 0.0
    %1986 = vmatprep.subr.mxu0 0.0
    %1987 = vmatpush2.msra.mxu0 0.0
    %1988 = vmatprep.subr.mxu0 0.0
    %1989 = vmatpush2.msra.mxu0 0.0
    %1990 = vmatprep.subr.mxu0 0.0
    %1991 = vmatpush2.msra.mxu0 0.0
    %1992 = vmatprep.mubr.f32.mxu0 0.0
    %1993 = vmatmul.mubr.f32.gmra.mxu0 %v1926
    %v1994 = vpop.f32.mrf.mxu0
    %v1995 = vadd.f32 %v1924, %v1994
    %v1996 = vpop.f32.mrf.mxu0
    %1997 = vdwg.mxu0
    %v1998 = vmax.f32 %v1995, 0.0
    %v2000 = vsel %vm185, %v1998, 0
    %2002 = vmatprep.subr.mxu0 0.0
    %2003 = vmatpush1.msra.mxu0 0.0
    %2004 = vmatprep.subr.mxu0 0.0
    %2005 = vmatpush1.msra.mxu0 0.0
    %2006 = vmatprep.subr.mxu0 0.0
    %2007 = vmatpush1.msra.mxu0 0.0
    %2008 = vmatprep.subr.mxu0 0.0
    %2009 = vmatpush1.msra.mxu0 0.0
    %2010 = vmatprep.subr.mxu0 0.0
    %2011 = vmatpush1.msra.mxu0 0.0
    %2012 = vmatprep.subr.mxu0 0.0
    %2013 = vmatpush1.msra.mxu0 0.0
    %2014 = vmatprep.subr.mxu0 0.0
    %2015 = vmatpush1.msra.mxu0 0.0
    %2016 = vmatprep.subr.mxu0 0.0
    %2017 = vmatpush1.msra.mxu0 0.0
    %2018 = vmatprep.subr.mxu0 0.0
    %2019 = vmatpush1.msra.mxu0 0.0
    %2020 = vmatprep.subr.mxu0 0.0
    %2021 = vmatpush1.msra.mxu0 0.0
    %2022 = vmatprep.subr.mxu0 0.0
    %2023 = vmatpush1.msra.mxu0 %v61
    %2024 = vmatprep.subr.mxu0 0.0
    %2025 = vmatpush1.msra.mxu0 %v60
    %2026 = vmatprep.subr.mxu0 0.0
    %2027 = vmatpush1.msra.mxu0 %v59
    %2028 = vmatprep.subr.mxu0 0.0
    %2029 = vmatpush1.msra.mxu0 %v58
    %2030 = vmatprep.subr.mxu0 0.0
    %2031 = vmatpush1.msra.mxu0 %v57
    %2032 = vmatprep.subr.mxu0 0.0
    %2033 = vmatpush1.msra.mxu0 %v56
    %2034 = vmatprep.subr.mxu0 0.0
    %2035 = vmatpush2.msra.mxu0 0.0
    %2036 = vmatprep.subr.mxu0 0.0
    %2037 = vmatpush2.msra.mxu0 0.0
    %2038 = vmatprep.subr.mxu0 0.0
    %2039 = vmatpush2.msra.mxu0 0.0
    %2040 = vmatprep.subr.mxu0 0.0
    %2041 = vmatpush2.msra.mxu0 0.0
    %2042 = vmatprep.subr.mxu0 0.0
    %2043 = vmatpush2.msra.mxu0 0.0
    %2044 = vmatprep.subr.mxu0 0.0
    %2045 = vmatpush2.msra.mxu0 0.0
    %2046 = vmatprep.subr.mxu0 0.0
    %2047 = vmatpush2.msra.mxu0 0.0
    %2048 = vmatprep.subr.mxu0 0.0
    %2049 = vmatpush2.msra.mxu0 0.0
    %2050 = vmatprep.subr.mxu0 0.0
    %2051 = vmatpush2.msra.mxu0 0.0
    %2052 = vmatprep.subr.mxu0 0.0
    %2053 = vmatpush2.msra.mxu0 0.0
    %2054 = vmatprep.subr.mxu0 0.0
    %2055 = vmatpush2.msra.mxu0 0.0
    %2056 = vmatprep.subr.mxu0 0.0
    %2057 = vmatpush2.msra.mxu0 0.0
    %2058 = vmatprep.subr.mxu0 0.0
    %2059 = vmatpush2.msra.mxu0 0.0
    %2060 = vmatprep.subr.mxu0 0.0
    %2061 = vmatpush2.msra.mxu0 0.0
    %2062 = vmatprep.subr.mxu0 0.0
    %2063 = vmatpush2.msra.mxu0 0.0
    %2064 = vmatprep.subr.mxu0 0.0
    %2065 = vmatpush2.msra.mxu0 0.0
    %2066 = vmatprep.mubr.f32.mxu0 0.0
    %2067 = vmatmul.mubr.f32.gmra.mxu0 %v2000
    %v2068 = vpop.f32.mrf.mxu0
    %v2069 = vadd.f32 %v183, %v2068
    %v2070 = vpop.f32.mrf.mxu0
    %2071 = vdwg.mxu0
    %v2072 = vxor.u32 %v2069, 2147483648
    %v2073 = vmul.f32 %v2072, 1.442695
    %v2074 = vpow.pop %v2073
    %v2075 = vadd.f32 %v2074, 1.0
    %v2076 = vrcp.pop %v2075
    %v2077 = vmul.f32 1.0, %v2076
    %2078 = vmatprep.subr.mxu0 0.0
    %2079 = vmatpush1.msra.mxu0 0.0
    %2080 = vmatprep.subr.mxu0 0.0
    %2081 = vmatpush1.msra.mxu0 0.0
    %2082 = vmatprep.subr.mxu0 0.0
    %2083 = vmatpush1.msra.mxu0 0.0
    %2084 = vmatprep.subr.mxu0 0.0
    %2085 = vmatpush1.msra.mxu0 0.0
    %2086 = vmatprep.subr.mxu0 0.0
    %2087 = vmatpush1.msra.mxu0 0.0
    %2088 = vmatprep.subr.mxu0 0.0
    %2089 = vmatpush1.msra.mxu0 0.0
    %2090 = vmatprep.subr.mxu0 0.0
    %2091 = vmatpush1.msra.mxu0 0.0
    %2092 = vmatprep.subr.mxu0 0.0
    %2093 = vmatpush1.msra.mxu0 0.0
    %2094 = vmatprep.subr.mxu0 0.0
    %2095 = vmatpush1.msra.mxu0 0.0
    %2096 = vmatprep.subr.mxu0 0.0
    %2097 = vmatpush1.msra.mxu0 0.0
    %2098 = vmatprep.subr.mxu0 0.0
    %2099 = vmatpush1.msra.mxu0 %v68
    %2100 = vmatprep.subr.mxu0 0.0
    %2101 = vmatpush1.msra.mxu0 %v67
    %2102 = vmatprep.subr.mxu0 0.0
    %2103 = vmatpush1.msra.mxu0 %v66
    %2104 = vmatprep.subr.mxu0 0.0
    %2105 = vmatpush1.msra.mxu0 %v65
    %2106 = vmatprep.subr.mxu0 0.0
    %2107 = vmatpush1.msra.mxu0 %v64
    %2108 = vmatprep.subr.mxu0 0.0
    %2109 = vmatpush1.msra.mxu0 %v63
    %2110 = vmatprep.subr.mxu0 0.0
    %2111 = vmatpush2.msra.mxu0 0.0
    %2112 = vmatprep.subr.mxu0 0.0
    %2113 = vmatpush2.msra.mxu0 0.0
    %2114 = vmatprep.subr.mxu0 0.0
    %2115 = vmatpush2.msra.mxu0 0.0
    %2116 = vmatprep.subr.mxu0 0.0
    %2117 = vmatpush2.msra.mxu0 0.0
    %2118 = vmatprep.subr.mxu0 0.0
    %2119 = vmatpush2.msra.mxu0 0.0
    %2120 = vmatprep.subr.mxu0 0.0
    %2121 = vmatpush2.msra.mxu0 0.0
    %2122 = vmatprep.subr.mxu0 0.0
    %2123 = vmatpush2.msra.mxu0 0.0
    %2124 = vmatprep.subr.mxu0 0.0
    %2125 = vmatpush2.msra.mxu0 0.0
    %2126 = vmatprep.subr.mxu0 0.0
    %2127 = vmatpush2.msra.mxu0 0.0
    %2128 = vmatprep.subr.mxu0 0.0
    %2129 = vmatpush2.msra.mxu0 0.0
    %2130 = vmatprep.subr.mxu0 0.0
    %2131 = vmatpush2.msra.mxu0 0.0
    %2132 = vmatprep.subr.mxu0 0.0
    %2133 = vmatpush2.msra.mxu0 0.0
    %2134 = vmatprep.subr.mxu0 0.0
    %2135 = vmatpush2.msra.mxu0 0.0
    %2136 = vmatprep.subr.mxu0 0.0
    %2137 = vmatpush2.msra.mxu0 0.0
    %2138 = vmatprep.subr.mxu0 0.0
    %2139 = vmatpush2.msra.mxu0 0.0
    %2140 = vmatprep.subr.mxu0 0.0
    %2141 = vmatpush2.msra.mxu0 0.0
    %2142 = vmatprep.mubr.f32.mxu0 0.0
    %2143 = vmatmul.mubr.f32.gmra.mxu0 %v2000
    %v2144 = vpop.f32.mrf.mxu0
    %v2145 = vadd.f32 %v269, %v2144
    %v2146 = vpop.f32.mrf.mxu0
    %2147 = vdwg.mxu0
    %v2148 = vxor.u32 %v2145, 2147483648
    %v2149 = vmul.f32 %v2148, 1.442695
    %v2150 = vpow.pop %v2149
    %v2151 = vadd.f32 %v2150, 1.0
    %v2152 = vrcp.pop %v2151
    %v2153 = vmul.f32 1.0, %v2152
    %2154 = vmatprep.subr.mxu0 0.0
    %2155 = vmatpush1.msra.mxu0 0.0
    %2156 = vmatprep.subr.mxu0 0.0
    %2157 = vmatpush1.msra.mxu0 0.0
    %2158 = vmatprep.subr.mxu0 0.0
    %2159 = vmatpush1.msra.mxu0 0.0
    %2160 = vmatprep.subr.mxu0 0.0
    %2161 = vmatpush1.msra.mxu0 0.0
    %2162 = vmatprep.subr.mxu0 0.0
    %2163 = vmatpush1.msra.mxu0 0.0
    %2164 = vmatprep.subr.mxu0 0.0
    %2165 = vmatpush1.msra.mxu0 0.0
    %2166 = vmatprep.subr.mxu0 0.0
    %2167 = vmatpush1.msra.mxu0 0.0
    %2168 = vmatprep.subr.mxu0 0.0
    %2169 = vmatpush1.msra.mxu0 0.0
    %2170 = vmatprep.subr.mxu0 0.0
    %2171 = vmatpush1.msra.mxu0 0.0
    %2172 = vmatprep.subr.mxu0 0.0
    %2173 = vmatpush1.msra.mxu0 0.0
    %2174 = vmatprep.subr.mxu0 0.0
    %2175 = vmatpush1.msra.mxu0 %v75
    %2176 = vmatprep.subr.mxu0 0.0
    %2177 = vmatpush1.msra.mxu0 %v74
    %2178 = vmatprep.subr.mxu0 0.0
    %2179 = vmatpush1.msra.mxu0 %v73
    %2180 = vmatprep.subr.mxu0 0.0
    %2181 = vmatpush1.msra.mxu0 %v72
    %2182 = vmatprep.subr.mxu0 0.0
    %2183 = vmatpush1.msra.mxu0 %v71
    %2184 = vmatprep.subr.mxu0 0.0
    %2185 = vmatpush1.msra.mxu0 %v70
    %2186 = vmatprep.subr.mxu0 0.0
    %2187 = vmatpush2.msra.mxu0 0.0
    %2188 = vmatprep.subr.mxu0 0.0
    %2189 = vmatpush2.msra.mxu0 0.0
    %2190 = vmatprep.subr.mxu0 0.0
    %2191 = vmatpush2.msra.mxu0 0.0
    %2192 = vmatprep.subr.mxu0 0.0
    %2193 = vmatpush2.msra.mxu0 0.0
    %2194 = vmatprep.subr.mxu0 0.0
    %2195 = vmatpush2.msra.mxu0 0.0
    %2196 = vmatprep.subr.mxu0 0.0
    %2197 = vmatpush2.msra.mxu0 0.0
    %2198 = vmatprep.subr.mxu0 0.0
    %2199 = vmatpush2.msra.mxu0 0.0
    %2200 = vmatprep.subr.mxu0 0.0
    %2201 = vmatpush2.msra.mxu0 0.0
    %2202 = vmatprep.subr.mxu0 0.0
    %2203 = vmatpush2.msra.mxu0 0.0
    %2204 = vmatprep.subr.mxu0 0.0
    %2205 = vmatpush2.msra.mxu0 0.0
    %2206 = vmatprep.subr.mxu0 0.0
    %2207 = vmatpush2.msra.mxu0 0.0
    %2208 = vmatprep.subr.mxu0 0.0
    %2209 = vmatpush2.msra.mxu0 0.0
    %2210 = vmatprep.subr.mxu0 0.0
    %2211 = vmatpush2.msra.mxu0 0.0
    %2212 = vmatprep.subr.mxu0 0.0
    %2213 = vmatpush2.msra.mxu0 0.0
    %2214 = vmatprep.subr.mxu0 0.0
    %2215 = vmatpush2.msra.mxu0 0.0
    %2216 = vmatprep.subr.mxu0 0.0
    %2217 = vmatpush2.msra.mxu0 0.0
    %2218 = vmatprep.mubr.f32.mxu0 0.0
    %2219 = vmatmul.mubr.f32.gmra.mxu0 %v2000
    %v2220 = vpop.f32.mrf.mxu0
    %v2221 = vadd.f32 %v351, %v2220
    %v2222 = vpop.f32.mrf.mxu0
    %2223 = vdwg.mxu0
    %v2224 = vxor.u32 %v2221, 2147483648
    %v2225 = vmul.f32 %v2224, 1.442695
    %v2226 = vpow.pop %v2225
    %v2227 = vadd.f32 %v2226, 1.0
    %v2228 = vrcp.pop %v2227
    %v2229 = vmul.f32 1.0, %v2228
    %2230 = vmatprep.subr.mxu0 0.0
    %2231 = vmatpush1.msra.mxu0 0.0
    %2232 = vmatprep.subr.mxu0 0.0
    %2233 = vmatpush1.msra.mxu0 0.0
    %2234 = vmatprep.subr.mxu0 0.0
    %2235 = vmatpush1.msra.mxu0 0.0
    %2236 = vmatprep.subr.mxu0 0.0
    %2237 = vmatpush1.msra.mxu0 0.0
    %2238 = vmatprep.subr.mxu0 0.0
    %2239 = vmatpush1.msra.mxu0 0.0
    %2240 = vmatprep.subr.mxu0 0.0
    %2241 = vmatpush1.msra.mxu0 0.0
    %2242 = vmatprep.subr.mxu0 0.0
    %2243 = vmatpush1.msra.mxu0 0.0
    %2244 = vmatprep.subr.mxu0 0.0
    %2245 = vmatpush1.msra.mxu0 0.0
    %2246 = vmatprep.subr.mxu0 0.0
    %2247 = vmatpush1.msra.mxu0 0.0
    %2248 = vmatprep.subr.mxu0 0.0
    %2249 = vmatpush1.msra.mxu0 0.0
    %2250 = vmatprep.subr.mxu0 0.0
    %2251 = vmatpush1.msra.mxu0 %v82
    %2252 = vmatprep.subr.mxu0 0.0
    %2253 = vmatpush1.msra.mxu0 %v81
    %2254 = vmatprep.subr.mxu0 0.0
    %2255 = vmatpush1.msra.mxu0 %v80
    %2256 = vmatprep.subr.mxu0 0.0
    %2257 = vmatpush1.msra.mxu0 %v79
    %2258 = vmatprep.subr.mxu0 0.0
    %2259 = vmatpush1.msra.mxu0 %v78
    %2260 = vmatprep.subr.mxu0 0.0
    %2261 = vmatpush1.msra.mxu0 %v77
    %2262 = vmatprep.subr.mxu0 0.0
    %2263 = vmatpush2.msra.mxu0 0.0
    %2264 = vmatprep.subr.mxu0 0.0
    %2265 = vmatpush2.msra.mxu0 0.0
    %2266 = vmatprep.subr.mxu0 0.0
    %2267 = vmatpush2.msra.mxu0 0.0
    %2268 = vmatprep.subr.mxu0 0.0
    %2269 = vmatpush2.msra.mxu0 0.0
    %2270 = vmatprep.subr.mxu0 0.0
    %2271 = vmatpush2.msra.mxu0 0.0
    %2272 = vmatprep.subr.mxu0 0.0
    %2273 = vmatpush2.msra.mxu0 0.0
    %2274 = vmatprep.subr.mxu0 0.0
    %2275 = vmatpush2.msra.mxu0 0.0
    %2276 = vmatprep.subr.mxu0 0.0
    %2277 = vmatpush2.msra.mxu0 0.0
    %2278 = vmatprep.subr.mxu0 0.0
    %2279 = vmatpush2.msra.mxu0 0.0
    %2280 = vmatprep.subr.mxu0 0.0
    %2281 = vmatpush2.msra.mxu0 0.0
    %2282 = vmatprep.subr.mxu0 0.0
    %2283 = vmatpush2.msra.mxu0 0.0
    %2284 = vmatprep.subr.mxu0 0.0
    %2285 = vmatpush2.msra.mxu0 0.0
    %2286 = vmatprep.subr.mxu0 0.0
    %2287 = vmatpush2.msra.mxu0 0.0
    %2288 = vmatprep.subr.mxu0 0.0
    %2289 = vmatpush2.msra.mxu0 0.0
    %2290 = vmatprep.subr.mxu0 0.0
    %2291 = vmatpush2.msra.mxu0 0.0
    %2292 = vmatprep.subr.mxu0 0.0
    %2293 = vmatpush2.msra.mxu0 0.0
    %2294 = vmatprep.mubr.f32.mxu0 0.0
    %2295 = vmatmul.mubr.f32.gmra.mxu0 %v2000
    %v2296 = vpop.f32.mrf.mxu0
    %v2297 = vadd.f32 %v433, %v2296
    %v2298 = vpop.f32.mrf.mxu0
    %2299 = vdwg.mxu0
    %v2300 = vmul.f32 %v2077, %v1880
    %v2303 = vrot.slane %v1916, 7
    %v2304 = vsel %vm101, %v2303, %v1915
    %v2306 = vmul.f32 %v2153, %v2304
    %v2307 = vadd.f32 %v2300, %v2306
    %v2308 = vmul.f32 %v2229, %v2297
    %v2309 = vadd.f32 %v2307, %v2308
    %v2310 = vsel %vm515, %v2309, 0.0
    %2311 = vadd.xlane.f32.xlu0 %v2310
    %v2312 = vpop.xlane.xlu0 %2311
    %v2313 = vmul.f32 %v2312, %v519
    %v2314 = vsub.f32 %v2309, %v2313
    %v2315 = vmul.f32 %v2314, %v2314
    %v2316 = vsel %vm515, %v2315, 0.0
    %2317 = vadd.xlane.f32.xlu0 %v2316
    %v2318 = vpop.xlane.xlu0 %2317
    %v2319 = vmul.f32 %v2318, %v519
    %v2320 = vadd.f32 %v2319, 1e-05
    %v2321 = vrsqrt.pop %v2320
    %v2322 = vmul.f32 %v2314, %v2321
    %v2323 = vmul.f32 %v2322, %v534
    %v2324 = vadd.f32 %v2323, %v541
    %2326 = vset.pattern.permute.xlu0 0
    %2327 = vperm.xlu0 %2326, %v1919
    %v2328 = vpop.permute.xlu0 %2327
    %2331 = vset.pattern.permute.xlu0 0
    %2332 = vperm.xlu0 %2331, %v1920
    %v2333 = vpop.permute.xlu0 %2332
    %v2336 = vrot.slane %v2324, 1
    %v2339 = vmul.f32 %v2328, %v2324
    %v2340 = vmul.f32 %v2333, %v2336
    %v2341 = vsub.f32 1.0, %v1919
    %v2342 = vsub.f32 1.0, %v1920
    %2344 = vset.pattern.permute.xlu0 0
    %2345 = vperm.xlu0 %2344, %v2341
    %v2346 = vpop.permute.xlu0 %2345
    %2349 = vset.pattern.permute.xlu0 0
    %2350 = vperm.xlu0 %2349, %v2342
    %v2351 = vpop.permute.xlu0 %2350
    %v2353 = vmul.f32 %v2346, %v1911
    %v2354 = vmul.f32 %v2351, %v1912
    %v2355 = vadd.f32 %v2339, %v2353
    %v2356 = vadd.f32 %v2340, %v2354
    %2357 = vst.msk [vmem:[#allocation4 + $0x4] sm:$0x1] %vm580, %v2339
    %2358 = vst.msk [vmem:[#allocation4 + $0xc] sm:$0x1] %vm580, %v2340
    %v2359 = vld [vmem:[%s0 + $0x5] sm:$0x1]
    %v2360 = vld [vmem:[%s0 + $0xd] sm:$0x1]
    %v2361 = vld [vmem:[%s1 + $0x5] sm:$0x1]
    %v2362 = vld [vmem:[%s1 + $0xd] sm:$0x1]
    %v2363 = vld [vmem:[%s2 + $0x5] sm:$0x1]
    %v2364 = vld [vmem:[%s2 + $0xd] sm:$0x1]
    %v2367 = vrot.slane %v2362, 7
    %v2368 = vsel %vm101, %v2367, %v2361
    %v2370 = vsel %vm104, %v2324, 0
    %2372 = vmatprep.subr.mxu0 0.0
    %2373 = vmatpush1.msra.mxu0 0.0
    %2374 = vmatprep.subr.mxu0 0.0
    %2375 = vmatpush1.msra.mxu0 0.0
    %2376 = vmatprep.subr.mxu0 0.0
    %2377 = vmatpush1.msra.mxu0 0.0
    %2378 = vmatprep.subr.mxu0 0.0
    %2379 = vmatpush1.msra.mxu0 0.0
    %2380 = vmatprep.subr.mxu0 0.0
    %2381 = vmatpush1.msra.mxu0 0.0
    %2382 = vmatprep.subr.mxu0 0.0
    %2383 = vmatpush1.msra.mxu0 0.0
    %2384 = vmatprep.subr.mxu0 0.0
    %2385 = vmatpush1.msra.mxu0 0.0
    %2386 = vmatprep.subr.mxu0 0.0
    %2387 = vmatpush1.msra.mxu0 0.0
    %2388 = vmatprep.subr.mxu0 0.0
    %2389 = vmatpush1.msra.mxu0 0.0
    %2390 = vmatprep.subr.mxu0 0.0
    %2391 = vmatpush1.msra.mxu0 0.0
    %2392 = vmatprep.subr.mxu0 0.0
    %2393 = vmatpush1.msra.mxu0 0.0
    %2394 = vmatprep.subr.mxu0 0.0
    %2395 = vmatpush1.msra.mxu0 0.0
    %2396 = vmatprep.subr.mxu0 0.0
    %2397 = vmatpush1.msra.mxu0 %v55
    %2398 = vmatprep.subr.mxu0 0.0
    %2399 = vmatpush1.msra.mxu0 %v54
    %2400 = vmatprep.subr.mxu0 0.0
    %2401 = vmatpush1.msra.mxu0 %v53
    %2402 = vmatprep.subr.mxu0 0.0
    %2403 = vmatpush1.msra.mxu0 %v52
    %2404 = vmatprep.subr.mxu0 0.0
    %2405 = vmatpush2.msra.mxu0 0.0
    %2406 = vmatprep.subr.mxu0 0.0
    %2407 = vmatpush2.msra.mxu0 0.0
    %2408 = vmatprep.subr.mxu0 0.0
    %2409 = vmatpush2.msra.mxu0 0.0
    %2410 = vmatprep.subr.mxu0 0.0
    %2411 = vmatpush2.msra.mxu0 0.0
    %2412 = vmatprep.subr.mxu0 0.0
    %2413 = vmatpush2.msra.mxu0 0.0
    %2414 = vmatprep.subr.mxu0 0.0
    %2415 = vmatpush2.msra.mxu0 0.0
    %2416 = vmatprep.subr.mxu0 0.0
    %2417 = vmatpush2.msra.mxu0 0.0
    %2418 = vmatprep.subr.mxu0 0.0
    %2419 = vmatpush2.msra.mxu0 0.0
    %2420 = vmatprep.subr.mxu0 0.0
    %2421 = vmatpush2.msra.mxu0 0.0
    %2422 = vmatprep.subr.mxu0 0.0
    %2423 = vmatpush2.msra.mxu0 0.0
    %2424 = vmatprep.subr.mxu0 0.0
    %2425 = vmatpush2.msra.mxu0 0.0
    %2426 = vmatprep.subr.mxu0 0.0
    %2427 = vmatpush2.msra.mxu0 0.0
    %2428 = vmatprep.subr.mxu0 0.0
    %2429 = vmatpush2.msra.mxu0 0.0
    %2430 = vmatprep.subr.mxu0 0.0
    %2431 = vmatpush2.msra.mxu0 0.0
    %2432 = vmatprep.subr.mxu0 0.0
    %2433 = vmatpush2.msra.mxu0 0.0
    %2434 = vmatprep.subr.mxu0 0.0
    %2435 = vmatpush2.msra.mxu0 0.0
    %2436 = vmatprep.mubr.f32.mxu0 0.0
    %2437 = vmatmul.mubr.f32.gmra.mxu0 %v2370
    %v2438 = vpop.f32.mrf.mxu0
    %v2439 = vadd.f32 %v2368, %v2438
    %v2440 = vpop.f32.mrf.mxu0
    %2441 = vdwg.mxu0
    %v2442 = vmax.f32 %v2439, 0.0
    %v2444 = vsel %vm185, %v2442, 0
    %2446 = vmatprep.subr.mxu0 0.0
    %2447 = vmatpush1.msra.mxu0 0.0
    %2448 = vmatprep.subr.mxu0 0.0
    %2449 = vmatpush1.msra.mxu0 0.0
    %2450 = vmatprep.subr.mxu0 0.0
    %2451 = vmatpush1.msra.mxu0 0.0
    %2452 = vmatprep.subr.mxu0 0.0
    %2453 = vmatpush1.msra.mxu0 0.0
    %2454 = vmatprep.subr.mxu0 0.0
    %2455 = vmatpush1.msra.mxu0 0.0
    %2456 = vmatprep.subr.mxu0 0.0
    %2457 = vmatpush1.msra.mxu0 0.0
    %2458 = vmatprep.subr.mxu0 0.0
    %2459 = vmatpush1.msra.mxu0 0.0
    %2460 = vmatprep.subr.mxu0 0.0
    %2461 = vmatpush1.msra.mxu0 0.0
    %2462 = vmatprep.subr.mxu0 0.0
    %2463 = vmatpush1.msra.mxu0 0.0
    %2464 = vmatprep.subr.mxu0 0.0
    %2465 = vmatpush1.msra.mxu0 0.0
    %2466 = vmatprep.subr.mxu0 0.0
    %2467 = vmatpush1.msra.mxu0 %v61
    %2468 = vmatprep.subr.mxu0 0.0
    %2469 = vmatpush1.msra.mxu0 %v60
    %2470 = vmatprep.subr.mxu0 0.0
    %2471 = vmatpush1.msra.mxu0 %v59
    %2472 = vmatprep.subr.mxu0 0.0
    %2473 = vmatpush1.msra.mxu0 %v58
    %2474 = vmatprep.subr.mxu0 0.0
    %2475 = vmatpush1.msra.mxu0 %v57
    %2476 = vmatprep.subr.mxu0 0.0
    %2477 = vmatpush1.msra.mxu0 %v56
    %2478 = vmatprep.subr.mxu0 0.0
    %2479 = vmatpush2.msra.mxu0 0.0
    %2480 = vmatprep.subr.mxu0 0.0
    %2481 = vmatpush2.msra.mxu0 0.0
    %2482 = vmatprep.subr.mxu0 0.0
    %2483 = vmatpush2.msra.mxu0 0.0
    %2484 = vmatprep.subr.mxu0 0.0
    %2485 = vmatpush2.msra.mxu0 0.0
    %2486 = vmatprep.subr.mxu0 0.0
    %2487 = vmatpush2.msra.mxu0 0.0
    %2488 = vmatprep.subr.mxu0 0.0
    %2489 = vmatpush2.msra.mxu0 0.0
    %2490 = vmatprep.subr.mxu0 0.0
    %2491 = vmatpush2.msra.mxu0 0.0
    %2492 = vmatprep.subr.mxu0 0.0
    %2493 = vmatpush2.msra.mxu0 0.0
    %2494 = vmatprep.subr.mxu0 0.0
    %2495 = vmatpush2.msra.mxu0 0.0
    %2496 = vmatprep.subr.mxu0 0.0
    %2497 = vmatpush2.msra.mxu0 0.0
    %2498 = vmatprep.subr.mxu0 0.0
    %2499 = vmatpush2.msra.mxu0 0.0
    %2500 = vmatprep.subr.mxu0 0.0
    %2501 = vmatpush2.msra.mxu0 0.0
    %2502 = vmatprep.subr.mxu0 0.0
    %2503 = vmatpush2.msra.mxu0 0.0
    %2504 = vmatprep.subr.mxu0 0.0
    %2505 = vmatpush2.msra.mxu0 0.0
    %2506 = vmatprep.subr.mxu0 0.0
    %2507 = vmatpush2.msra.mxu0 0.0
    %2508 = vmatprep.subr.mxu0 0.0
    %2509 = vmatpush2.msra.mxu0 0.0
    %2510 = vmatprep.mubr.f32.mxu0 0.0
    %2511 = vmatmul.mubr.f32.gmra.mxu0 %v2444
    %v2512 = vpop.f32.mrf.mxu0
    %v2513 = vadd.f32 %v183, %v2512
    %v2514 = vpop.f32.mrf.mxu0
    %2515 = vdwg.mxu0
    %v2516 = vxor.u32 %v2513, 2147483648
    %v2517 = vmul.f32 %v2516, 1.442695
    %v2518 = vpow.pop %v2517
    %v2519 = vadd.f32 %v2518, 1.0
    %v2520 = vrcp.pop %v2519
    %v2521 = vmul.f32 1.0, %v2520
    %2522 = vmatprep.subr.mxu0 0.0
    %2523 = vmatpush1.msra.mxu0 0.0
    %2524 = vmatprep.subr.mxu0 0.0
    %2525 = vmatpush1.msra.mxu0 0.0
    %2526 = vmatprep.subr.mxu0 0.0
    %2527 = vmatpush1.msra.mxu0 0.0
    %2528 = vmatprep.subr.mxu0 0.0
    %2529 = vmatpush1.msra.mxu0 0.0
    %2530 = vmatprep.subr.mxu0 0.0
    %2531 = vmatpush1.msra.mxu0 0.0
    %2532 = vmatprep.subr.mxu0 0.0
    %2533 = vmatpush1.msra.mxu0 0.0
    %2534 = vmatprep.subr.mxu0 0.0
    %2535 = vmatpush1.msra.mxu0 0.0
    %2536 = vmatprep.subr.mxu0 0.0
    %2537 = vmatpush1.msra.mxu0 0.0
    %2538 = vmatprep.subr.mxu0 0.0
    %2539 = vmatpush1.msra.mxu0 0.0
    %2540 = vmatprep.subr.mxu0 0.0
    %2541 = vmatpush1.msra.mxu0 0.0
    %2542 = vmatprep.subr.mxu0 0.0
    %2543 = vmatpush1.msra.mxu0 %v68
    %2544 = vmatprep.subr.mxu0 0.0
    %2545 = vmatpush1.msra.mxu0 %v67
    %2546 = vmatprep.subr.mxu0 0.0
    %2547 = vmatpush1.msra.mxu0 %v66
    %2548 = vmatprep.subr.mxu0 0.0
    %2549 = vmatpush1.msra.mxu0 %v65
    %2550 = vmatprep.subr.mxu0 0.0
    %2551 = vmatpush1.msra.mxu0 %v64
    %2552 = vmatprep.subr.mxu0 0.0
    %2553 = vmatpush1.msra.mxu0 %v63
    %2554 = vmatprep.subr.mxu0 0.0
    %2555 = vmatpush2.msra.mxu0 0.0
    %2556 = vmatprep.subr.mxu0 0.0
    %2557 = vmatpush2.msra.mxu0 0.0
    %2558 = vmatprep.subr.mxu0 0.0
    %2559 = vmatpush2.msra.mxu0 0.0
    %2560 = vmatprep.subr.mxu0 0.0
    %2561 = vmatpush2.msra.mxu0 0.0
    %2562 = vmatprep.subr.mxu0 0.0
    %2563 = vmatpush2.msra.mxu0 0.0
    %2564 = vmatprep.subr.mxu0 0.0
    %2565 = vmatpush2.msra.mxu0 0.0
    %2566 = vmatprep.subr.mxu0 0.0
    %2567 = vmatpush2.msra.mxu0 0.0
    %2568 = vmatprep.subr.mxu0 0.0
    %2569 = vmatpush2.msra.mxu0 0.0
    %2570 = vmatprep.subr.mxu0 0.0
    %2571 = vmatpush2.msra.mxu0 0.0
    %2572 = vmatprep.subr.mxu0 0.0
    %2573 = vmatpush2.msra.mxu0 0.0
    %2574 = vmatprep.subr.mxu0 0.0
    %2575 = vmatpush2.msra.mxu0 0.0
    %2576 = vmatprep.subr.mxu0 0.0
    %2577 = vmatpush2.msra.mxu0 0.0
    %2578 = vmatprep.subr.mxu0 0.0
    %2579 = vmatpush2.msra.mxu0 0.0
    %2580 = vmatprep.subr.mxu0 0.0
    %2581 = vmatpush2.msra.mxu0 0.0
    %2582 = vmatprep.subr.mxu0 0.0
    %2583 = vmatpush2.msra.mxu0 0.0
    %2584 = vmatprep.subr.mxu0 0.0
    %2585 = vmatpush2.msra.mxu0 0.0
    %2586 = vmatprep.mubr.f32.mxu0 0.0
    %2587 = vmatmul.mubr.f32.gmra.mxu0 %v2444
    %v2588 = vpop.f32.mrf.mxu0
    %v2589 = vadd.f32 %v269, %v2588
    %v2590 = vpop.f32.mrf.mxu0
    %2591 = vdwg.mxu0
    %v2592 = vxor.u32 %v2589, 2147483648
    %v2593 = vmul.f32 %v2592, 1.442695
    %v2594 = vpow.pop %v2593
    %v2595 = vadd.f32 %v2594, 1.0
    %v2596 = vrcp.pop %v2595
    %v2597 = vmul.f32 1.0, %v2596
    %2598 = vmatprep.subr.mxu0 0.0
    %2599 = vmatpush1.msra.mxu0 0.0
    %2600 = vmatprep.subr.mxu0 0.0
    %2601 = vmatpush1.msra.mxu0 0.0
    %2602 = vmatprep.subr.mxu0 0.0
    %2603 = vmatpush1.msra.mxu0 0.0
    %2604 = vmatprep.subr.mxu0 0.0
    %2605 = vmatpush1.msra.mxu0 0.0
    %2606 = vmatprep.subr.mxu0 0.0
    %2607 = vmatpush1.msra.mxu0 0.0
    %2608 = vmatprep.subr.mxu0 0.0
    %2609 = vmatpush1.msra.mxu0 0.0
    %2610 = vmatprep.subr.mxu0 0.0
    %2611 = vmatpush1.msra.mxu0 0.0
    %2612 = vmatprep.subr.mxu0 0.0
    %2613 = vmatpush1.msra.mxu0 0.0
    %2614 = vmatprep.subr.mxu0 0.0
    %2615 = vmatpush1.msra.mxu0 0.0
    %2616 = vmatprep.subr.mxu0 0.0
    %2617 = vmatpush1.msra.mxu0 0.0
    %2618 = vmatprep.subr.mxu0 0.0
    %2619 = vmatpush1.msra.mxu0 %v75
    %2620 = vmatprep.subr.mxu0 0.0
    %2621 = vmatpush1.msra.mxu0 %v74
    %2622 = vmatprep.subr.mxu0 0.0
    %2623 = vmatpush1.msra.mxu0 %v73
    %2624 = vmatprep.subr.mxu0 0.0
    %2625 = vmatpush1.msra.mxu0 %v72
    %2626 = vmatprep.subr.mxu0 0.0
    %2627 = vmatpush1.msra.mxu0 %v71
    %2628 = vmatprep.subr.mxu0 0.0
    %2629 = vmatpush1.msra.mxu0 %v70
    %2630 = vmatprep.subr.mxu0 0.0
    %2631 = vmatpush2.msra.mxu0 0.0
    %2632 = vmatprep.subr.mxu0 0.0
    %2633 = vmatpush2.msra.mxu0 0.0
    %2634 = vmatprep.subr.mxu0 0.0
    %2635 = vmatpush2.msra.mxu0 0.0
    %2636 = vmatprep.subr.mxu0 0.0
    %2637 = vmatpush2.msra.mxu0 0.0
    %2638 = vmatprep.subr.mxu0 0.0
    %2639 = vmatpush2.msra.mxu0 0.0
    %2640 = vmatprep.subr.mxu0 0.0
    %2641 = vmatpush2.msra.mxu0 0.0
    %2642 = vmatprep.subr.mxu0 0.0
    %2643 = vmatpush2.msra.mxu0 0.0
    %2644 = vmatprep.subr.mxu0 0.0
    %2645 = vmatpush2.msra.mxu0 0.0
    %2646 = vmatprep.subr.mxu0 0.0
    %2647 = vmatpush2.msra.mxu0 0.0
    %2648 = vmatprep.subr.mxu0 0.0
    %2649 = vmatpush2.msra.mxu0 0.0
    %2650 = vmatprep.subr.mxu0 0.0
    %2651 = vmatpush2.msra.mxu0 0.0
    %2652 = vmatprep.subr.mxu0 0.0
    %2653 = vmatpush2.msra.mxu0 0.0
    %2654 = vmatprep.subr.mxu0 0.0
    %2655 = vmatpush2.msra.mxu0 0.0
    %2656 = vmatprep.subr.mxu0 0.0
    %2657 = vmatpush2.msra.mxu0 0.0
    %2658 = vmatprep.subr.mxu0 0.0
    %2659 = vmatpush2.msra.mxu0 0.0
    %2660 = vmatprep.subr.mxu0 0.0
    %2661 = vmatpush2.msra.mxu0 0.0
    %2662 = vmatprep.mubr.f32.mxu0 0.0
    %2663 = vmatmul.mubr.f32.gmra.mxu0 %v2444
    %v2664 = vpop.f32.mrf.mxu0
    %v2665 = vadd.f32 %v351, %v2664
    %v2666 = vpop.f32.mrf.mxu0
    %2667 = vdwg.mxu0
    %v2668 = vxor.u32 %v2665, 2147483648
    %v2669 = vmul.f32 %v2668, 1.442695
    %v2670 = vpow.pop %v2669
    %v2671 = vadd.f32 %v2670, 1.0
    %v2672 = vrcp.pop %v2671
    %v2673 = vmul.f32 1.0, %v2672
    %2674 = vmatprep.subr.mxu0 0.0
    %2675 = vmatpush1.msra.mxu0 0.0
    %2676 = vmatprep.subr.mxu0 0.0
    %2677 = vmatpush1.msra.mxu0 0.0
    %2678 = vmatprep.subr.mxu0 0.0
    %2679 = vmatpush1.msra.mxu0 0.0
    %2680 = vmatprep.subr.mxu0 0.0
    %2681 = vmatpush1.msra.mxu0 0.0
    %2682 = vmatprep.subr.mxu0 0.0
    %2683 = vmatpush1.msra.mxu0 0.0
    %2684 = vmatprep.subr.mxu0 0.0
    %2685 = vmatpush1.msra.mxu0 0.0
    %2686 = vmatprep.subr.mxu0 0.0
    %2687 = vmatpush1.msra.mxu0 0.0
    %2688 = vmatprep.subr.mxu0 0.0
    %2689 = vmatpush1.msra.mxu0 0.0
    %2690 = vmatprep.subr.mxu0 0.0
    %2691 = vmatpush1.msra.mxu0 0.0
    %2692 = vmatprep.subr.mxu0 0.0
    %2693 = vmatpush1.msra.mxu0 0.0
    %2694 = vmatprep.subr.mxu0 0.0
    %2695 = vmatpush1.msra.mxu0 %v82
    %2696 = vmatprep.subr.mxu0 0.0
    %2697 = vmatpush1.msra.mxu0 %v81
    %2698 = vmatprep.subr.mxu0 0.0
    %2699 = vmatpush1.msra.mxu0 %v80
    %2700 = vmatprep.subr.mxu0 0.0
    %2701 = vmatpush1.msra.mxu0 %v79
    %2702 = vmatprep.subr.mxu0 0.0
    %2703 = vmatpush1.msra.mxu0 %v78
    %2704 = vmatprep.subr.mxu0 0.0
    %2705 = vmatpush1.msra.mxu0 %v77
    %2706 = vmatprep.subr.mxu0 0.0
    %2707 = vmatpush2.msra.mxu0 0.0
    %2708 = vmatprep.subr.mxu0 0.0
    %2709 = vmatpush2.msra.mxu0 0.0
    %2710 = vmatprep.subr.mxu0 0.0
    %2711 = vmatpush2.msra.mxu0 0.0
    %2712 = vmatprep.subr.mxu0 0.0
    %2713 = vmatpush2.msra.mxu0 0.0
    %2714 = vmatprep.subr.mxu0 0.0
    %2715 = vmatpush2.msra.mxu0 0.0
    %2716 = vmatprep.subr.mxu0 0.0
    %2717 = vmatpush2.msra.mxu0 0.0
    %2718 = vmatprep.subr.mxu0 0.0
    %2719 = vmatpush2.msra.mxu0 0.0
    %2720 = vmatprep.subr.mxu0 0.0
    %2721 = vmatpush2.msra.mxu0 0.0
    %2722 = vmatprep.subr.mxu0 0.0
    %2723 = vmatpush2.msra.mxu0 0.0
    %2724 = vmatprep.subr.mxu0 0.0
    %2725 = vmatpush2.msra.mxu0 0.0
    %2726 = vmatprep.subr.mxu0 0.0
    %2727 = vmatpush2.msra.mxu0 0.0
    %2728 = vmatprep.subr.mxu0 0.0
    %2729 = vmatpush2.msra.mxu0 0.0
    %2730 = vmatprep.subr.mxu0 0.0
    %2731 = vmatpush2.msra.mxu0 0.0
    %2732 = vmatprep.subr.mxu0 0.0
    %2733 = vmatpush2.msra.mxu0 0.0
    %2734 = vmatprep.subr.mxu0 0.0
    %2735 = vmatpush2.msra.mxu0 0.0
    %2736 = vmatprep.subr.mxu0 0.0
    %2737 = vmatpush2.msra.mxu0 0.0
    %2738 = vmatprep.mubr.f32.mxu0 0.0
    %2739 = vmatmul.mubr.f32.gmra.mxu0 %v2444
    %v2740 = vpop.f32.mrf.mxu0
    %v2741 = vadd.f32 %v433, %v2740
    %v2742 = vpop.f32.mrf.mxu0
    %2743 = vdwg.mxu0
    %v2744 = vmul.f32 %v2521, %v2324
    %v2747 = vrot.slane %v2360, 7
    %v2748 = vsel %vm101, %v2747, %v2359
    %v2750 = vmul.f32 %v2597, %v2748
    %v2751 = vadd.f32 %v2744, %v2750
    %v2752 = vmul.f32 %v2673, %v2741
    %v2753 = vadd.f32 %v2751, %v2752
    %v2754 = vsel %vm515, %v2753, 0.0
    %2755 = vadd.xlane.f32.xlu0 %v2754
    %v2756 = vpop.xlane.xlu0 %2755
    %v2757 = vmul.f32 %v2756, %v519
    %v2758 = vsub.f32 %v2753, %v2757
    %v2759 = vmul.f32 %v2758, %v2758
    %v2760 = vsel %vm515, %v2759, 0.0
    %2761 = vadd.xlane.f32.xlu0 %v2760
    %v2762 = vpop.xlane.xlu0 %2761
    %v2763 = vmul.f32 %v2762, %v519
    %v2764 = vadd.f32 %v2763, 1e-05
    %v2765 = vrsqrt.pop %v2764
    %v2766 = vmul.f32 %v2758, %v2765
    %v2767 = vmul.f32 %v2766, %v534
    %v2768 = vadd.f32 %v2767, %v541
    %2770 = vset.pattern.permute.xlu0 0
    %2771 = vperm.xlu0 %2770, %v2363
    %v2772 = vpop.permute.xlu0 %2771
    %2775 = vset.pattern.permute.xlu0 0
    %2776 = vperm.xlu0 %2775, %v2364
    %v2777 = vpop.permute.xlu0 %2776
    %v2780 = vrot.slane %v2768, 1
    %v2783 = vmul.f32 %v2772, %v2768
    %v2784 = vmul.f32 %v2777, %v2780
    %v2785 = vsub.f32 1.0, %v2363
    %v2786 = vsub.f32 1.0, %v2364
    %2788 = vset.pattern.permute.xlu0 0
    %2789 = vperm.xlu0 %2788, %v2785
    %v2790 = vpop.permute.xlu0 %2789
    %2793 = vset.pattern.permute.xlu0 0
    %2794 = vperm.xlu0 %2793, %v2786
    %v2795 = vpop.permute.xlu0 %2794
    %v2797 = vmul.f32 %v2790, %v2355
    %v2798 = vmul.f32 %v2795, %v2356
    %v2799 = vadd.f32 %v2783, %v2797
    %v2800 = vadd.f32 %v2784, %v2798
    %2801 = vst.msk [vmem:[#allocation4 + $0x5] sm:$0x1] %vm580, %v2783
    %2802 = vst.msk [vmem:[#allocation4 + $0xd] sm:$0x1] %vm580, %v2784
    %v2803 = vld [vmem:[%s0 + $0x6] sm:$0x1]
    %v2804 = vld [vmem:[%s0 + $0xe] sm:$0x1]
    %v2805 = vld [vmem:[%s1 + $0x6] sm:$0x1]
    %v2806 = vld [vmem:[%s1 + $0xe] sm:$0x1]
    %v2807 = vld [vmem:[%s2 + $0x6] sm:$0x1]
    %v2808 = vld [vmem:[%s2 + $0xe] sm:$0x1]
    %v2811 = vrot.slane %v2806, 7
    %v2812 = vsel %vm101, %v2811, %v2805
    %v2814 = vsel %vm104, %v2768, 0
    %2816 = vmatprep.subr.mxu0 0.0
    %2817 = vmatpush1.msra.mxu0 0.0
    %2818 = vmatprep.subr.mxu0 0.0
    %2819 = vmatpush1.msra.mxu0 0.0
    %2820 = vmatprep.subr.mxu0 0.0
    %2821 = vmatpush1.msra.mxu0 0.0
    %2822 = vmatprep.subr.mxu0 0.0
    %2823 = vmatpush1.msra.mxu0 0.0
    %2824 = vmatprep.subr.mxu0 0.0
    %2825 = vmatpush1.msra.mxu0 0.0
    %2826 = vmatprep.subr.mxu0 0.0
    %2827 = vmatpush1.msra.mxu0 0.0
    %2828 = vmatprep.subr.mxu0 0.0
    %2829 = vmatpush1.msra.mxu0 0.0
    %2830 = vmatprep.subr.mxu0 0.0
    %2831 = vmatpush1.msra.mxu0 0.0
    %2832 = vmatprep.subr.mxu0 0.0
    %2833 = vmatpush1.msra.mxu0 0.0
    %2834 = vmatprep.subr.mxu0 0.0
    %2835 = vmatpush1.msra.mxu0 0.0
    %2836 = vmatprep.subr.mxu0 0.0
    %2837 = vmatpush1.msra.mxu0 0.0
    %2838 = vmatprep.subr.mxu0 0.0
    %2839 = vmatpush1.msra.mxu0 0.0
    %2840 = vmatprep.subr.mxu0 0.0
    %2841 = vmatpush1.msra.mxu0 %v55
    %2842 = vmatprep.subr.mxu0 0.0
    %2843 = vmatpush1.msra.mxu0 %v54
    %2844 = vmatprep.subr.mxu0 0.0
    %2845 = vmatpush1.msra.mxu0 %v53
    %2846 = vmatprep.subr.mxu0 0.0
    %2847 = vmatpush1.msra.mxu0 %v52
    %2848 = vmatprep.subr.mxu0 0.0
    %2849 = vmatpush2.msra.mxu0 0.0
    %2850 = vmatprep.subr.mxu0 0.0
    %2851 = vmatpush2.msra.mxu0 0.0
    %2852 = vmatprep.subr.mxu0 0.0
    %2853 = vmatpush2.msra.mxu0 0.0
    %2854 = vmatprep.subr.mxu0 0.0
    %2855 = vmatpush2.msra.mxu0 0.0
    %2856 = vmatprep.subr.mxu0 0.0
    %2857 = vmatpush2.msra.mxu0 0.0
    %2858 = vmatprep.subr.mxu0 0.0
    %2859 = vmatpush2.msra.mxu0 0.0
    %2860 = vmatprep.subr.mxu0 0.0
    %2861 = vmatpush2.msra.mxu0 0.0
    %2862 = vmatprep.subr.mxu0 0.0
    %2863 = vmatpush2.msra.mxu0 0.0
    %2864 = vmatprep.subr.mxu0 0.0
    %2865 = vmatpush2.msra.mxu0 0.0
    %2866 = vmatprep.subr.mxu0 0.0
    %2867 = vmatpush2.msra.mxu0 0.0
    %2868 = vmatprep.subr.mxu0 0.0
    %2869 = vmatpush2.msra.mxu0 0.0
    %2870 = vmatprep.subr.mxu0 0.0
    %2871 = vmatpush2.msra.mxu0 0.0
    %2872 = vmatprep.subr.mxu0 0.0
    %2873 = vmatpush2.msra.mxu0 0.0
    %2874 = vmatprep.subr.mxu0 0.0
    %2875 = vmatpush2.msra.mxu0 0.0
    %2876 = vmatprep.subr.mxu0 0.0
    %2877 = vmatpush2.msra.mxu0 0.0
    %2878 = vmatprep.subr.mxu0 0.0
    %2879 = vmatpush2.msra.mxu0 0.0
    %2880 = vmatprep.mubr.f32.mxu0 0.0
    %2881 = vmatmul.mubr.f32.gmra.mxu0 %v2814
    %v2882 = vpop.f32.mrf.mxu0
    %v2883 = vadd.f32 %v2812, %v2882
    %v2884 = vpop.f32.mrf.mxu0
    %2885 = vdwg.mxu0
    %v2886 = vmax.f32 %v2883, 0.0
    %v2888 = vsel %vm185, %v2886, 0
    %2890 = vmatprep.subr.mxu0 0.0
    %2891 = vmatpush1.msra.mxu0 0.0
    %2892 = vmatprep.subr.mxu0 0.0
    %2893 = vmatpush1.msra.mxu0 0.0
    %2894 = vmatprep.subr.mxu0 0.0
    %2895 = vmatpush1.msra.mxu0 0.0
    %2896 = vmatprep.subr.mxu0 0.0
    %2897 = vmatpush1.msra.mxu0 0.0
    %2898 = vmatprep.subr.mxu0 0.0
    %2899 = vmatpush1.msra.mxu0 0.0
    %2900 = vmatprep.subr.mxu0 0.0
    %2901 = vmatpush1.msra.mxu0 0.0
    %2902 = vmatprep.subr.mxu0 0.0
    %2903 = vmatpush1.msra.mxu0 0.0
    %2904 = vmatprep.subr.mxu0 0.0
    %2905 = vmatpush1.msra.mxu0 0.0
    %2906 = vmatprep.subr.mxu0 0.0
    %2907 = vmatpush1.msra.mxu0 0.0
    %2908 = vmatprep.subr.mxu0 0.0
    %2909 = vmatpush1.msra.mxu0 0.0
    %2910 = vmatprep.subr.mxu0 0.0
    %2911 = vmatpush1.msra.mxu0 %v61
    %2912 = vmatprep.subr.mxu0 0.0
    %2913 = vmatpush1.msra.mxu0 %v60
    %2914 = vmatprep.subr.mxu0 0.0
    %2915 = vmatpush1.msra.mxu0 %v59
    %2916 = vmatprep.subr.mxu0 0.0
    %2917 = vmatpush1.msra.mxu0 %v58
    %2918 = vmatprep.subr.mxu0 0.0
    %2919 = vmatpush1.msra.mxu0 %v57
    %2920 = vmatprep.subr.mxu0 0.0
    %2921 = vmatpush1.msra.mxu0 %v56
    %2922 = vmatprep.subr.mxu0 0.0
    %2923 = vmatpush2.msra.mxu0 0.0
    %2924 = vmatprep.subr.mxu0 0.0
    %2925 = vmatpush2.msra.mxu0 0.0
    %2926 = vmatprep.subr.mxu0 0.0
    %2927 = vmatpush2.msra.mxu0 0.0
    %2928 = vmatprep.subr.mxu0 0.0
    %2929 = vmatpush2.msra.mxu0 0.0
    %2930 = vmatprep.subr.mxu0 0.0
    %2931 = vmatpush2.msra.mxu0 0.0
    %2932 = vmatprep.subr.mxu0 0.0
    %2933 = vmatpush2.msra.mxu0 0.0
    %2934 = vmatprep.subr.mxu0 0.0
    %2935 = vmatpush2.msra.mxu0 0.0
    %2936 = vmatprep.subr.mxu0 0.0
    %2937 = vmatpush2.msra.mxu0 0.0
    %2938 = vmatprep.subr.mxu0 0.0
    %2939 = vmatpush2.msra.mxu0 0.0
    %2940 = vmatprep.subr.mxu0 0.0
    %2941 = vmatpush2.msra.mxu0 0.0
    %2942 = vmatprep.subr.mxu0 0.0
    %2943 = vmatpush2.msra.mxu0 0.0
    %2944 = vmatprep.subr.mxu0 0.0
    %2945 = vmatpush2.msra.mxu0 0.0
    %2946 = vmatprep.subr.mxu0 0.0
    %2947 = vmatpush2.msra.mxu0 0.0
    %2948 = vmatprep.subr.mxu0 0.0
    %2949 = vmatpush2.msra.mxu0 0.0
    %2950 = vmatprep.subr.mxu0 0.0
    %2951 = vmatpush2.msra.mxu0 0.0
    %2952 = vmatprep.subr.mxu0 0.0
    %2953 = vmatpush2.msra.mxu0 0.0
    %2954 = vmatprep.mubr.f32.mxu0 0.0
    %2955 = vmatmul.mubr.f32.gmra.mxu0 %v2888
    %v2956 = vpop.f32.mrf.mxu0
    %v2957 = vadd.f32 %v183, %v2956
    %v2958 = vpop.f32.mrf.mxu0
    %2959 = vdwg.mxu0
    %v2960 = vxor.u32 %v2957, 2147483648
    %v2961 = vmul.f32 %v2960, 1.442695
    %v2962 = vpow.pop %v2961
    %v2963 = vadd.f32 %v2962, 1.0
    %v2964 = vrcp.pop %v2963
    %v2965 = vmul.f32 1.0, %v2964
    %2966 = vmatprep.subr.mxu0 0.0
    %2967 = vmatpush1.msra.mxu0 0.0
    %2968 = vmatprep.subr.mxu0 0.0
    %2969 = vmatpush1.msra.mxu0 0.0
    %2970 = vmatprep.subr.mxu0 0.0
    %2971 = vmatpush1.msra.mxu0 0.0
    %2972 = vmatprep.subr.mxu0 0.0
    %2973 = vmatpush1.msra.mxu0 0.0
    %2974 = vmatprep.subr.mxu0 0.0
    %2975 = vmatpush1.msra.mxu0 0.0
    %2976 = vmatprep.subr.mxu0 0.0
    %2977 = vmatpush1.msra.mxu0 0.0
    %2978 = vmatprep.subr.mxu0 0.0
    %2979 = vmatpush1.msra.mxu0 0.0
    %2980 = vmatprep.subr.mxu0 0.0
    %2981 = vmatpush1.msra.mxu0 0.0
    %2982 = vmatprep.subr.mxu0 0.0
    %2983 = vmatpush1.msra.mxu0 0.0
    %2984 = vmatprep.subr.mxu0 0.0
    %2985 = vmatpush1.msra.mxu0 0.0
    %2986 = vmatprep.subr.mxu0 0.0
    %2987 = vmatpush1.msra.mxu0 %v68
    %2988 = vmatprep.subr.mxu0 0.0
    %2989 = vmatpush1.msra.mxu0 %v67
    %2990 = vmatprep.subr.mxu0 0.0
    %2991 = vmatpush1.msra.mxu0 %v66
    %2992 = vmatprep.subr.mxu0 0.0
    %2993 = vmatpush1.msra.mxu0 %v65
    %2994 = vmatprep.subr.mxu0 0.0
    %2995 = vmatpush1.msra.mxu0 %v64
    %2996 = vmatprep.subr.mxu0 0.0
    %2997 = vmatpush1.msra.mxu0 %v63
    %2998 = vmatprep.subr.mxu0 0.0
    %2999 = vmatpush2.msra.mxu0 0.0
    %3000 = vmatprep.subr.mxu0 0.0
    %3001 = vmatpush2.msra.mxu0 0.0
    %3002 = vmatprep.subr.mxu0 0.0
    %3003 = vmatpush2.msra.mxu0 0.0
    %3004 = vmatprep.subr.mxu0 0.0
    %3005 = vmatpush2.msra.mxu0 0.0
    %3006 = vmatprep.subr.mxu0 0.0
    %3007 = vmatpush2.msra.mxu0 0.0
    %3008 = vmatprep.subr.mxu0 0.0
    %3009 = vmatpush2.msra.mxu0 0.0
    %3010 = vmatprep.subr.mxu0 0.0
    %3011 = vmatpush2.msra.mxu0 0.0
    %3012 = vmatprep.subr.mxu0 0.0
    %3013 = vmatpush2.msra.mxu0 0.0
    %3014 = vmatprep.subr.mxu0 0.0
    %3015 = vmatpush2.msra.mxu0 0.0
    %3016 = vmatprep.subr.mxu0 0.0
    %3017 = vmatpush2.msra.mxu0 0.0
    %3018 = vmatprep.subr.mxu0 0.0
    %3019 = vmatpush2.msra.mxu0 0.0
    %3020 = vmatprep.subr.mxu0 0.0
    %3021 = vmatpush2.msra.mxu0 0.0
    %3022 = vmatprep.subr.mxu0 0.0
    %3023 = vmatpush2.msra.mxu0 0.0
    %3024 = vmatprep.subr.mxu0 0.0
    %3025 = vmatpush2.msra.mxu0 0.0
    %3026 = vmatprep.subr.mxu0 0.0
    %3027 = vmatpush2.msra.mxu0 0.0
    %3028 = vmatprep.subr.mxu0 0.0
    %3029 = vmatpush2.msra.mxu0 0.0
    %3030 = vmatprep.mubr.f32.mxu0 0.0
    %3031 = vmatmul.mubr.f32.gmra.mxu0 %v2888
    %v3032 = vpop.f32.mrf.mxu0
    %v3033 = vadd.f32 %v269, %v3032
    %v3034 = vpop.f32.mrf.mxu0
    %3035 = vdwg.mxu0
    %v3036 = vxor.u32 %v3033, 2147483648
    %v3037 = vmul.f32 %v3036, 1.442695
    %v3038 = vpow.pop %v3037
    %v3039 = vadd.f32 %v3038, 1.0
    %v3040 = vrcp.pop %v3039
    %v3041 = vmul.f32 1.0, %v3040
    %3042 = vmatprep.subr.mxu0 0.0
    %3043 = vmatpush1.msra.mxu0 0.0
    %3044 = vmatprep.subr.mxu0 0.0
    %3045 = vmatpush1.msra.mxu0 0.0
    %3046 = vmatprep.subr.mxu0 0.0
    %3047 = vmatpush1.msra.mxu0 0.0
    %3048 = vmatprep.subr.mxu0 0.0
    %3049 = vmatpush1.msra.mxu0 0.0
    %3050 = vmatprep.subr.mxu0 0.0
    %3051 = vmatpush1.msra.mxu0 0.0
    %3052 = vmatprep.subr.mxu0 0.0
    %3053 = vmatpush1.msra.mxu0 0.0
    %3054 = vmatprep.subr.mxu0 0.0
    %3055 = vmatpush1.msra.mxu0 0.0
    %3056 = vmatprep.subr.mxu0 0.0
    %3057 = vmatpush1.msra.mxu0 0.0
    %3058 = vmatprep.subr.mxu0 0.0
    %3059 = vmatpush1.msra.mxu0 0.0
    %3060 = vmatprep.subr.mxu0 0.0
    %3061 = vmatpush1.msra.mxu0 0.0
    %3062 = vmatprep.subr.mxu0 0.0
    %3063 = vmatpush1.msra.mxu0 %v75
    %3064 = vmatprep.subr.mxu0 0.0
    %3065 = vmatpush1.msra.mxu0 %v74
    %3066 = vmatprep.subr.mxu0 0.0
    %3067 = vmatpush1.msra.mxu0 %v73
    %3068 = vmatprep.subr.mxu0 0.0
    %3069 = vmatpush1.msra.mxu0 %v72
    %3070 = vmatprep.subr.mxu0 0.0
    %3071 = vmatpush1.msra.mxu0 %v71
    %3072 = vmatprep.subr.mxu0 0.0
    %3073 = vmatpush1.msra.mxu0 %v70
    %3074 = vmatprep.subr.mxu0 0.0
    %3075 = vmatpush2.msra.mxu0 0.0
    %3076 = vmatprep.subr.mxu0 0.0
    %3077 = vmatpush2.msra.mxu0 0.0
    %3078 = vmatprep.subr.mxu0 0.0
    %3079 = vmatpush2.msra.mxu0 0.0
    %3080 = vmatprep.subr.mxu0 0.0
    %3081 = vmatpush2.msra.mxu0 0.0
    %3082 = vmatprep.subr.mxu0 0.0
    %3083 = vmatpush2.msra.mxu0 0.0
    %3084 = vmatprep.subr.mxu0 0.0
    %3085 = vmatpush2.msra.mxu0 0.0
    %3086 = vmatprep.subr.mxu0 0.0
    %3087 = vmatpush2.msra.mxu0 0.0
    %3088 = vmatprep.subr.mxu0 0.0
    %3089 = vmatpush2.msra.mxu0 0.0
    %3090 = vmatprep.subr.mxu0 0.0
    %3091 = vmatpush2.msra.mxu0 0.0
    %3092 = vmatprep.subr.mxu0 0.0
    %3093 = vmatpush2.msra.mxu0 0.0
    %3094 = vmatprep.subr.mxu0 0.0
    %3095 = vmatpush2.msra.mxu0 0.0
    %3096 = vmatprep.subr.mxu0 0.0
    %3097 = vmatpush2.msra.mxu0 0.0
    %3098 = vmatprep.subr.mxu0 0.0
    %3099 = vmatpush2.msra.mxu0 0.0
    %3100 = vmatprep.subr.mxu0 0.0
    %3101 = vmatpush2.msra.mxu0 0.0
    %3102 = vmatprep.subr.mxu0 0.0
    %3103 = vmatpush2.msra.mxu0 0.0
    %3104 = vmatprep.subr.mxu0 0.0
    %3105 = vmatpush2.msra.mxu0 0.0
    %3106 = vmatprep.mubr.f32.mxu0 0.0
    %3107 = vmatmul.mubr.f32.gmra.mxu0 %v2888
    %v3108 = vpop.f32.mrf.mxu0
    %v3109 = vadd.f32 %v351, %v3108
    %v3110 = vpop.f32.mrf.mxu0
    %3111 = vdwg.mxu0
    %v3112 = vxor.u32 %v3109, 2147483648
    %v3113 = vmul.f32 %v3112, 1.442695
    %v3114 = vpow.pop %v3113
    %v3115 = vadd.f32 %v3114, 1.0
    %v3116 = vrcp.pop %v3115
    %v3117 = vmul.f32 1.0, %v3116
    %3118 = vmatprep.subr.mxu0 0.0
    %3119 = vmatpush1.msra.mxu0 0.0
    %3120 = vmatprep.subr.mxu0 0.0
    %3121 = vmatpush1.msra.mxu0 0.0
    %3122 = vmatprep.subr.mxu0 0.0
    %3123 = vmatpush1.msra.mxu0 0.0
    %3124 = vmatprep.subr.mxu0 0.0
    %3125 = vmatpush1.msra.mxu0 0.0
    %3126 = vmatprep.subr.mxu0 0.0
    %3127 = vmatpush1.msra.mxu0 0.0
    %3128 = vmatprep.subr.mxu0 0.0
    %3129 = vmatpush1.msra.mxu0 0.0
    %3130 = vmatprep.subr.mxu0 0.0
    %3131 = vmatpush1.msra.mxu0 0.0
    %3132 = vmatprep.subr.mxu0 0.0
    %3133 = vmatpush1.msra.mxu0 0.0
    %3134 = vmatprep.subr.mxu0 0.0
    %3135 = vmatpush1.msra.mxu0 0.0
    %3136 = vmatprep.subr.mxu0 0.0
    %3137 = vmatpush1.msra.mxu0 0.0
    %3138 = vmatprep.subr.mxu0 0.0
    %3139 = vmatpush1.msra.mxu0 %v82
    %3140 = vmatprep.subr.mxu0 0.0
    %3141 = vmatpush1.msra.mxu0 %v81
    %3142 = vmatprep.subr.mxu0 0.0
    %3143 = vmatpush1.msra.mxu0 %v80
    %3144 = vmatprep.subr.mxu0 0.0
    %3145 = vmatpush1.msra.mxu0 %v79
    %3146 = vmatprep.subr.mxu0 0.0
    %3147 = vmatpush1.msra.mxu0 %v78
    %3148 = vmatprep.subr.mxu0 0.0
    %3149 = vmatpush1.msra.mxu0 %v77
    %3150 = vmatprep.subr.mxu0 0.0
    %3151 = vmatpush2.msra.mxu0 0.0
    %3152 = vmatprep.subr.mxu0 0.0
    %3153 = vmatpush2.msra.mxu0 0.0
    %3154 = vmatprep.subr.mxu0 0.0
    %3155 = vmatpush2.msra.mxu0 0.0
    %3156 = vmatprep.subr.mxu0 0.0
    %3157 = vmatpush2.msra.mxu0 0.0
    %3158 = vmatprep.subr.mxu0 0.0
    %3159 = vmatpush2.msra.mxu0 0.0
    %3160 = vmatprep.subr.mxu0 0.0
    %3161 = vmatpush2.msra.mxu0 0.0
    %3162 = vmatprep.subr.mxu0 0.0
    %3163 = vmatpush2.msra.mxu0 0.0
    %3164 = vmatprep.subr.mxu0 0.0
    %3165 = vmatpush2.msra.mxu0 0.0
    %3166 = vmatprep.subr.mxu0 0.0
    %3167 = vmatpush2.msra.mxu0 0.0
    %3168 = vmatprep.subr.mxu0 0.0
    %3169 = vmatpush2.msra.mxu0 0.0
    %3170 = vmatprep.subr.mxu0 0.0
    %3171 = vmatpush2.msra.mxu0 0.0
    %3172 = vmatprep.subr.mxu0 0.0
    %3173 = vmatpush2.msra.mxu0 0.0
    %3174 = vmatprep.subr.mxu0 0.0
    %3175 = vmatpush2.msra.mxu0 0.0
    %3176 = vmatprep.subr.mxu0 0.0
    %3177 = vmatpush2.msra.mxu0 0.0
    %3178 = vmatprep.subr.mxu0 0.0
    %3179 = vmatpush2.msra.mxu0 0.0
    %3180 = vmatprep.subr.mxu0 0.0
    %3181 = vmatpush2.msra.mxu0 0.0
    %3182 = vmatprep.mubr.f32.mxu0 0.0
    %3183 = vmatmul.mubr.f32.gmra.mxu0 %v2888
    %v3184 = vpop.f32.mrf.mxu0
    %v3185 = vadd.f32 %v433, %v3184
    %v3186 = vpop.f32.mrf.mxu0
    %3187 = vdwg.mxu0
    %v3188 = vmul.f32 %v2965, %v2768
    %v3191 = vrot.slane %v2804, 7
    %v3192 = vsel %vm101, %v3191, %v2803
    %v3194 = vmul.f32 %v3041, %v3192
    %v3195 = vadd.f32 %v3188, %v3194
    %v3196 = vmul.f32 %v3117, %v3185
    %v3197 = vadd.f32 %v3195, %v3196
    %v3198 = vsel %vm515, %v3197, 0.0
    %3199 = vadd.xlane.f32.xlu0 %v3198
    %v3200 = vpop.xlane.xlu0 %3199
    %v3201 = vmul.f32 %v3200, %v519
    %v3202 = vsub.f32 %v3197, %v3201
    %v3203 = vmul.f32 %v3202, %v3202
    %v3204 = vsel %vm515, %v3203, 0.0
    %3205 = vadd.xlane.f32.xlu0 %v3204
    %v3206 = vpop.xlane.xlu0 %3205
    %v3207 = vmul.f32 %v3206, %v519
    %v3208 = vadd.f32 %v3207, 1e-05
    %v3209 = vrsqrt.pop %v3208
    %v3210 = vmul.f32 %v3202, %v3209
    %v3211 = vmul.f32 %v3210, %v534
    %v3212 = vadd.f32 %v3211, %v541
    %3214 = vset.pattern.permute.xlu0 0
    %3215 = vperm.xlu0 %3214, %v2807
    %v3216 = vpop.permute.xlu0 %3215
    %3219 = vset.pattern.permute.xlu0 0
    %3220 = vperm.xlu0 %3219, %v2808
    %v3221 = vpop.permute.xlu0 %3220
    %v3224 = vrot.slane %v3212, 1
    %v3227 = vmul.f32 %v3216, %v3212
    %v3228 = vmul.f32 %v3221, %v3224
    %v3229 = vsub.f32 1.0, %v2807
    %v3230 = vsub.f32 1.0, %v2808
    %3232 = vset.pattern.permute.xlu0 0
    %3233 = vperm.xlu0 %3232, %v3229
    %v3234 = vpop.permute.xlu0 %3233
    %3237 = vset.pattern.permute.xlu0 0
    %3238 = vperm.xlu0 %3237, %v3230
    %v3239 = vpop.permute.xlu0 %3238
    %v3241 = vmul.f32 %v3234, %v2799
    %v3242 = vmul.f32 %v3239, %v2800
    %v3243 = vadd.f32 %v3227, %v3241
    %v3244 = vadd.f32 %v3228, %v3242
    %3245 = vst.msk [vmem:[#allocation4 + $0x6] sm:$0x1] %vm580, %v3227
    %3246 = vst.msk [vmem:[#allocation4 + $0xe] sm:$0x1] %vm580, %v3228
    %v3247 = vld [vmem:[%s0 + $0x7] sm:$0x1]
    %v3248 = vld [vmem:[%s0 + $0xf] sm:$0x1]
    %v3249 = vld [vmem:[%s1 + $0x7] sm:$0x1]
    %v3250 = vld [vmem:[%s1 + $0xf] sm:$0x1]
    %v3251 = vld [vmem:[%s2 + $0x7] sm:$0x1]
    %v3252 = vld [vmem:[%s2 + $0xf] sm:$0x1]
    %v3255 = vrot.slane %v3250, 7
    %v3256 = vsel %vm101, %v3255, %v3249
    %v3258 = vsel %vm104, %v3212, 0
    %3260 = vmatprep.subr.mxu0 0.0
    %3261 = vmatpush1.msra.mxu0 0.0
    %3262 = vmatprep.subr.mxu0 0.0
    %3263 = vmatpush1.msra.mxu0 0.0
    %3264 = vmatprep.subr.mxu0 0.0
    %3265 = vmatpush1.msra.mxu0 0.0
    %3266 = vmatprep.subr.mxu0 0.0
    %3267 = vmatpush1.msra.mxu0 0.0
    %3268 = vmatprep.subr.mxu0 0.0
    %3269 = vmatpush1.msra.mxu0 0.0
    %3270 = vmatprep.subr.mxu0 0.0
    %3271 = vmatpush1.msra.mxu0 0.0
    %3272 = vmatprep.subr.mxu0 0.0
    %3273 = vmatpush1.msra.mxu0 0.0
    %3274 = vmatprep.subr.mxu0 0.0
    %3275 = vmatpush1.msra.mxu0 0.0
    %3276 = vmatprep.subr.mxu0 0.0
    %3277 = vmatpush1.msra.mxu0 0.0
    %3278 = vmatprep.subr.mxu0 0.0
    %3279 = vmatpush1.msra.mxu0 0.0
    %3280 = vmatprep.subr.mxu0 0.0
    %3281 = vmatpush1.msra.mxu0 0.0
    %3282 = vmatprep.subr.mxu0 0.0
    %3283 = vmatpush1.msra.mxu0 0.0
    %3284 = vmatprep.subr.mxu0 0.0
    %3285 = vmatpush1.msra.mxu0 %v55
    %3286 = vmatprep.subr.mxu0 0.0
    %3287 = vmatpush1.msra.mxu0 %v54
    %3288 = vmatprep.subr.mxu0 0.0
    %3289 = vmatpush1.msra.mxu0 %v53
    %3290 = vmatprep.subr.mxu0 0.0
    %3291 = vmatpush1.msra.mxu0 %v52
    %3292 = vmatprep.subr.mxu0 0.0
    %3293 = vmatpush2.msra.mxu0 0.0
    %3294 = vmatprep.subr.mxu0 0.0
    %3295 = vmatpush2.msra.mxu0 0.0
    %3296 = vmatprep.subr.mxu0 0.0
    %3297 = vmatpush2.msra.mxu0 0.0
    %3298 = vmatprep.subr.mxu0 0.0
    %3299 = vmatpush2.msra.mxu0 0.0
    %3300 = vmatprep.subr.mxu0 0.0
    %3301 = vmatpush2.msra.mxu0 0.0
    %3302 = vmatprep.subr.mxu0 0.0
    %3303 = vmatpush2.msra.mxu0 0.0
    %3304 = vmatprep.subr.mxu0 0.0
    %3305 = vmatpush2.msra.mxu0 0.0
    %3306 = vmatprep.subr.mxu0 0.0
    %3307 = vmatpush2.msra.mxu0 0.0
    %3308 = vmatprep.subr.mxu0 0.0
    %3309 = vmatpush2.msra.mxu0 0.0
    %3310 = vmatprep.subr.mxu0 0.0
    %3311 = vmatpush2.msra.mxu0 0.0
    %3312 = vmatprep.subr.mxu0 0.0
    %3313 = vmatpush2.msra.mxu0 0.0
    %3314 = vmatprep.subr.mxu0 0.0
    %3315 = vmatpush2.msra.mxu0 0.0
    %3316 = vmatprep.subr.mxu0 0.0
    %3317 = vmatpush2.msra.mxu0 0.0
    %3318 = vmatprep.subr.mxu0 0.0
    %3319 = vmatpush2.msra.mxu0 0.0
    %3320 = vmatprep.subr.mxu0 0.0
    %3321 = vmatpush2.msra.mxu0 0.0
    %3322 = vmatprep.subr.mxu0 0.0
    %3323 = vmatpush2.msra.mxu0 0.0
    %3324 = vmatprep.mubr.f32.mxu0 0.0
    %3325 = vmatmul.mubr.f32.gmra.mxu0 %v3258
    %v3326 = vpop.f32.mrf.mxu0
    %v3327 = vadd.f32 %v3256, %v3326
    %v3328 = vpop.f32.mrf.mxu0
    %3329 = vdwg.mxu0
    %v3330 = vmax.f32 %v3327, 0.0
    %v3332 = vsel %vm185, %v3330, 0
    %3334 = vmatprep.subr.mxu0 0.0
    %3335 = vmatpush1.msra.mxu0 0.0
    %3336 = vmatprep.subr.mxu0 0.0
    %3337 = vmatpush1.msra.mxu0 0.0
    %3338 = vmatprep.subr.mxu0 0.0
    %3339 = vmatpush1.msra.mxu0 0.0
    %3340 = vmatprep.subr.mxu0 0.0
    %3341 = vmatpush1.msra.mxu0 0.0
    %3342 = vmatprep.subr.mxu0 0.0
    %3343 = vmatpush1.msra.mxu0 0.0
    %3344 = vmatprep.subr.mxu0 0.0
    %3345 = vmatpush1.msra.mxu0 0.0
    %3346 = vmatprep.subr.mxu0 0.0
    %3347 = vmatpush1.msra.mxu0 0.0
    %3348 = vmatprep.subr.mxu0 0.0
    %3349 = vmatpush1.msra.mxu0 0.0
    %3350 = vmatprep.subr.mxu0 0.0
    %3351 = vmatpush1.msra.mxu0 0.0
    %3352 = vmatprep.subr.mxu0 0.0
    %3353 = vmatpush1.msra.mxu0 0.0
    %3354 = vmatprep.subr.mxu0 0.0
    %3355 = vmatpush1.msra.mxu0 %v61
    %3356 = vmatprep.subr.mxu0 0.0
    %3357 = vmatpush1.msra.mxu0 %v60
    %3358 = vmatprep.subr.mxu0 0.0
    %3359 = vmatpush1.msra.mxu0 %v59
    %3360 = vmatprep.subr.mxu0 0.0
    %3361 = vmatpush1.msra.mxu0 %v58
    %3362 = vmatprep.subr.mxu0 0.0
    %3363 = vmatpush1.msra.mxu0 %v57
    %3364 = vmatprep.subr.mxu0 0.0
    %3365 = vmatpush1.msra.mxu0 %v56
    %3366 = vmatprep.subr.mxu0 0.0
    %3367 = vmatpush2.msra.mxu0 0.0
    %3368 = vmatprep.subr.mxu0 0.0
    %3369 = vmatpush2.msra.mxu0 0.0
    %3370 = vmatprep.subr.mxu0 0.0
    %3371 = vmatpush2.msra.mxu0 0.0
    %3372 = vmatprep.subr.mxu0 0.0
    %3373 = vmatpush2.msra.mxu0 0.0
    %3374 = vmatprep.subr.mxu0 0.0
    %3375 = vmatpush2.msra.mxu0 0.0
    %3376 = vmatprep.subr.mxu0 0.0
    %3377 = vmatpush2.msra.mxu0 0.0
    %3378 = vmatprep.subr.mxu0 0.0
    %3379 = vmatpush2.msra.mxu0 0.0
    %3380 = vmatprep.subr.mxu0 0.0
    %3381 = vmatpush2.msra.mxu0 0.0
    %3382 = vmatprep.subr.mxu0 0.0
    %3383 = vmatpush2.msra.mxu0 0.0
    %3384 = vmatprep.subr.mxu0 0.0
    %3385 = vmatpush2.msra.mxu0 0.0
    %3386 = vmatprep.subr.mxu0 0.0
    %3387 = vmatpush2.msra.mxu0 0.0
    %3388 = vmatprep.subr.mxu0 0.0
    %3389 = vmatpush2.msra.mxu0 0.0
    %3390 = vmatprep.subr.mxu0 0.0
    %3391 = vmatpush2.msra.mxu0 0.0
    %3392 = vmatprep.subr.mxu0 0.0
    %3393 = vmatpush2.msra.mxu0 0.0
    %3394 = vmatprep.subr.mxu0 0.0
    %3395 = vmatpush2.msra.mxu0 0.0
    %3396 = vmatprep.subr.mxu0 0.0
    %3397 = vmatpush2.msra.mxu0 0.0
    %3398 = vmatprep.mubr.f32.mxu0 0.0
    %3399 = vmatmul.mubr.f32.gmra.mxu0 %v3332
    %v3400 = vpop.f32.mrf.mxu0
    %v3401 = vadd.f32 %v183, %v3400
    %v3402 = vpop.f32.mrf.mxu0
    %3403 = vdwg.mxu0
    %v3404 = vxor.u32 %v3401, 2147483648
    %v3405 = vmul.f32 %v3404, 1.442695
    %v3406 = vpow.pop %v3405
    %v3407 = vadd.f32 %v3406, 1.0
    %v3408 = vrcp.pop %v3407
    %v3409 = vmul.f32 1.0, %v3408
    %3410 = vmatprep.subr.mxu0 0.0
    %3411 = vmatpush1.msra.mxu0 0.0
    %3412 = vmatprep.subr.mxu0 0.0
    %3413 = vmatpush1.msra.mxu0 0.0
    %3414 = vmatprep.subr.mxu0 0.0
    %3415 = vmatpush1.msra.mxu0 0.0
    %3416 = vmatprep.subr.mxu0 0.0
    %3417 = vmatpush1.msra.mxu0 0.0
    %3418 = vmatprep.subr.mxu0 0.0
    %3419 = vmatpush1.msra.mxu0 0.0
    %3420 = vmatprep.subr.mxu0 0.0
    %3421 = vmatpush1.msra.mxu0 0.0
    %3422 = vmatprep.subr.mxu0 0.0
    %3423 = vmatpush1.msra.mxu0 0.0
    %3424 = vmatprep.subr.mxu0 0.0
    %3425 = vmatpush1.msra.mxu0 0.0
    %3426 = vmatprep.subr.mxu0 0.0
    %3427 = vmatpush1.msra.mxu0 0.0
    %3428 = vmatprep.subr.mxu0 0.0
    %3429 = vmatpush1.msra.mxu0 0.0
    %3430 = vmatprep.subr.mxu0 0.0
    %3431 = vmatpush1.msra.mxu0 %v68
    %3432 = vmatprep.subr.mxu0 0.0
    %3433 = vmatpush1.msra.mxu0 %v67
    %3434 = vmatprep.subr.mxu0 0.0
    %3435 = vmatpush1.msra.mxu0 %v66
    %3436 = vmatprep.subr.mxu0 0.0
    %3437 = vmatpush1.msra.mxu0 %v65
    %3438 = vmatprep.subr.mxu0 0.0
    %3439 = vmatpush1.msra.mxu0 %v64
    %3440 = vmatprep.subr.mxu0 0.0
    %3441 = vmatpush1.msra.mxu0 %v63
    %3442 = vmatprep.subr.mxu0 0.0
    %3443 = vmatpush2.msra.mxu0 0.0
    %3444 = vmatprep.subr.mxu0 0.0
    %3445 = vmatpush2.msra.mxu0 0.0
    %3446 = vmatprep.subr.mxu0 0.0
    %3447 = vmatpush2.msra.mxu0 0.0
    %3448 = vmatprep.subr.mxu0 0.0
    %3449 = vmatpush2.msra.mxu0 0.0
    %3450 = vmatprep.subr.mxu0 0.0
    %3451 = vmatpush2.msra.mxu0 0.0
    %3452 = vmatprep.subr.mxu0 0.0
    %3453 = vmatpush2.msra.mxu0 0.0
    %3454 = vmatprep.subr.mxu0 0.0
    %3455 = vmatpush2.msra.mxu0 0.0
    %3456 = vmatprep.subr.mxu0 0.0
    %3457 = vmatpush2.msra.mxu0 0.0
    %3458 = vmatprep.subr.mxu0 0.0
    %3459 = vmatpush2.msra.mxu0 0.0
    %3460 = vmatprep.subr.mxu0 0.0
    %3461 = vmatpush2.msra.mxu0 0.0
    %3462 = vmatprep.subr.mxu0 0.0
    %3463 = vmatpush2.msra.mxu0 0.0
    %3464 = vmatprep.subr.mxu0 0.0
    %3465 = vmatpush2.msra.mxu0 0.0
    %3466 = vmatprep.subr.mxu0 0.0
    %3467 = vmatpush2.msra.mxu0 0.0
    %3468 = vmatprep.subr.mxu0 0.0
    %3469 = vmatpush2.msra.mxu0 0.0
    %3470 = vmatprep.subr.mxu0 0.0
    %3471 = vmatpush2.msra.mxu0 0.0
    %3472 = vmatprep.subr.mxu0 0.0
    %3473 = vmatpush2.msra.mxu0 0.0
    %3474 = vmatprep.mubr.f32.mxu0 0.0
    %3475 = vmatmul.mubr.f32.gmra.mxu0 %v3332
    %v3476 = vpop.f32.mrf.mxu0
    %v3477 = vadd.f32 %v269, %v3476
    %v3478 = vpop.f32.mrf.mxu0
    %3479 = vdwg.mxu0
    %v3480 = vxor.u32 %v3477, 2147483648
    %v3481 = vmul.f32 %v3480, 1.442695
    %v3482 = vpow.pop %v3481
    %v3483 = vadd.f32 %v3482, 1.0
    %v3484 = vrcp.pop %v3483
    %v3485 = vmul.f32 1.0, %v3484
    %3486 = vmatprep.subr.mxu0 0.0
    %3487 = vmatpush1.msra.mxu0 0.0
    %3488 = vmatprep.subr.mxu0 0.0
    %3489 = vmatpush1.msra.mxu0 0.0
    %3490 = vmatprep.subr.mxu0 0.0
    %3491 = vmatpush1.msra.mxu0 0.0
    %3492 = vmatprep.subr.mxu0 0.0
    %3493 = vmatpush1.msra.mxu0 0.0
    %3494 = vmatprep.subr.mxu0 0.0
    %3495 = vmatpush1.msra.mxu0 0.0
    %3496 = vmatprep.subr.mxu0 0.0
    %3497 = vmatpush1.msra.mxu0 0.0
    %3498 = vmatprep.subr.mxu0 0.0
    %3499 = vmatpush1.msra.mxu0 0.0
    %3500 = vmatprep.subr.mxu0 0.0
    %3501 = vmatpush1.msra.mxu0 0.0
    %3502 = vmatprep.subr.mxu0 0.0
    %3503 = vmatpush1.msra.mxu0 0.0
    %3504 = vmatprep.subr.mxu0 0.0
    %3505 = vmatpush1.msra.mxu0 0.0
    %3506 = vmatprep.subr.mxu0 0.0
    %3507 = vmatpush1.msra.mxu0 %v75
    %3508 = vmatprep.subr.mxu0 0.0
    %3509 = vmatpush1.msra.mxu0 %v74
    %3510 = vmatprep.subr.mxu0 0.0
    %3511 = vmatpush1.msra.mxu0 %v73
    %3512 = vmatprep.subr.mxu0 0.0
    %3513 = vmatpush1.msra.mxu0 %v72
    %3514 = vmatprep.subr.mxu0 0.0
    %3515 = vmatpush1.msra.mxu0 %v71
    %3516 = vmatprep.subr.mxu0 0.0
    %3517 = vmatpush1.msra.mxu0 %v70
    %3518 = vmatprep.subr.mxu0 0.0
    %3519 = vmatpush2.msra.mxu0 0.0
    %3520 = vmatprep.subr.mxu0 0.0
    %3521 = vmatpush2.msra.mxu0 0.0
    %3522 = vmatprep.subr.mxu0 0.0
    %3523 = vmatpush2.msra.mxu0 0.0
    %3524 = vmatprep.subr.mxu0 0.0
    %3525 = vmatpush2.msra.mxu0 0.0
    %3526 = vmatprep.subr.mxu0 0.0
    %3527 = vmatpush2.msra.mxu0 0.0
    %3528 = vmatprep.subr.mxu0 0.0
    %3529 = vmatpush2.msra.mxu0 0.0
    %3530 = vmatprep.subr.mxu0 0.0
    %3531 = vmatpush2.msra.mxu0 0.0
    %3532 = vmatprep.subr.mxu0 0.0
    %3533 = vmatpush2.msra.mxu0 0.0
    %3534 = vmatprep.subr.mxu0 0.0
    %3535 = vmatpush2.msra.mxu0 0.0
    %3536 = vmatprep.subr.mxu0 0.0
    %3537 = vmatpush2.msra.mxu0 0.0
    %3538 = vmatprep.subr.mxu0 0.0
    %3539 = vmatpush2.msra.mxu0 0.0
    %3540 = vmatprep.subr.mxu0 0.0
    %3541 = vmatpush2.msra.mxu0 0.0
    %3542 = vmatprep.subr.mxu0 0.0
    %3543 = vmatpush2.msra.mxu0 0.0
    %3544 = vmatprep.subr.mxu0 0.0
    %3545 = vmatpush2.msra.mxu0 0.0
    %3546 = vmatprep.subr.mxu0 0.0
    %3547 = vmatpush2.msra.mxu0 0.0
    %3548 = vmatprep.subr.mxu0 0.0
    %3549 = vmatpush2.msra.mxu0 0.0
    %3550 = vmatprep.mubr.f32.mxu0 0.0
    %3551 = vmatmul.mubr.f32.gmra.mxu0 %v3332
    %v3552 = vpop.f32.mrf.mxu0
    %v3553 = vadd.f32 %v351, %v3552
    %v3554 = vpop.f32.mrf.mxu0
    %3555 = vdwg.mxu0
    %v3556 = vxor.u32 %v3553, 2147483648
    %v3557 = vmul.f32 %v3556, 1.442695
    %v3558 = vpow.pop %v3557
    %v3559 = vadd.f32 %v3558, 1.0
    %v3560 = vrcp.pop %v3559
    %v3561 = vmul.f32 1.0, %v3560
    %3562 = vmatprep.subr.mxu0 0.0
    %3563 = vmatpush1.msra.mxu0 0.0
    %3564 = vmatprep.subr.mxu0 0.0
    %3565 = vmatpush1.msra.mxu0 0.0
    %3566 = vmatprep.subr.mxu0 0.0
    %3567 = vmatpush1.msra.mxu0 0.0
    %3568 = vmatprep.subr.mxu0 0.0
    %3569 = vmatpush1.msra.mxu0 0.0
    %3570 = vmatprep.subr.mxu0 0.0
    %3571 = vmatpush1.msra.mxu0 0.0
    %3572 = vmatprep.subr.mxu0 0.0
    %3573 = vmatpush1.msra.mxu0 0.0
    %3574 = vmatprep.subr.mxu0 0.0
    %3575 = vmatpush1.msra.mxu0 0.0
    %3576 = vmatprep.subr.mxu0 0.0
    %3577 = vmatpush1.msra.mxu0 0.0
    %3578 = vmatprep.subr.mxu0 0.0
    %3579 = vmatpush1.msra.mxu0 0.0
    %3580 = vmatprep.subr.mxu0 0.0
    %3581 = vmatpush1.msra.mxu0 0.0
    %3582 = vmatprep.subr.mxu0 0.0
    %3583 = vmatpush1.msra.mxu0 %v82
    %3584 = vmatprep.subr.mxu0 0.0
    %3585 = vmatpush1.msra.mxu0 %v81
    %3586 = vmatprep.subr.mxu0 0.0
    %3587 = vmatpush1.msra.mxu0 %v80
    %3588 = vmatprep.subr.mxu0 0.0
    %3589 = vmatpush1.msra.mxu0 %v79
    %3590 = vmatprep.subr.mxu0 0.0
    %3591 = vmatpush1.msra.mxu0 %v78
    %3592 = vmatprep.subr.mxu0 0.0
    %3593 = vmatpush1.msra.mxu0 %v77
    %3594 = vmatprep.subr.mxu0 0.0
    %3595 = vmatpush2.msra.mxu0 0.0
    %3596 = vmatprep.subr.mxu0 0.0
    %3597 = vmatpush2.msra.mxu0 0.0
    %3598 = vmatprep.subr.mxu0 0.0
    %3599 = vmatpush2.msra.mxu0 0.0
    %3600 = vmatprep.subr.mxu0 0.0
    %3601 = vmatpush2.msra.mxu0 0.0
    %3602 = vmatprep.subr.mxu0 0.0
    %3603 = vmatpush2.msra.mxu0 0.0
    %3604 = vmatprep.subr.mxu0 0.0
    %3605 = vmatpush2.msra.mxu0 0.0
    %3606 = vmatprep.subr.mxu0 0.0
    %3607 = vmatpush2.msra.mxu0 0.0
    %3608 = vmatprep.subr.mxu0 0.0
    %3609 = vmatpush2.msra.mxu0 0.0
    %3610 = vmatprep.subr.mxu0 0.0
    %3611 = vmatpush2.msra.mxu0 0.0
    %3612 = vmatprep.subr.mxu0 0.0
    %3613 = vmatpush2.msra.mxu0 0.0
    %3614 = vmatprep.subr.mxu0 0.0
    %3615 = vmatpush2.msra.mxu0 0.0
    %3616 = vmatprep.subr.mxu0 0.0
    %3617 = vmatpush2.msra.mxu0 0.0
    %3618 = vmatprep.subr.mxu0 0.0
    %3619 = vmatpush2.msra.mxu0 0.0
    %3620 = vmatprep.subr.mxu0 0.0
    %3621 = vmatpush2.msra.mxu0 0.0
    %3622 = vmatprep.subr.mxu0 0.0
    %3623 = vmatpush2.msra.mxu0 0.0
    %3624 = vmatprep.subr.mxu0 0.0
    %3625 = vmatpush2.msra.mxu0 0.0
    %3626 = vmatprep.mubr.f32.mxu0 0.0
    %3627 = vmatmul.mubr.f32.gmra.mxu0 %v3332
    %v3628 = vpop.f32.mrf.mxu0
    %v3629 = vadd.f32 %v433, %v3628
    %v3630 = vpop.f32.mrf.mxu0
    %3631 = vdwg.mxu0
    %v3632 = vmul.f32 %v3409, %v3212
    %v3635 = vrot.slane %v3248, 7
    %v3636 = vsel %vm101, %v3635, %v3247
    %v3638 = vmul.f32 %v3485, %v3636
    %v3639 = vadd.f32 %v3632, %v3638
    %v3640 = vmul.f32 %v3561, %v3629
    %v3641 = vadd.f32 %v3639, %v3640
    %v3642 = vsel %vm515, %v3641, 0.0
    %3643 = vadd.xlane.f32.xlu0 %v3642
    %v3644 = vpop.xlane.xlu0 %3643
    %v3645 = vmul.f32 %v3644, %v519
    %v3646 = vsub.f32 %v3641, %v3645
    %v3647 = vmul.f32 %v3646, %v3646
    %v3648 = vsel %vm515, %v3647, 0.0
    %3649 = vadd.xlane.f32.xlu0 %v3648
    %v3650 = vpop.xlane.xlu0 %3649
    %v3651 = vmul.f32 %v3650, %v519
    %v3652 = vadd.f32 %v3651, 1e-05
    %v3653 = vrsqrt.pop %v3652
    %v3654 = vmul.f32 %v3646, %v3653
    %v3655 = vmul.f32 %v3654, %v534
    %v3656 = vadd.f32 %v3655, %v541
    %3658 = vset.pattern.permute.xlu0 0
    %3659 = vperm.xlu0 %3658, %v3251
    %v3660 = vpop.permute.xlu0 %3659
    %3663 = vset.pattern.permute.xlu0 0
    %3664 = vperm.xlu0 %3663, %v3252
    %v3665 = vpop.permute.xlu0 %3664
    %v3668 = vrot.slane %v3656, 1
    %v3671 = vmul.f32 %v3660, %v3656
    %v3672 = vmul.f32 %v3665, %v3668
    %v3673 = vsub.f32 1.0, %v3251
    %v3674 = vsub.f32 1.0, %v3252
    %3676 = vset.pattern.permute.xlu0 0
    %3677 = vperm.xlu0 %3676, %v3673
    %v3678 = vpop.permute.xlu0 %3677
    %3681 = vset.pattern.permute.xlu0 0
    %3682 = vperm.xlu0 %3681, %v3674
    %v3683 = vpop.permute.xlu0 %3682
    %v3685 = vmul.f32 %v3678, %v3243
    %v3686 = vmul.f32 %v3683, %v3244
    %v3687 = vadd.f32 %v3671, %v3685
    %v3688 = vadd.f32 %v3672, %v3686
    %3689 = vst.msk [vmem:[#allocation4 + $0x7] sm:$0x1] %vm580, %v3671
    %3690 = vst.msk [vmem:[#allocation4 + $0xf] sm:$0x1] %vm580, %v3672
    %3691 = vst.msk [vmem:[#allocation2] sm:$0x3] %vm515, %v3656
    %v3694 = vrot.slane %v3688, 7
    %v3695 = vsel %vm101, %v3694, %v3687
    %3697 = vst.msk [vmem:[#allocation3] sm:$0x3] %vm515, %v3695
    // Predicated region
    $region42: #{lr_crvnn_forward.3} parent=1 // pred_check
      %p3698 = pneg %p36
    $region43: #{lr_crvnn_forward.3} parent=1 // pred_check_branch
      %3700 = sbr.rel (%p3698) target = $region45
    $region44: #{lr_crvnn_forward.3} parent=1 // pred_region
      %3701 = vst.msk [vmem:[#allocation6] sm:$0x3] %vm515, %v3695
    $region45: #{lr_crvnn_forward.3} parent=1 // pred_fallthru
      _
    // Predicated region
    $region46: #{lr_crvnn_forward.3} parent=1 // pred_check
      _
    $region47: #{lr_crvnn_forward.3} parent=1 // pred_check_branch
      %3703 = sbr.rel (0) target = $region49
    $region48: #{lr_crvnn_forward.3} parent=1 // pred_region
      %s3705 = ssub.s32 256, 256
      %3706 = vsyncadd [#allocation5], %s3705
      %s3707 = sshll.u32 [#allocation4], 4
      %s3708 = int_to_ptr.vmem [resolvable:$true] %s3707
      %3713 = dma.vmem_to_hbm [thread:$0]  %s3708, 256, %s9, [#allocation5], 128, 128, 8
    $region49: #{lr_crvnn_forward.3} parent=1 // pred_fallthru
      _
    // Predicated region
    $region50: #{lr_crvnn_forward.3} parent=1 // pred_check
      _
    $region51: #{lr_crvnn_forward.3} parent=1 // pred_check_branch
      %3715 = sbr.rel (0) target = $region53
    $region52: #{lr_crvnn_forward.3} parent=1 // pred_region
      %s3717 = ssub.s32 32, 32
      %3718 = vsyncadd [#allocation7], %s3717
      %s3720 = sshll.u32 [#allocation6], 4
      %s3721 = int_to_ptr.vmem [resolvable:$true] %s3720
      %3723 = dma.vmem_to_hbm [thread:$0]  %s3721, 32, %s10, [#allocation7]
    $region53: #{lr_crvnn_forward.3} parent=1 // pred_fallthru
      _
    // Predicated region
    $region54: #{lr_crvnn_forward.3} parent=1 // pred_check
      _
    $region55: #{lr_crvnn_forward.3} parent=1 // pred_check_branch
      %3725 = sbr.rel (0) target = $region57
    $region56: #{lr_crvnn_forward.3} parent=1 // pred_region
      %3726 = dma.done [#allocation5], 256
    $region57: #{lr_crvnn_forward.3} parent=1 // pred_fallthru
      _
    // Predicated region
    $region58: #{lr_crvnn_forward.3} parent=1 // pred_check
      _
    $region59: #{lr_crvnn_forward.3} parent=1 // pred_check_branch
      %3728 = sbr.rel (0) target = $region61
    $region60: #{lr_crvnn_forward.3} parent=1 // pred_region
      %3729 = dma.done [#allocation7], 32
    $region61: #{lr_crvnn_forward.3} parent=1 // pred_fallthru
      _
    %3730 = vsyncpa [#allocation5], 1
    %3731 = vsyncpa [#allocation7], 1

</llo_original>
